<compile_context>
chip_gen: v6e
topology: v6e:2x2x1
jax: 0.10.0
libtpu: 0.0.40
codegen_flags: <defaults>
</compile_context>

<pallas_src>
import functools

import numpy as np

import jax
import jax.numpy as jnp
from jax.experimental import pallas as pl
from jax.experimental.pallas import tpu as pltpu

LN_EPS = 1e-5      # nn.LayerNorm default
BN_EPS = 1e-5      # nn.BatchNorm2d default
NORM_EPS = 1e-12   # F.normalize default eps
NEG_BIG = -1e30    # additive mask for off-head attention entries


# ----------------------------------------------------------------------------
# small in-kernel helpers
# ----------------------------------------------------------------------------
def _erf_approx(x):
    # Abramowitz & Stegun 7.1.26 polynomial, |err| <= 1.5e-7 (exact-GELU erf).
    ax = jnp.abs(x)
    t = pl.reciprocal(1.0 + 0.3275911 * ax, approx=True)
    poly = t * (0.254829592
                + t * (-0.284496736
                       + t * (1.421413741
                              + t * (-1.453152027 + t * 1.061405429))))
    y = 1.0 - poly * jnp.exp(-ax * ax)
    return jnp.where(x >= 0.0, y, -y)


def _gelu_exact(x):
    return 0.5 * x * (1.0 + _erf_approx(x * 0.7071067811865475))


def _layernorm(x, w, b):
    mu = jnp.mean(x, axis=-1, keepdims=True)
    var = jnp.mean(jnp.square(x - mu), axis=-1, keepdims=True)
    return (x - mu) * jax.lax.rsqrt(var + LN_EPS) * w + b


def _shift_tokens(y, off):
    """sh[n] = y[n + off] when n + off lies in [0, N), else 0 (zero padding)."""
    if off == 0:
        return y
    c = y.shape[1]
    pad = jnp.zeros((abs(off), c), y.dtype)
    if off > 0:
        return jnp.concatenate([y[off:, :], pad], axis=0)
    return jnp.concatenate([pad, y[:off, :]], axis=0)


def _dwconv3x3(y, w_taps, mask_l, mask_r, W):
    """Depthwise 3x3 conv (zero padded) on an (N, C) token tile.

    w_taps is (9, C) with tap t = ky*3+kx holding weight[c, 0, ky, kx].
    Row (dy) boundaries are handled by the zero padding of the token shift,
    column (dx) boundaries by the precomputed (N, 1) masks.
    """
    acc = jnp.zeros_like(y)
    for t in range(9):
        dy, dx = t // 3 - 1, t % 3 - 1
        sh = _shift_tokens(y, dy * W + dx)
        if dx == 1:
            sh = sh * mask_r
        elif dx == -1:
            sh = sh * mask_l
        acc = acc + sh * w_taps[t:t + 1, :]
    return acc


# ----------------------------------------------------------------------------
# the fused XCABlock kernel (one batch element per grid step)
# ----------------------------------------------------------------------------
def _xca_block_kernel(x_ref,
                      ln1w_ref, ln1b_ref, wqkv_ref, bqkv_ref, tempv_ref, amask_ref,
                      wproj_ref, bproj_ref, g1_ref,
                      ln2w_ref, ln2b_ref,
                      wdw1_ref, bns_ref, bnb_ref, wdw2_ref, bdw2_ref, g2_ref,
                      ln3w_ref, ln3b_ref, w1_ref, b1_ref, w2_ref, b2_ref, g3_ref,
                      maskl_ref, maskr_ref,
                      out_ref, *, W):
    C = x_ref.shape[-1]
    wdt = wqkv_ref.dtype                      # MXU operand dtype (bf16 by default)

    x = x_ref[0]                              # (N, C) f32

    # ---- XCA --------------------------------------------------------------
    xn = _layernorm(x, ln1w_ref[...], ln1b_ref[...])
    qkv = jnp.dot(xn.astype(wdt), wqkv_ref[...],
                  preferred_element_type=jnp.float32) + bqkv_ref[...]   # (N, 3C)
    q = qkv[:, 0 * C:1 * C]
    k = qkv[:, 1 * C:2 * C]
    v = qkv[:, 2 * C:3 * C]

    # F.normalize over the token axis (per channel column); temperature per head.
    q_inv = pl.reciprocal(
        jnp.maximum(jnp.sqrt(jnp.sum(q * q, axis=0, keepdims=True)), NORM_EPS),
        approx=True)
    k_inv = pl.reciprocal(
        jnp.maximum(jnp.sqrt(jnp.sum(k * k, axis=0, keepdims=True)), NORM_EPS),
        approx=True)
    qn = q * (q_inv * tempv_ref[...])         # (N, C)
    kn = k * k_inv                            # (N, C)

    # All-head channel-channel scores in one MXU matmul: G = qn^T @ kn (C, C);
    # off-head blocks suppressed with an additive -1e30 mask before the softmax.
    g = jax.lax.dot_general(qn.astype(wdt), kn.astype(wdt),
                            (((0,), (0,)), ((), ())),
                            preferred_element_type=jnp.float32)
    g = g + amask_ref[...]
    g = g - jnp.max(g, axis=-1, keepdims=True)
    p = jnp.exp(g)
    attn = p * pl.reciprocal(jnp.sum(p, axis=-1, keepdims=True), approx=True)

    # y[:, h*d+i] = sum_j attn[h*d+i, h*d+j] * v[:, h*d+j]  ==  v @ attn^T.
    # This is already the PyTorch permute(0,3,1,2).reshape(B,N,C) channel order.
    y = jax.lax.dot_general(v.astype(wdt), attn.astype(wdt),
                            (((1,), (1,)), ((), ())),
                            preferred_element_type=jnp.float32)          # (N, C)

    proj = jnp.dot(y.astype(wdt), wproj_ref[...],
                   preferred_element_type=jnp.float32) + bproj_ref[...]
    x1 = x + g1_ref[...] * proj

    # ---- LPI: dwconv3x3 -> BatchNorm(eval) -> GELU -> dwconv3x3 (+bias) -----
    xn2 = _layernorm(x1, ln2w_ref[...], ln2b_ref[...])
    mask_l = maskl_ref[...]
    mask_r = maskr_ref[...]
    c1 = _dwconv3x3(xn2, wdw1_ref[...], mask_l, mask_r, W)
    act = _gelu_exact(c1 * bns_ref[...] + bnb_ref[...])
    c2 = _dwconv3x3(act, wdw2_ref[...], mask_l, mask_r, W) + bdw2_ref[...]
    x2 = x1 + g2_ref[...] * c2

    # ---- MLP ----------------------------------------------------------------
    xn3 = _layernorm(x2, ln3w_ref[...], ln3b_ref[...])
    hid = _gelu_exact(jnp.dot(xn3.astype(wdt), w1_ref[...],
                              preferred_element_type=jnp.float32) + b1_ref[...])
    mlp = jnp.dot(hid.astype(wdt), w2_ref[...],
                  preferred_element_type=jnp.float32) + b2_ref[...]
    out_ref[0] = x2 + g3_ref[...] * mlp


# ----------------------------------------------------------------------------
# wrapper
# ----------------------------------------------------------------------------
def _vmem_limit_bytes():
    # Explicit scoped-VMEM budget: ~3/4 of physical, capped at 100 MiB
    # (v5e/v6e: 128 MiB physical, v7x: 64 MiB).  Conservative fallback if the
    # hardware query is unavailable.
    try:
        cap = pltpu.get_tpu_info().vmem_capacity_bytes
        return int(min(cap * 3 // 4, 100 * 1024 * 1024))
    except Exception:
        return 32 * 1024 * 1024


def xca_block_forward(x, kp, H, W):
    B, N, C = x.shape
    assert N == H * W
    hidden = kp["w1"].shape[1]

    # Column-boundary masks for the +/-1 (dx) shifts of the depthwise convs.
    col = np.arange(N) % W
    mask_l = jnp.asarray((col > 0).astype(np.float32).reshape(N, 1))
    mask_r = jnp.asarray((col < W - 1).astype(np.float32).reshape(N, 1))

    kernel = functools.partial(_xca_block_kernel, W=W)

    def rep(shape):
        # constant-index (replicated) operand
        # TODO(synk): pipeline_mode=pl.Buffered(1) here would halve weight VMEM
        # (matters most on v7x); left at default buffering for compatibility.
        return pl.BlockSpec(shape, lambda b, _n=len(shape): (0,) * _n)

    in_specs = [
        pl.BlockSpec((1, N, C), lambda b: (b, 0, 0)),                 # x
        rep((1, C)), rep((1, C)),                                     # ln1 w/b
        rep((C, 3 * C)), rep((1, 3 * C)), rep((1, C)), rep((C, C)),   # wqkv, bqkv, temp, attn mask
        rep((C, C)), rep((1, C)), rep((1, C)),                        # wproj, bproj, gamma1
        rep((1, C)), rep((1, C)),                                     # ln2 w/b
        rep((9, C)), rep((1, C)), rep((1, C)),                        # dwconv1, bn scale/shift
        rep((9, C)), rep((1, C)), rep((1, C)),                        # dwconv2, bias, gamma2
        rep((1, C)), rep((1, C)),                                     # ln3 w/b
        rep((C, hidden)), rep((1, hidden)),                           # mlp w1, b1
        rep((hidden, C)), rep((1, C)), rep((1, C)),                   # mlp w2, b2, gamma3
        rep((N, 1)), rep((N, 1)),                                     # column masks
    ]

    return pl.pallas_call(
        kernel,
        out_shape=jax.ShapeDtypeStruct((B, N, C), jnp.float32),
        grid_spec=pltpu.PrefetchScalarGridSpec(
            num_scalar_prefetch=0,
            grid=(B,),
            in_specs=in_specs,
            out_specs=pl.BlockSpec((1, N, C), lambda b: (b, 0, 0)),
        ),
        compiler_params=pltpu.CompilerParams(
            dimension_semantics=("parallel",),
            vmem_limit_bytes=_vmem_limit_bytes(),
        ),
    )(x,
      kp["ln1_w"], kp["ln1_b"], kp["wqkv"], kp["bqkv"], kp["temp_vec"], kp["attn_mask"],
      kp["wproj"], kp["bproj"], kp["gamma1"],
      kp["ln2_w"], kp["ln2_b"],
      kp["wdw1"], kp["bn_scale"], kp["bn_shift"], kp["wdw2"], kp["bdw2"], kp["gamma2"],
      kp["ln3_w"], kp["ln3_b"], kp["w1"], kp["b1"], kp["w2"], kp["b2"], kp["gamma3"],
      mask_l, mask_r)


# ----------------------------------------------------------------------------
# deterministic parameters (PyTorch layouts) + kernel-friendly repack
# ----------------------------------------------------------------------------
def make_params(key, dim, num_heads, hidden, eta=1.0, matmul_dtype=jnp.bfloat16):
    d = dim // num_heads
    ks = jax.random.split(key, 24)

    def nrm(k, shape, scale=0.02):
        return scale * jax.random.normal(k, shape, dtype=jnp.float32)

    raw = {
        "ln1_w": 1.0 + nrm(ks[0], (dim,), 0.1), "ln1_b": nrm(ks[1], (dim,), 0.02),
        "Wqkv": nrm(ks[2], (3 * dim, dim)), "bqkv": nrm(ks[3], (3 * dim,), 0.02),
        "temp": jnp.ones((num_heads, 1, 1), jnp.float32),
        "Wproj": nrm(ks[4], (dim, dim)), "bproj": nrm(ks[5], (dim,), 0.02),
        "ln2_w": 1.0 + nrm(ks[6], (dim,), 0.1), "ln2_b": nrm(ks[7], (dim,), 0.02),
        "conv1_w": nrm(ks[8], (dim, 1, 3, 3), 0.1),
        "bn_w": 1.0 + nrm(ks[9], (dim,), 0.1), "bn_b": nrm(ks[10], (dim,), 0.02),
        "bn_rm": nrm(ks[11], (dim,), 0.1),
        "bn_rv": 1.0 + 0.1 * jnp.abs(jax.random.normal(ks[12], (dim,), jnp.float32)),
        "conv2_w": nrm(ks[13], (dim, 1, 3, 3), 0.1), "conv2_b": nrm(ks[14], (dim,), 0.02),
        "ln3_w": 1.0 + nrm(ks[15], (dim,), 0.1), "ln3_b": nrm(ks[16], (dim,), 0.02),
        "W1": nrm(ks[17], (hidden, dim)), "b1": nrm(ks[18], (hidden,), 0.02),
        "W2": nrm(ks[19], (dim, hidden)), "b2": nrm(ks[20], (dim,), 0.02),
        "gamma1": eta * jnp.ones((dim,), jnp.float32),
        "gamma2": eta * jnp.ones((dim,), jnp.float32),
        "gamma3": eta * jnp.ones((dim,), jnp.float32),
    }

    mdt = matmul_dtype
    bn_scale = raw["bn_w"] / jnp.sqrt(raw["bn_rv"] + BN_EPS)
    # block-diagonal additive mask: 0 inside a head's d x d block, -1e30 outside
    blk = np.where((np.arange(dim)[:, None] // d) == (np.arange(dim)[None, :] // d),
                   0.0, NEG_BIG).astype(np.float32)

    kp = {
        "num_heads": num_heads,
        "ln1_w": raw["ln1_w"][None, :], "ln1_b": raw["ln1_b"][None, :],
        # fused QKV weight, (dim, 3*dim); output column order is [q|k|v][head][d]
        "wqkv": raw["Wqkv"].T.astype(mdt),
        "bqkv": raw["bqkv"][None, :],
        "temp_vec": jnp.repeat(raw["temp"].reshape(num_heads), d)[None, :],
        "attn_mask": jnp.asarray(blk),
        "wproj": raw["Wproj"].T.astype(mdt), "bproj": raw["bproj"][None, :],
        "gamma1": raw["gamma1"][None, :],
        "ln2_w": raw["ln2_w"][None, :], "ln2_b": raw["ln2_b"][None, :],
        "wdw1": raw["conv1_w"][:, 0].transpose(1, 2, 0).reshape(9, dim),
        "bn_scale": bn_scale[None, :],
        "bn_shift": (raw["bn_b"] - raw["bn_rm"] * bn_scale)[None, :],
        "wdw2": raw["conv2_w"][:, 0].transpose(1, 2, 0).reshape(9, dim),
        "bdw2": raw["conv2_b"][None, :],
        "gamma2": raw["gamma2"][None, :],
        "ln3_w": raw["ln3_w"][None, :], "ln3_b": raw["ln3_b"][None, :],
        "w1": raw["W1"].T.astype(mdt), "b1": raw["b1"][None, :],
        "w2": raw["W2"].T.astype(mdt), "b2": raw["b2"][None, :],
        "gamma3": raw["gamma3"][None, :],
    }
    return raw, kp


# ----------------------------------------------------------------------------
# pure-JAX reference mirroring the PyTorch XCABlock forward (inference mode)
# ----------------------------------------------------------------------------
def reference_forward(x, raw, H, W, num_heads):
    B, N, C = x.shape
    d = C // num_heads

    def ln(v, w, b):
        mu = v.mean(-1, keepdims=True)
        var = ((v - mu) ** 2).mean(-1, keepdims=True)
        return (v - mu) / jnp.sqrt(var + LN_EPS) * w + b

    # XCA (cross-covariance attention: q/k/v as (B, h, d, N), d x d attention)
    xn = ln(x, raw["ln1_w"], raw["ln1_b"])
    qkv = xn @ raw["Wqkv"].T + raw["bqkv"]
    qkv = qkv.reshape(B, N, 3, num_heads, d).transpose(2, 0, 3, 4, 1)   # (3,B,h,d,N)
    q, k, v = qkv[0], qkv[1], qkv[2]
    q = q / jnp.maximum(jnp.linalg.norm(q, axis=-1, keepdims=True), NORM_EPS)
    q = q * raw["temp"].reshape(1, num_heads, 1, 1)
    k = k / jnp.maximum(jnp.linalg.norm(k, axis=-1, keepdims=True), NORM_EPS)
    attn = jax.nn.softmax(jnp.einsum("bhin,bhjn->bhij", q, k), axis=-1)  # (B,h,d,d)
    o = jnp.einsum("bhij,bhjn->bhin", attn, v)                           # (B,h,d,N)
    o = jnp.transpose(o, (0, 3, 1, 2)).reshape(B, N, C)                  # permute(0,3,1,2)
    o = o @ raw["Wproj"].T + raw["bproj"]
    x1 = x + raw["gamma1"] * o

    # LPI
    xn2 = ln(x1, raw["ln2_w"], raw["ln2_b"])
    img = jnp.transpose(xn2, (0, 2, 1)).reshape(B, C, H, W)
    dn = ("NCHW", "OIHW", "NCHW")
    y = jax.lax.conv_general_dilated(img, raw["conv1_w"], (1, 1), ((1, 1), (1, 1)),
                                     feature_group_count=C, dimension_numbers=dn)
    scale = (raw["bn_w"] / jnp.sqrt(raw["bn_rv"] + BN_EPS))[None, :, None, None]
    y = (y - raw["bn_rm"][None, :, None, None]) * scale + raw["bn_b"][None, :, None, None]
    y = jax.nn.gelu(y, approximate=False)
    y = jax.lax.conv_general_dilated(y, raw["conv2_w"], (1, 1), ((1, 1), (1, 1)),
                                     feature_group_count=C, dimension_numbers=dn)
    y = y + raw["conv2_b"][None, :, None, None]
    lpi = jnp.transpose(y.reshape(B, C, N), (0, 2, 1))
    x2 = x1 + raw["gamma2"] * lpi

    # MLP
    xn3 = ln(x2, raw["ln3_w"], raw["ln3_b"])
    h1 = jax.nn.gelu(xn3 @ raw["W1"].T + raw["b1"], approximate=False)
    mlp = h1 @ raw["W2"].T + raw["b2"]
    return x2 + raw["gamma3"] * mlp


# ----------------------------------------------------------------------------
if __name__ == "__main__":
    B, H, W = 2, 8, 8
    dim, num_heads, mlp_ratio, eta = 32, 4, 4.0, 1.0
    N = H * W
    hidden = int(dim * mlp_ratio)

    key = jax.random.PRNGKey(0)
    kx, kparams_key = jax.random.split(key)
    x = jax.random.normal(kx, (B, N, dim), dtype=jnp.float32)

    raw, kp = make_params(kparams_key, dim, num_heads, hidden, eta=eta,
                          matmul_dtype=jnp.bfloat16)

    out = jax.block_until_ready(xca_block_forward(x, kp, H, W))
    ref = reference_forward(x, raw, H, W, num_heads)

    # bf16 MXU operands (f32 accumulate) -> loosened tolerance vs f32 reference.
    if not bool(jnp.allclose(out, ref, atol=2e-2, rtol=2e-2)):
        err = float(jnp.max(jnp.abs(out - ref)))
        raise RuntimeError(f"Pallas output does not match reference (max abs err {err:.3e})")

    print("KERNEL_OK")
</pallas_src>

<mosaic_0001>
module attributes {stable_mosaic.version = 11 : i64} {
  func.func @_xca_block_kernel(%arg0: i32, %arg1: memref<1x64x32xf32, #tpu.memory_space<vmem>>, %arg2: memref<1x32xf32, #tpu.memory_space<vmem>>, %arg3: memref<1x32xf32, #tpu.memory_space<vmem>>, %arg4: memref<32x96xbf16, #tpu.memory_space<vmem>>, %arg5: memref<1x96xf32, #tpu.memory_space<vmem>>, %arg6: memref<1x32xf32, #tpu.memory_space<vmem>>, %arg7: memref<32x32xf32, #tpu.memory_space<vmem>>, %arg8: memref<32x32xbf16, #tpu.memory_space<vmem>>, %arg9: memref<1x32xf32, #tpu.memory_space<vmem>>, %arg10: memref<1x32xf32, #tpu.memory_space<vmem>>, %arg11: memref<1x32xf32, #tpu.memory_space<vmem>>, %arg12: memref<1x32xf32, #tpu.memory_space<vmem>>, %arg13: memref<9x32xf32, #tpu.memory_space<vmem>>, %arg14: memref<1x32xf32, #tpu.memory_space<vmem>>, %arg15: memref<1x32xf32, #tpu.memory_space<vmem>>, %arg16: memref<9x32xf32, #tpu.memory_space<vmem>>, %arg17: memref<1x32xf32, #tpu.memory_space<vmem>>, %arg18: memref<1x32xf32, #tpu.memory_space<vmem>>, %arg19: memref<1x32xf32, #tpu.memory_space<vmem>>, %arg20: memref<1x32xf32, #tpu.memory_space<vmem>>, %arg21: memref<32x128xbf16, #tpu.memory_space<vmem>>, %arg22: memref<1x128xf32, #tpu.memory_space<vmem>>, %arg23: memref<128x32xbf16, #tpu.memory_space<vmem>>, %arg24: memref<1x32xf32, #tpu.memory_space<vmem>>, %arg25: memref<1x32xf32, #tpu.memory_space<vmem>>, %arg26: memref<64x1xf32, #tpu.memory_space<vmem>>, %arg27: memref<64x1xf32, #tpu.memory_space<vmem>>, %arg28: memref<1x64x32xf32, #tpu.memory_space<vmem>>) attributes {dimension_semantics = [#tpu.dimension_semantics<parallel>], iteration_bounds = array<i64: 2>, scalar_prefetch = 0 : i64, scratch_operands = 0 : i64, tpu.core_type = #tpu.core_type<tc>, window_params = [{transform_indices = @transform_0, window_bounds = array<i64: 1, 64, 32>}, {pipeline_mode = #tpu.pipeline_mode<synchronous>, transform_indices = @transform_1, window_bounds = array<i64: 1, 32>}, {pipeline_mode = #tpu.pipeline_mode<synchronous>, transform_indices = @transform_2, window_bounds = array<i64: 1, 32>}, {pipeline_mode = #tpu.pipeline_mode<synchronous>, transform_indices = @transform_3, window_bounds = array<i64: 32, 96>}, {pipeline_mode = #tpu.pipeline_mode<synchronous>, transform_indices = @transform_4, window_bounds = array<i64: 1, 96>}, {pipeline_mode = #tpu.pipeline_mode<synchronous>, transform_indices = @transform_5, window_bounds = array<i64: 1, 32>}, {pipeline_mode = #tpu.pipeline_mode<synchronous>, transform_indices = @transform_6, window_bounds = array<i64: 32, 32>}, {pipeline_mode = #tpu.pipeline_mode<synchronous>, transform_indices = @transform_7, window_bounds = array<i64: 32, 32>}, {pipeline_mode = #tpu.pipeline_mode<synchronous>, transform_indices = @transform_8, window_bounds = array<i64: 1, 32>}, {pipeline_mode = #tpu.pipeline_mode<synchronous>, transform_indices = @transform_9, window_bounds = array<i64: 1, 32>}, {pipeline_mode = #tpu.pipeline_mode<synchronous>, transform_indices = @transform_10, window_bounds = array<i64: 1, 32>}, {pipeline_mode = #tpu.pipeline_mode<synchronous>, transform_indices = @transform_11, window_bounds = array<i64: 1, 32>}, {pipeline_mode = #tpu.pipeline_mode<synchronous>, transform_indices = @transform_12, window_bounds = array<i64: 9, 32>}, {pipeline_mode = #tpu.pipeline_mode<synchronous>, transform_indices = @transform_13, window_bounds = array<i64: 1, 32>}, {pipeline_mode = #tpu.pipeline_mode<synchronous>, transform_indices = @transform_14, window_bounds = array<i64: 1, 32>}, {pipeline_mode = #tpu.pipeline_mode<synchronous>, transform_indices = @transform_15, window_bounds = array<i64: 9, 32>}, {pipeline_mode = #tpu.pipeline_mode<synchronous>, transform_indices = @transform_16, window_bounds = array<i64: 1, 32>}, {pipeline_mode = #tpu.pipeline_mode<synchronous>, transform_indices = @transform_17, window_bounds = array<i64: 1, 32>}, {pipeline_mode = #tpu.pipeline_mode<synchronous>, transform_indices = @transform_18, window_bounds = array<i64: 1, 32>}, {pipeline_mode = #tpu.pipeline_mode<synchronous>, transform_indices = @transform_19, window_bounds = array<i64: 1, 32>}, {pipeline_mode = #tpu.pipeline_mode<synchronous>, transform_indices = @transform_20, window_bounds = array<i64: 32, 128>}, {pipeline_mode = #tpu.pipeline_mode<synchronous>, transform_indices = @transform_21, window_bounds = array<i64: 1, 128>}, {pipeline_mode = #tpu.pipeline_mode<synchronous>, transform_indices = @transform_22, window_bounds = array<i64: 128, 32>}, {pipeline_mode = #tpu.pipeline_mode<synchronous>, transform_indices = @transform_23, window_bounds = array<i64: 1, 32>}, {pipeline_mode = #tpu.pipeline_mode<synchronous>, transform_indices = @transform_24, window_bounds = array<i64: 1, 32>}, {pipeline_mode = #tpu.pipeline_mode<synchronous>, transform_indices = @transform_25, window_bounds = array<i64: 64, 1>}, {pipeline_mode = #tpu.pipeline_mode<synchronous>, transform_indices = @transform_26, window_bounds = array<i64: 64, 1>}, {transform_indices = @transform_27, window_bounds = array<i64: 1, 64, 32>}]} {
    %c0 = arith.constant 0 : index
    %c0_0 = arith.constant 0 : index
    %c0_1 = arith.constant 0 : index
    %0 = vector.load %arg1[%c0, %c0_0, %c0_1] : memref<1x64x32xf32, #tpu.memory_space<vmem>>, vector<1x64x32xf32>
    %1 = vector.shape_cast %0 : vector<1x64x32xf32> to vector<64x32xf32>
    %c0_2 = arith.constant 0 : index
    %c0_3 = arith.constant 0 : index
    %2 = vector.load %arg2[%c0_2, %c0_3] : memref<1x32xf32, #tpu.memory_space<vmem>>, vector<1x32xf32>
    %c0_4 = arith.constant 0 : index
    %c0_5 = arith.constant 0 : index
    %3 = vector.load %arg3[%c0_4, %c0_5] : memref<1x32xf32, #tpu.memory_space<vmem>>, vector<1x32xf32>
    %cst = arith.constant dense<0.000000e+00> : vector<64xf32>
    %4 = vector.multi_reduction <add>, %1, %cst [1] : vector<64x32xf32> to vector<64xf32>
    %5 = vector.shape_cast %4 : vector<64xf32> to vector<64x1xf32>
    %cst_6 = arith.constant 3.200000e+01 : f32
    %6 = vector.broadcast %cst_6 : f32 to vector<64x1xf32>
    %7 = arith.divf %5, %6 : vector<64x1xf32>
    %8 = vector.broadcast %7 : vector<64x1xf32> to vector<64x32xf32>
    %9 = arith.subf %1, %8 : vector<64x32xf32>
    %10 = arith.mulf %9, %9 : vector<64x32xf32>
    %cst_7 = arith.constant dense<0.000000e+00> : vector<64xf32>
    %11 = vector.multi_reduction <add>, %10, %cst_7 [1] : vector<64x32xf32> to vector<64xf32>
    %12 = vector.shape_cast %11 : vector<64xf32> to vector<64x1xf32>
    %cst_8 = arith.constant 3.200000e+01 : f32
    %13 = vector.broadcast %cst_8 : f32 to vector<64x1xf32>
    %14 = arith.divf %12, %13 : vector<64x1xf32>
    %15 = vector.broadcast %7 : vector<64x1xf32> to vector<64x32xf32>
    %16 = arith.subf %1, %15 : vector<64x32xf32>
    %cst_9 = arith.constant 9.99999974E-6 : f32
    %17 = vector.broadcast %cst_9 : f32 to vector<64x1xf32>
    %18 = arith.addf %14, %17 : vector<64x1xf32>
    %19 = math.rsqrt %18 : vector<64x1xf32>
    %20 = vector.broadcast %19 : vector<64x1xf32> to vector<64x32xf32>
    %21 = arith.mulf %16, %20 : vector<64x32xf32>
    %22 = vector.broadcast %2 : vector<1x32xf32> to vector<64x32xf32>
    %23 = arith.mulf %21, %22 : vector<64x32xf32>
    %24 = vector.broadcast %3 : vector<1x32xf32> to vector<64x32xf32>
    %25 = arith.addf %23, %24 : vector<64x32xf32>
    %26 = arith.truncf %25 : vector<64x32xf32> to vector<64x32xbf16>
    %c0_10 = arith.constant 0 : index
    %c0_11 = arith.constant 0 : index
    %27 = vector.load %arg4[%c0_10, %c0_11] : memref<32x96xbf16, #tpu.memory_space<vmem>>, vector<32x96xbf16>
    %cst_12 = arith.constant dense<0.000000e+00> : vector<64x96xf32>
    %28 = tpu.matmul %26, %27, %cst_12 {dimension_numbers = #tpu.dot_dimension_numbers<[1], [0], [0], [1], [0, 0, 1, 1], [], []>} : vector<64x32xbf16>, vector<32x96xbf16>, vector<64x96xf32> -> vector<64x96xf32>
    %c0_13 = arith.constant 0 : index
    %c0_14 = arith.constant 0 : index
    %29 = vector.load %arg5[%c0_13, %c0_14] : memref<1x96xf32, #tpu.memory_space<vmem>>, vector<1x96xf32>
    %30 = vector.broadcast %29 : vector<1x96xf32> to vector<64x96xf32>
    %31 = arith.addf %28, %30 : vector<64x96xf32>
    %32 = vector.extract_strided_slice %31 {offsets = [0, 0], sizes = [64, 32], strides = [1, 1]} : vector<64x96xf32> to vector<64x32xf32>
    %33 = vector.extract_strided_slice %31 {offsets = [0, 32], sizes = [64, 32], strides = [1, 1]} : vector<64x96xf32> to vector<64x32xf32>
    %34 = vector.extract_strided_slice %31 {offsets = [0, 64], sizes = [64, 32], strides = [1, 1]} : vector<64x96xf32> to vector<64x32xf32>
    %35 = arith.mulf %32, %32 : vector<64x32xf32>
    %cst_15 = arith.constant dense<0.000000e+00> : vector<32xf32>
    %36 = vector.multi_reduction <add>, %35, %cst_15 [0] : vector<64x32xf32> to vector<32xf32>
    %37 = vector.shape_cast %36 : vector<32xf32> to vector<1x32xf32>
    %38 = math.sqrt %37 : vector<1x32xf32>
    %cst_16 = arith.constant 9.99999996E-13 : f32
    %39 = vector.broadcast %cst_16 : f32 to vector<1x32xf32>
    %40 = arith.maximumf %38, %39 : vector<1x32xf32>
    %41 = tpu.reciprocal %40 {approx = true} : vector<1x32xf32> -> vector<1x32xf32>
    %42 = arith.mulf %33, %33 : vector<64x32xf32>
    %cst_17 = arith.constant dense<0.000000e+00> : vector<32xf32>
    %43 = vector.multi_reduction <add>, %42, %cst_17 [0] : vector<64x32xf32> to vector<32xf32>
    %44 = vector.shape_cast %43 : vector<32xf32> to vector<1x32xf32>
    %45 = math.sqrt %44 : vector<1x32xf32>
    %cst_18 = arith.constant 9.99999996E-13 : f32
    %46 = vector.broadcast %cst_18 : f32 to vector<1x32xf32>
    %47 = arith.maximumf %45, %46 : vector<1x32xf32>
    %48 = tpu.reciprocal %47 {approx = true} : vector<1x32xf32> -> vector<1x32xf32>
    %c0_19 = arith.constant 0 : index
    %c0_20 = arith.constant 0 : index
    %49 = vector.load %arg6[%c0_19, %c0_20] : memref<1x32xf32, #tpu.memory_space<vmem>>, vector<1x32xf32>
    %50 = arith.mulf %41, %49 : vector<1x32xf32>
    %51 = vector.broadcast %50 : vector<1x32xf32> to vector<64x32xf32>
    %52 = arith.mulf %32, %51 : vector<64x32xf32>
    %53 = vector.broadcast %48 : vector<1x32xf32> to vector<64x32xf32>
    %54 = arith.mulf %33, %53 : vector<64x32xf32>
    %55 = arith.truncf %52 : vector<64x32xf32> to vector<64x32xbf16>
    %56 = arith.truncf %54 : vector<64x32xf32> to vector<64x32xbf16>
    %cst_21 = arith.constant dense<0.000000e+00> : vector<32x32xf32>
    %57 = tpu.matmul %55, %56, %cst_21 {dimension_numbers = #tpu.dot_dimension_numbers<[0], [0], [1], [1], [0, 1, 1, 1], [], []>} : vector<64x32xbf16>, vector<64x32xbf16>, vector<32x32xf32> -> vector<32x32xf32>
    %c0_22 = arith.constant 0 : index
    %c0_23 = arith.constant 0 : index
    %58 = vector.load %arg7[%c0_22, %c0_23] : memref<32x32xf32, #tpu.memory_space<vmem>>, vector<32x32xf32>
    %59 = arith.addf %57, %58 : vector<32x32xf32>
    %cst_24 = arith.constant dense<0xFF800000> : vector<32xf32>
    %60 = vector.multi_reduction <maximumf>, %59, %cst_24 [1] : vector<32x32xf32> to vector<32xf32>
    %61 = vector.shape_cast %60 : vector<32xf32> to vector<32x1xf32>
    %62 = vector.broadcast %61 : vector<32x1xf32> to vector<32x32xf32>
    %63 = arith.subf %59, %62 : vector<32x32xf32>
    %64 = math.exp %63 : vector<32x32xf32>
    %cst_25 = arith.constant dense<0.000000e+00> : vector<32xf32>
    %65 = vector.multi_reduction <add>, %64, %cst_25 [1] : vector<32x32xf32> to vector<32xf32>
    %66 = vector.shape_cast %65 : vector<32xf32> to vector<32x1xf32>
    %67 = tpu.reciprocal %66 {approx = true} : vector<32x1xf32> -> vector<32x1xf32>
    %68 = vector.broadcast %67 : vector<32x1xf32> to vector<32x32xf32>
    %69 = arith.mulf %64, %68 : vector<32x32xf32>
    %70 = arith.truncf %34 : vector<64x32xf32> to vector<64x32xbf16>
    %71 = arith.truncf %69 : vector<32x32xf32> to vector<32x32xbf16>
    %cst_26 = arith.constant dense<0.000000e+00> : vector<64x32xf32>
    %72 = tpu.matmul %70, %71, %cst_26 {dimension_numbers = #tpu.dot_dimension_numbers<[1], [1], [0], [0], [0, 0, 1, 0], [], []>} : vector<64x32xbf16>, vector<32x32xbf16>, vector<64x32xf32> -> vector<64x32xf32>
    %73 = arith.truncf %72 : vector<64x32xf32> to vector<64x32xbf16>
    %c0_27 = arith.constant 0 : index
    %c0_28 = arith.constant 0 : index
    %74 = vector.load %arg8[%c0_27, %c0_28] : memref<32x32xbf16, #tpu.memory_space<vmem>>, vector<32x32xbf16>
    %cst_29 = arith.constant dense<0.000000e+00> : vector<64x32xf32>
    %75 = tpu.matmul %73, %74, %cst_29 {dimension_numbers = #tpu.dot_dimension_numbers<[1], [0], [0], [1], [0, 0, 1, 1], [], []>} : vector<64x32xbf16>, vector<32x32xbf16>, vector<64x32xf32> -> vector<64x32xf32>
    %c0_30 = arith.constant 0 : index
    %c0_31 = arith.constant 0 : index
    %76 = vector.load %arg9[%c0_30, %c0_31] : memref<1x32xf32, #tpu.memory_space<vmem>>, vector<1x32xf32>
    %77 = vector.broadcast %76 : vector<1x32xf32> to vector<64x32xf32>
    %78 = arith.addf %75, %77 : vector<64x32xf32>
    %c0_32 = arith.constant 0 : index
    %c0_33 = arith.constant 0 : index
    %79 = vector.load %arg10[%c0_32, %c0_33] : memref<1x32xf32, #tpu.memory_space<vmem>>, vector<1x32xf32>
    %80 = vector.broadcast %79 : vector<1x32xf32> to vector<64x32xf32>
    %81 = arith.mulf %80, %78 : vector<64x32xf32>
    %82 = arith.addf %1, %81 : vector<64x32xf32>
    %c0_34 = arith.constant 0 : index
    %c0_35 = arith.constant 0 : index
    %83 = vector.load %arg11[%c0_34, %c0_35] : memref<1x32xf32, #tpu.memory_space<vmem>>, vector<1x32xf32>
    %c0_36 = arith.constant 0 : index
    %c0_37 = arith.constant 0 : index
    %84 = vector.load %arg12[%c0_36, %c0_37] : memref<1x32xf32, #tpu.memory_space<vmem>>, vector<1x32xf32>
    %cst_38 = arith.constant dense<0.000000e+00> : vector<64xf32>
    %85 = vector.multi_reduction <add>, %82, %cst_38 [1] : vector<64x32xf32> to vector<64xf32>
    %86 = vector.shape_cast %85 : vector<64xf32> to vector<64x1xf32>
    %cst_39 = arith.constant 3.200000e+01 : f32
    %87 = vector.broadcast %cst_39 : f32 to vector<64x1xf32>
    %88 = arith.divf %86, %87 : vector<64x1xf32>
    %89 = vector.broadcast %88 : vector<64x1xf32> to vector<64x32xf32>
    %90 = arith.subf %82, %89 : vector<64x32xf32>
    %91 = arith.mulf %90, %90 : vector<64x32xf32>
    %cst_40 = arith.constant dense<0.000000e+00> : vector<64xf32>
    %92 = vector.multi_reduction <add>, %91, %cst_40 [1] : vector<64x32xf32> to vector<64xf32>
    %93 = vector.shape_cast %92 : vector<64xf32> to vector<64x1xf32>
    %cst_41 = arith.constant 3.200000e+01 : f32
    %94 = vector.broadcast %cst_41 : f32 to vector<64x1xf32>
    %95 = arith.divf %93, %94 : vector<64x1xf32>
    %96 = vector.broadcast %88 : vector<64x1xf32> to vector<64x32xf32>
    %97 = arith.subf %82, %96 : vector<64x32xf32>
    %cst_42 = arith.constant 9.99999974E-6 : f32
    %98 = vector.broadcast %cst_42 : f32 to vector<64x1xf32>
    %99 = arith.addf %95, %98 : vector<64x1xf32>
    %100 = math.rsqrt %99 : vector<64x1xf32>
    %101 = vector.broadcast %100 : vector<64x1xf32> to vector<64x32xf32>
    %102 = arith.mulf %97, %101 : vector<64x32xf32>
    %103 = vector.broadcast %83 : vector<1x32xf32> to vector<64x32xf32>
    %104 = arith.mulf %102, %103 : vector<64x32xf32>
    %105 = vector.broadcast %84 : vector<1x32xf32> to vector<64x32xf32>
    %106 = arith.addf %104, %105 : vector<64x32xf32>
    %c0_43 = arith.constant 0 : index
    %c0_44 = arith.constant 0 : index
    %107 = vector.load %arg26[%c0_43, %c0_44] : memref<64x1xf32, #tpu.memory_space<vmem>>, vector<64x1xf32>
    %c0_45 = arith.constant 0 : index
    %c0_46 = arith.constant 0 : index
    %108 = vector.load %arg27[%c0_45, %c0_46] : memref<64x1xf32, #tpu.memory_space<vmem>>, vector<64x1xf32>
    %c0_47 = arith.constant 0 : index
    %c0_48 = arith.constant 0 : index
    %109 = vector.load %arg13[%c0_47, %c0_48] : memref<9x32xf32, #tpu.memory_space<vmem>>, vector<9x32xf32>
    %cst_49 = arith.constant 0.000000e+00 : f32
    %110 = vector.broadcast %cst_49 : f32 to vector<64x32xf32>
    %cst_50 = arith.constant 0.000000e+00 : f32
    %111 = vector.broadcast %cst_50 : f32 to vector<9x32xf32>
    %112 = vector.extract_strided_slice %106 {offsets = [0, 0], sizes = [55, 32], strides = [1, 1]} : vector<64x32xf32> to vector<55x32xf32>
    %113 = tpu.concatenate %111, %112 in 0 : vector<9x32xf32>, vector<55x32xf32> -> vector<64x32xf32>
    %114 = vector.broadcast %107 : vector<64x1xf32> to vector<64x32xf32>
    %115 = arith.mulf %113, %114 : vector<64x32xf32>
    %116 = vector.extract_strided_slice %109 {offsets = [0, 0], sizes = [1, 32], strides = [1, 1]} : vector<9x32xf32> to vector<1x32xf32>
    %117 = vector.broadcast %116 : vector<1x32xf32> to vector<64x32xf32>
    %118 = arith.mulf %115, %117 : vector<64x32xf32>
    %119 = arith.addf %110, %118 : vector<64x32xf32>
    %cst_51 = arith.constant 0.000000e+00 : f32
    %120 = vector.broadcast %cst_51 : f32 to vector<8x32xf32>
    %121 = vector.extract_strided_slice %106 {offsets = [0, 0], sizes = [56, 32], strides = [1, 1]} : vector<64x32xf32> to vector<56x32xf32>
    %122 = tpu.concatenate %120, %121 in 0 : vector<8x32xf32>, vector<56x32xf32> -> vector<64x32xf32>
    %123 = vector.extract_strided_slice %109 {offsets = [1, 0], sizes = [1, 32], strides = [1, 1]} : vector<9x32xf32> to vector<1x32xf32>
    %124 = vector.broadcast %123 : vector<1x32xf32> to vector<64x32xf32>
    %125 = arith.mulf %122, %124 : vector<64x32xf32>
    %126 = arith.addf %119, %125 : vector<64x32xf32>
    %cst_52 = arith.constant 0.000000e+00 : f32
    %127 = vector.broadcast %cst_52 : f32 to vector<7x32xf32>
    %128 = vector.extract_strided_slice %106 {offsets = [0, 0], sizes = [57, 32], strides = [1, 1]} : vector<64x32xf32> to vector<57x32xf32>
    %129 = tpu.concatenate %127, %128 in 0 : vector<7x32xf32>, vector<57x32xf32> -> vector<64x32xf32>
    %130 = vector.broadcast %108 : vector<64x1xf32> to vector<64x32xf32>
    %131 = arith.mulf %129, %130 : vector<64x32xf32>
    %132 = vector.extract_strided_slice %109 {offsets = [2, 0], sizes = [1, 32], strides = [1, 1]} : vector<9x32xf32> to vector<1x32xf32>
    %133 = vector.broadcast %132 : vector<1x32xf32> to vector<64x32xf32>
    %134 = arith.mulf %131, %133 : vector<64x32xf32>
    %135 = arith.addf %126, %134 : vector<64x32xf32>
    %cst_53 = arith.constant 0.000000e+00 : f32
    %136 = vector.broadcast %cst_53 : f32 to vector<1x32xf32>
    %137 = vector.extract_strided_slice %106 {offsets = [0, 0], sizes = [63, 32], strides = [1, 1]} : vector<64x32xf32> to vector<63x32xf32>
    %138 = tpu.concatenate %136, %137 in 0 : vector<1x32xf32>, vector<63x32xf32> -> vector<64x32xf32>
    %139 = vector.broadcast %107 : vector<64x1xf32> to vector<64x32xf32>
    %140 = arith.mulf %138, %139 : vector<64x32xf32>
    %141 = vector.extract_strided_slice %109 {offsets = [3, 0], sizes = [1, 32], strides = [1, 1]} : vector<9x32xf32> to vector<1x32xf32>
    %142 = vector.broadcast %141 : vector<1x32xf32> to vector<64x32xf32>
    %143 = arith.mulf %140, %142 : vector<64x32xf32>
    %144 = arith.addf %135, %143 : vector<64x32xf32>
    %145 = vector.extract_strided_slice %109 {offsets = [4, 0], sizes = [1, 32], strides = [1, 1]} : vector<9x32xf32> to vector<1x32xf32>
    %146 = vector.broadcast %145 : vector<1x32xf32> to vector<64x32xf32>
    %147 = arith.mulf %106, %146 : vector<64x32xf32>
    %148 = arith.addf %144, %147 : vector<64x32xf32>
    %cst_54 = arith.constant 0.000000e+00 : f32
    %149 = vector.broadcast %cst_54 : f32 to vector<1x32xf32>
    %150 = vector.extract_strided_slice %106 {offsets = [1, 0], sizes = [63, 32], strides = [1, 1]} : vector<64x32xf32> to vector<63x32xf32>
    %151 = tpu.concatenate %150, %149 in 0 : vector<63x32xf32>, vector<1x32xf32> -> vector<64x32xf32>
    %152 = vector.broadcast %108 : vector<64x1xf32> to vector<64x32xf32>
    %153 = arith.mulf %151, %152 : vector<64x32xf32>
    %154 = vector.extract_strided_slice %109 {offsets = [5, 0], sizes = [1, 32], strides = [1, 1]} : vector<9x32xf32> to vector<1x32xf32>
    %155 = vector.broadcast %154 : vector<1x32xf32> to vector<64x32xf32>
    %156 = arith.mulf %153, %155 : vector<64x32xf32>
    %157 = arith.addf %148, %156 : vector<64x32xf32>
    %cst_55 = arith.constant 0.000000e+00 : f32
    %158 = vector.broadcast %cst_55 : f32 to vector<7x32xf32>
    %159 = vector.extract_strided_slice %106 {offsets = [7, 0], sizes = [57, 32], strides = [1, 1]} : vector<64x32xf32> to vector<57x32xf32>
    %160 = tpu.concatenate %159, %158 in 0 : vector<57x32xf32>, vector<7x32xf32> -> vector<64x32xf32>
    %161 = vector.broadcast %107 : vector<64x1xf32> to vector<64x32xf32>
    %162 = arith.mulf %160, %161 : vector<64x32xf32>
    %163 = vector.extract_strided_slice %109 {offsets = [6, 0], sizes = [1, 32], strides = [1, 1]} : vector<9x32xf32> to vector<1x32xf32>
    %164 = vector.broadcast %163 : vector<1x32xf32> to vector<64x32xf32>
    %165 = arith.mulf %162, %164 : vector<64x32xf32>
    %166 = arith.addf %157, %165 : vector<64x32xf32>
    %cst_56 = arith.constant 0.000000e+00 : f32
    %167 = vector.broadcast %cst_56 : f32 to vector<8x32xf32>
    %168 = vector.extract_strided_slice %106 {offsets = [8, 0], sizes = [56, 32], strides = [1, 1]} : vector<64x32xf32> to vector<56x32xf32>
    %169 = tpu.concatenate %168, %167 in 0 : vector<56x32xf32>, vector<8x32xf32> -> vector<64x32xf32>
    %170 = vector.extract_strided_slice %109 {offsets = [7, 0], sizes = [1, 32], strides = [1, 1]} : vector<9x32xf32> to vector<1x32xf32>
    %171 = vector.broadcast %170 : vector<1x32xf32> to vector<64x32xf32>
    %172 = arith.mulf %169, %171 : vector<64x32xf32>
    %173 = arith.addf %166, %172 : vector<64x32xf32>
    %cst_57 = arith.constant 0.000000e+00 : f32
    %174 = vector.broadcast %cst_57 : f32 to vector<9x32xf32>
    %175 = vector.extract_strided_slice %106 {offsets = [9, 0], sizes = [55, 32], strides = [1, 1]} : vector<64x32xf32> to vector<55x32xf32>
    %176 = tpu.concatenate %175, %174 in 0 : vector<55x32xf32>, vector<9x32xf32> -> vector<64x32xf32>
    %177 = vector.broadcast %108 : vector<64x1xf32> to vector<64x32xf32>
    %178 = arith.mulf %176, %177 : vector<64x32xf32>
    %179 = vector.extract_strided_slice %109 {offsets = [8, 0], sizes = [1, 32], strides = [1, 1]} : vector<9x32xf32> to vector<1x32xf32>
    %180 = vector.broadcast %179 : vector<1x32xf32> to vector<64x32xf32>
    %181 = arith.mulf %178, %180 : vector<64x32xf32>
    %182 = arith.addf %173, %181 : vector<64x32xf32>
    %c0_58 = arith.constant 0 : index
    %c0_59 = arith.constant 0 : index
    %183 = vector.load %arg14[%c0_58, %c0_59] : memref<1x32xf32, #tpu.memory_space<vmem>>, vector<1x32xf32>
    %184 = vector.broadcast %183 : vector<1x32xf32> to vector<64x32xf32>
    %185 = arith.mulf %182, %184 : vector<64x32xf32>
    %c0_60 = arith.constant 0 : index
    %c0_61 = arith.constant 0 : index
    %186 = vector.load %arg15[%c0_60, %c0_61] : memref<1x32xf32, #tpu.memory_space<vmem>>, vector<1x32xf32>
    %187 = vector.broadcast %186 : vector<1x32xf32> to vector<64x32xf32>
    %188 = arith.addf %185, %187 : vector<64x32xf32>
    %cst_62 = arith.constant 5.000000e-01 : f32
    %189 = vector.broadcast %cst_62 : f32 to vector<64x32xf32>
    %190 = arith.mulf %189, %188 : vector<64x32xf32>
    %cst_63 = arith.constant 0.707106769 : f32
    %191 = vector.broadcast %cst_63 : f32 to vector<64x32xf32>
    %192 = arith.mulf %188, %191 : vector<64x32xf32>
    %193 = math.absf %192 : vector<64x32xf32>
    %cst_64 = arith.constant 0.327591091 : f32
    %194 = vector.broadcast %cst_64 : f32 to vector<64x32xf32>
    %195 = arith.mulf %194, %193 : vector<64x32xf32>
    %cst_65 = arith.constant 1.000000e+00 : f32
    %196 = vector.broadcast %cst_65 : f32 to vector<64x32xf32>
    %197 = arith.addf %196, %195 : vector<64x32xf32>
    %198 = tpu.reciprocal %197 {approx = true} : vector<64x32xf32> -> vector<64x32xf32>
    %cst_66 = arith.constant 1.06140542 : f32
    %199 = vector.broadcast %cst_66 : f32 to vector<64x32xf32>
    %200 = arith.mulf %198, %199 : vector<64x32xf32>
    %cst_67 = arith.constant -1.45315206 : f32
    %201 = vector.broadcast %cst_67 : f32 to vector<64x32xf32>
    %202 = arith.addf %201, %200 : vector<64x32xf32>
    %203 = arith.mulf %198, %202 : vector<64x32xf32>
    %cst_68 = arith.constant 1.42141378 : f32
    %204 = vector.broadcast %cst_68 : f32 to vector<64x32xf32>
    %205 = arith.addf %204, %203 : vector<64x32xf32>
    %206 = arith.mulf %198, %205 : vector<64x32xf32>
    %cst_69 = arith.constant -0.284496725 : f32
    %207 = vector.broadcast %cst_69 : f32 to vector<64x32xf32>
    %208 = arith.addf %207, %206 : vector<64x32xf32>
    %209 = arith.mulf %198, %208 : vector<64x32xf32>
    %cst_70 = arith.constant 0.254829586 : f32
    %210 = vector.broadcast %cst_70 : f32 to vector<64x32xf32>
    %211 = arith.addf %210, %209 : vector<64x32xf32>
    %212 = arith.mulf %198, %211 : vector<64x32xf32>
    %cst_71 = arith.constant 0.000000e+00 : f32
    %213 = vector.broadcast %cst_71 : f32 to vector<64x32xf32>
    %214 = arith.subf %213, %193 : vector<64x32xf32>
    %215 = arith.mulf %214, %193 : vector<64x32xf32>
    %216 = math.exp %215 : vector<64x32xf32>
    %217 = arith.mulf %212, %216 : vector<64x32xf32>
    %cst_72 = arith.constant 1.000000e+00 : f32
    %218 = vector.broadcast %cst_72 : f32 to vector<64x32xf32>
    %219 = arith.subf %218, %217 : vector<64x32xf32>
    %cst_73 = arith.constant 0.000000e+00 : f32
    %220 = vector.broadcast %cst_73 : f32 to vector<64x32xf32>
    %221 = arith.cmpf oge, %192, %220 : vector<64x32xf32>
    %cst_74 = arith.constant 0.000000e+00 : f32
    %222 = vector.broadcast %cst_74 : f32 to vector<64x32xf32>
    %223 = arith.subf %222, %219 : vector<64x32xf32>
    %224 = arith.select %221, %219, %223 : vector<64x32xi1>, vector<64x32xf32>
    %cst_75 = arith.constant 1.000000e+00 : f32
    %225 = vector.broadcast %cst_75 : f32 to vector<64x32xf32>
    %226 = arith.addf %225, %224 : vector<64x32xf32>
    %227 = arith.mulf %190, %226 : vector<64x32xf32>
    %c0_76 = arith.constant 0 : index
    %c0_77 = arith.constant 0 : index
    %228 = vector.load %arg16[%c0_76, %c0_77] : memref<9x32xf32, #tpu.memory_space<vmem>>, vector<9x32xf32>
    %cst_78 = arith.constant 0.000000e+00 : f32
    %229 = vector.broadcast %cst_78 : f32 to vector<64x32xf32>
    %cst_79 = arith.constant 0.000000e+00 : f32
    %230 = vector.broadcast %cst_79 : f32 to vector<9x32xf32>
    %231 = vector.extract_strided_slice %227 {offsets = [0, 0], sizes = [55, 32], strides = [1, 1]} : vector<64x32xf32> to vector<55x32xf32>
    %232 = tpu.concatenate %230, %231 in 0 : vector<9x32xf32>, vector<55x32xf32> -> vector<64x32xf32>
    %233 = vector.broadcast %107 : vector<64x1xf32> to vector<64x32xf32>
    %234 = arith.mulf %232, %233 : vector<64x32xf32>
    %235 = vector.extract_strided_slice %228 {offsets = [0, 0], sizes = [1, 32], strides = [1, 1]} : vector<9x32xf32> to vector<1x32xf32>
    %236 = vector.broadcast %235 : vector<1x32xf32> to vector<64x32xf32>
    %237 = arith.mulf %234, %236 : vector<64x32xf32>
    %238 = arith.addf %229, %237 : vector<64x32xf32>
    %cst_80 = arith.constant 0.000000e+00 : f32
    %239 = vector.broadcast %cst_80 : f32 to vector<8x32xf32>
    %240 = vector.extract_strided_slice %227 {offsets = [0, 0], sizes = [56, 32], strides = [1, 1]} : vector<64x32xf32> to vector<56x32xf32>
    %241 = tpu.concatenate %239, %240 in 0 : vector<8x32xf32>, vector<56x32xf32> -> vector<64x32xf32>
    %242 = vector.extract_strided_slice %228 {offsets = [1, 0], sizes = [1, 32], strides = [1, 1]} : vector<9x32xf32> to vector<1x32xf32>
    %243 = vector.broadcast %242 : vector<1x32xf32> to vector<64x32xf32>
    %244 = arith.mulf %241, %243 : vector<64x32xf32>
    %245 = arith.addf %238, %244 : vector<64x32xf32>
    %cst_81 = arith.constant 0.000000e+00 : f32
    %246 = vector.broadcast %cst_81 : f32 to vector<7x32xf32>
    %247 = vector.extract_strided_slice %227 {offsets = [0, 0], sizes = [57, 32], strides = [1, 1]} : vector<64x32xf32> to vector<57x32xf32>
    %248 = tpu.concatenate %246, %247 in 0 : vector<7x32xf32>, vector<57x32xf32> -> vector<64x32xf32>
    %249 = vector.broadcast %108 : vector<64x1xf32> to vector<64x32xf32>
    %250 = arith.mulf %248, %249 : vector<64x32xf32>
    %251 = vector.extract_strided_slice %228 {offsets = [2, 0], sizes = [1, 32], strides = [1, 1]} : vector<9x32xf32> to vector<1x32xf32>
    %252 = vector.broadcast %251 : vector<1x32xf32> to vector<64x32xf32>
    %253 = arith.mulf %250, %252 : vector<64x32xf32>
    %254 = arith.addf %245, %253 : vector<64x32xf32>
    %cst_82 = arith.constant 0.000000e+00 : f32
    %255 = vector.broadcast %cst_82 : f32 to vector<1x32xf32>
    %256 = vector.extract_strided_slice %227 {offsets = [0, 0], sizes = [63, 32], strides = [1, 1]} : vector<64x32xf32> to vector<63x32xf32>
    %257 = tpu.concatenate %255, %256 in 0 : vector<1x32xf32>, vector<63x32xf32> -> vector<64x32xf32>
    %258 = vector.broadcast %107 : vector<64x1xf32> to vector<64x32xf32>
    %259 = arith.mulf %257, %258 : vector<64x32xf32>
    %260 = vector.extract_strided_slice %228 {offsets = [3, 0], sizes = [1, 32], strides = [1, 1]} : vector<9x32xf32> to vector<1x32xf32>
    %261 = vector.broadcast %260 : vector<1x32xf32> to vector<64x32xf32>
    %262 = arith.mulf %259, %261 : vector<64x32xf32>
    %263 = arith.addf %254, %262 : vector<64x32xf32>
    %264 = vector.extract_strided_slice %228 {offsets = [4, 0], sizes = [1, 32], strides = [1, 1]} : vector<9x32xf32> to vector<1x32xf32>
    %265 = vector.broadcast %264 : vector<1x32xf32> to vector<64x32xf32>
    %266 = arith.mulf %227, %265 : vector<64x32xf32>
    %267 = arith.addf %263, %266 : vector<64x32xf32>
    %cst_83 = arith.constant 0.000000e+00 : f32
    %268 = vector.broadcast %cst_83 : f32 to vector<1x32xf32>
    %269 = vector.extract_strided_slice %227 {offsets = [1, 0], sizes = [63, 32], strides = [1, 1]} : vector<64x32xf32> to vector<63x32xf32>
    %270 = tpu.concatenate %269, %268 in 0 : vector<63x32xf32>, vector<1x32xf32> -> vector<64x32xf32>
    %271 = vector.broadcast %108 : vector<64x1xf32> to vector<64x32xf32>
    %272 = arith.mulf %270, %271 : vector<64x32xf32>
    %273 = vector.extract_strided_slice %228 {offsets = [5, 0], sizes = [1, 32], strides = [1, 1]} : vector<9x32xf32> to vector<1x32xf32>
    %274 = vector.broadcast %273 : vector<1x32xf32> to vector<64x32xf32>
    %275 = arith.mulf %272, %274 : vector<64x32xf32>
    %276 = arith.addf %267, %275 : vector<64x32xf32>
    %cst_84 = arith.constant 0.000000e+00 : f32
    %277 = vector.broadcast %cst_84 : f32 to vector<7x32xf32>
    %278 = vector.extract_strided_slice %227 {offsets = [7, 0], sizes = [57, 32], strides = [1, 1]} : vector<64x32xf32> to vector<57x32xf32>
    %279 = tpu.concatenate %278, %277 in 0 : vector<57x32xf32>, vector<7x32xf32> -> vector<64x32xf32>
    %280 = vector.broadcast %107 : vector<64x1xf32> to vector<64x32xf32>
    %281 = arith.mulf %279, %280 : vector<64x32xf32>
    %282 = vector.extract_strided_slice %228 {offsets = [6, 0], sizes = [1, 32], strides = [1, 1]} : vector<9x32xf32> to vector<1x32xf32>
    %283 = vector.broadcast %282 : vector<1x32xf32> to vector<64x32xf32>
    %284 = arith.mulf %281, %283 : vector<64x32xf32>
    %285 = arith.addf %276, %284 : vector<64x32xf32>
    %cst_85 = arith.constant 0.000000e+00 : f32
    %286 = vector.broadcast %cst_85 : f32 to vector<8x32xf32>
    %287 = vector.extract_strided_slice %227 {offsets = [8, 0], sizes = [56, 32], strides = [1, 1]} : vector<64x32xf32> to vector<56x32xf32>
    %288 = tpu.concatenate %287, %286 in 0 : vector<56x32xf32>, vector<8x32xf32> -> vector<64x32xf32>
    %289 = vector.extract_strided_slice %228 {offsets = [7, 0], sizes = [1, 32], strides = [1, 1]} : vector<9x32xf32> to vector<1x32xf32>
    %290 = vector.broadcast %289 : vector<1x32xf32> to vector<64x32xf32>
    %291 = arith.mulf %288, %290 : vector<64x32xf32>
    %292 = arith.addf %285, %291 : vector<64x32xf32>
    %cst_86 = arith.constant 0.000000e+00 : f32
    %293 = vector.broadcast %cst_86 : f32 to vector<9x32xf32>
    %294 = vector.extract_strided_slice %227 {offsets = [9, 0], sizes = [55, 32], strides = [1, 1]} : vector<64x32xf32> to vector<55x32xf32>
    %295 = tpu.concatenate %294, %293 in 0 : vector<55x32xf32>, vector<9x32xf32> -> vector<64x32xf32>
    %296 = vector.broadcast %108 : vector<64x1xf32> to vector<64x32xf32>
    %297 = arith.mulf %295, %296 : vector<64x32xf32>
    %298 = vector.extract_strided_slice %228 {offsets = [8, 0], sizes = [1, 32], strides = [1, 1]} : vector<9x32xf32> to vector<1x32xf32>
    %299 = vector.broadcast %298 : vector<1x32xf32> to vector<64x32xf32>
    %300 = arith.mulf %297, %299 : vector<64x32xf32>
    %301 = arith.addf %292, %300 : vector<64x32xf32>
    %c0_87 = arith.constant 0 : index
    %c0_88 = arith.constant 0 : index
    %302 = vector.load %arg17[%c0_87, %c0_88] : memref<1x32xf32, #tpu.memory_space<vmem>>, vector<1x32xf32>
    %303 = vector.broadcast %302 : vector<1x32xf32> to vector<64x32xf32>
    %304 = arith.addf %301, %303 : vector<64x32xf32>
    %c0_89 = arith.constant 0 : index
    %c0_90 = arith.constant 0 : index
    %305 = vector.load %arg18[%c0_89, %c0_90] : memref<1x32xf32, #tpu.memory_space<vmem>>, vector<1x32xf32>
    %306 = vector.broadcast %305 : vector<1x32xf32> to vector<64x32xf32>
    %307 = arith.mulf %306, %304 : vector<64x32xf32>
    %308 = arith.addf %82, %307 : vector<64x32xf32>
    %c0_91 = arith.constant 0 : index
    %c0_92 = arith.constant 0 : index
    %309 = vector.load %arg19[%c0_91, %c0_92] : memref<1x32xf32, #tpu.memory_space<vmem>>, vector<1x32xf32>
    %c0_93 = arith.constant 0 : index
    %c0_94 = arith.constant 0 : index
    %310 = vector.load %arg20[%c0_93, %c0_94] : memref<1x32xf32, #tpu.memory_space<vmem>>, vector<1x32xf32>
    %cst_95 = arith.constant dense<0.000000e+00> : vector<64xf32>
    %311 = vector.multi_reduction <add>, %308, %cst_95 [1] : vector<64x32xf32> to vector<64xf32>
    %312 = vector.shape_cast %311 : vector<64xf32> to vector<64x1xf32>
    %cst_96 = arith.constant 3.200000e+01 : f32
    %313 = vector.broadcast %cst_96 : f32 to vector<64x1xf32>
    %314 = arith.divf %312, %313 : vector<64x1xf32>
    %315 = vector.broadcast %314 : vector<64x1xf32> to vector<64x32xf32>
    %316 = arith.subf %308, %315 : vector<64x32xf32>
    %317 = arith.mulf %316, %316 : vector<64x32xf32>
    %cst_97 = arith.constant dense<0.000000e+00> : vector<64xf32>
    %318 = vector.multi_reduction <add>, %317, %cst_97 [1] : vector<64x32xf32> to vector<64xf32>
    %319 = vector.shape_cast %318 : vector<64xf32> to vector<64x1xf32>
    %cst_98 = arith.constant 3.200000e+01 : f32
    %320 = vector.broadcast %cst_98 : f32 to vector<64x1xf32>
    %321 = arith.divf %319, %320 : vector<64x1xf32>
    %322 = vector.broadcast %314 : vector<64x1xf32> to vector<64x32xf32>
    %323 = arith.subf %308, %322 : vector<64x32xf32>
    %cst_99 = arith.constant 9.99999974E-6 : f32
    %324 = vector.broadcast %cst_99 : f32 to vector<64x1xf32>
    %325 = arith.addf %321, %324 : vector<64x1xf32>
    %326 = math.rsqrt %325 : vector<64x1xf32>
    %327 = vector.broadcast %326 : vector<64x1xf32> to vector<64x32xf32>
    %328 = arith.mulf %323, %327 : vector<64x32xf32>
    %329 = vector.broadcast %309 : vector<1x32xf32> to vector<64x32xf32>
    %330 = arith.mulf %328, %329 : vector<64x32xf32>
    %331 = vector.broadcast %310 : vector<1x32xf32> to vector<64x32xf32>
    %332 = arith.addf %330, %331 : vector<64x32xf32>
    %333 = arith.truncf %332 : vector<64x32xf32> to vector<64x32xbf16>
    %c0_100 = arith.constant 0 : index
    %c0_101 = arith.constant 0 : index
    %334 = vector.load %arg21[%c0_100, %c0_101] : memref<32x128xbf16, #tpu.memory_space<vmem>>, vector<32x128xbf16>
    %cst_102 = arith.constant dense<0.000000e+00> : vector<64x128xf32>
    %335 = tpu.matmul %333, %334, %cst_102 {dimension_numbers = #tpu.dot_dimension_numbers<[1], [0], [0], [1], [0, 0, 1, 1], [], []>} : vector<64x32xbf16>, vector<32x128xbf16>, vector<64x128xf32> -> vector<64x128xf32>
    %c0_103 = arith.constant 0 : index
    %c0_104 = arith.constant 0 : index
    %336 = vector.load %arg22[%c0_103, %c0_104] : memref<1x128xf32, #tpu.memory_space<vmem>>, vector<1x128xf32>
    %337 = vector.broadcast %336 : vector<1x128xf32> to vector<64x128xf32>
    %338 = arith.addf %335, %337 : vector<64x128xf32>
    %cst_105 = arith.constant 5.000000e-01 : f32
    %339 = vector.broadcast %cst_105 : f32 to vector<64x128xf32>
    %340 = arith.mulf %339, %338 : vector<64x128xf32>
    %cst_106 = arith.constant 0.707106769 : f32
    %341 = vector.broadcast %cst_106 : f32 to vector<64x128xf32>
    %342 = arith.mulf %338, %341 : vector<64x128xf32>
    %343 = math.absf %342 : vector<64x128xf32>
    %cst_107 = arith.constant 0.327591091 : f32
    %344 = vector.broadcast %cst_107 : f32 to vector<64x128xf32>
    %345 = arith.mulf %344, %343 : vector<64x128xf32>
    %cst_108 = arith.constant 1.000000e+00 : f32
    %346 = vector.broadcast %cst_108 : f32 to vector<64x128xf32>
    %347 = arith.addf %346, %345 : vector<64x128xf32>
    %348 = tpu.reciprocal %347 {approx = true} : vector<64x128xf32> -> vector<64x128xf32>
    %cst_109 = arith.constant 1.06140542 : f32
    %349 = vector.broadcast %cst_109 : f32 to vector<64x128xf32>
    %350 = arith.mulf %348, %349 : vector<64x128xf32>
    %cst_110 = arith.constant -1.45315206 : f32
    %351 = vector.broadcast %cst_110 : f32 to vector<64x128xf32>
    %352 = arith.addf %351, %350 : vector<64x128xf32>
    %353 = arith.mulf %348, %352 : vector<64x128xf32>
    %cst_111 = arith.constant 1.42141378 : f32
    %354 = vector.broadcast %cst_111 : f32 to vector<64x128xf32>
    %355 = arith.addf %354, %353 : vector<64x128xf32>
    %356 = arith.mulf %348, %355 : vector<64x128xf32>
    %cst_112 = arith.constant -0.284496725 : f32
    %357 = vector.broadcast %cst_112 : f32 to vector<64x128xf32>
    %358 = arith.addf %357, %356 : vector<64x128xf32>
    %359 = arith.mulf %348, %358 : vector<64x128xf32>
    %cst_113 = arith.constant 0.254829586 : f32
    %360 = vector.broadcast %cst_113 : f32 to vector<64x128xf32>
    %361 = arith.addf %360, %359 : vector<64x128xf32>
    %362 = arith.mulf %348, %361 : vector<64x128xf32>
    %cst_114 = arith.constant 0.000000e+00 : f32
    %363 = vector.broadcast %cst_114 : f32 to vector<64x128xf32>
    %364 = arith.subf %363, %343 : vector<64x128xf32>
    %365 = arith.mulf %364, %343 : vector<64x128xf32>
    %366 = math.exp %365 : vector<64x128xf32>
    %367 = arith.mulf %362, %366 : vector<64x128xf32>
    %cst_115 = arith.constant 1.000000e+00 : f32
    %368 = vector.broadcast %cst_115 : f32 to vector<64x128xf32>
    %369 = arith.subf %368, %367 : vector<64x128xf32>
    %cst_116 = arith.constant 0.000000e+00 : f32
    %370 = vector.broadcast %cst_116 : f32 to vector<64x128xf32>
    %371 = arith.cmpf oge, %342, %370 : vector<64x128xf32>
    %cst_117 = arith.constant 0.000000e+00 : f32
    %372 = vector.broadcast %cst_117 : f32 to vector<64x128xf32>
    %373 = arith.subf %372, %369 : vector<64x128xf32>
    %374 = arith.select %371, %369, %373 : vector<64x128xi1>, vector<64x128xf32>
    %cst_118 = arith.constant 1.000000e+00 : f32
    %375 = vector.broadcast %cst_118 : f32 to vector<64x128xf32>
    %376 = arith.addf %375, %374 : vector<64x128xf32>
    %377 = arith.mulf %340, %376 : vector<64x128xf32>
    %378 = arith.truncf %377 : vector<64x128xf32> to vector<64x128xbf16>
    %c0_119 = arith.constant 0 : index
    %c0_120 = arith.constant 0 : index
    %379 = vector.load %arg23[%c0_119, %c0_120] : memref<128x32xbf16, #tpu.memory_space<vmem>>, vector<128x32xbf16>
    %cst_121 = arith.constant dense<0.000000e+00> : vector<64x32xf32>
    %380 = tpu.matmul %378, %379, %cst_121 {dimension_numbers = #tpu.dot_dimension_numbers<[1], [0], [0], [1], [0, 0, 1, 1], [], []>} : vector<64x128xbf16>, vector<128x32xbf16>, vector<64x32xf32> -> vector<64x32xf32>
    %c0_122 = arith.constant 0 : index
    %c0_123 = arith.constant 0 : index
    %381 = vector.load %arg24[%c0_122, %c0_123] : memref<1x32xf32, #tpu.memory_space<vmem>>, vector<1x32xf32>
    %382 = vector.broadcast %381 : vector<1x32xf32> to vector<64x32xf32>
    %383 = arith.addf %380, %382 : vector<64x32xf32>
    %c0_124 = arith.constant 0 : index
    %c0_125 = arith.constant 0 : index
    %384 = vector.load %arg25[%c0_124, %c0_125] : memref<1x32xf32, #tpu.memory_space<vmem>>, vector<1x32xf32>
    %385 = vector.broadcast %384 : vector<1x32xf32> to vector<64x32xf32>
    %386 = arith.mulf %385, %383 : vector<64x32xf32>
    %387 = arith.addf %308, %386 : vector<64x32xf32>
    %c0_126 = arith.constant 0 : index
    %c0_127 = arith.constant 0 : index
    %c0_128 = arith.constant 0 : index
    %388 = vector.load %arg28[%c0_126, %c0_127, %c0_128] : memref<1x64x32xf32, #tpu.memory_space<vmem>>, vector<1x64x32xf32>
    %389 = vector.shape_cast %388 : vector<1x64x32xf32> to vector<64x32xf32>
    %390 = vector.shape_cast %387 : vector<64x32xf32> to vector<1x64x32xf32>
    tpu.vector_store %arg28[%c0_126, %c0_127, %c0_128], %390 {strides = array<i32>} : memref<1x64x32xf32, #tpu.memory_space<vmem>>, vector<1x64x32xf32>,
    return
  }
  func.func @transform_0(%arg0: i32) -> (i32, i32, i32) {
    %c0_i32 = arith.constant 0 : i32
    %c0_i32_0 = arith.constant 0 : i32
    %c0_i32_1 = arith.constant 0 : i32
    return %arg0, %c0_i32, %c0_i32_0 : i32, i32, i32
  }
  func.func @transform_1(%arg0: i32) -> (i32, i32) {
    %c0_i32 = arith.constant 0 : i32
    %c0_i32_0 = arith.constant 0 : i32
    %c0_i32_1 = arith.constant 0 : i32
    return %c0_i32, %c0_i32_0 : i32, i32
  }
  func.func @transform_2(%arg0: i32) -> (i32, i32) {
    %c0_i32 = arith.constant 0 : i32
    %c0_i32_0 = arith.constant 0 : i32
    %c0_i32_1 = arith.constant 0 : i32
    return %c0_i32, %c0_i32_0 : i32, i32
  }
  func.func @transform_3(%arg0: i32) -> (i32, i32) {
    %c0_i32 = arith.constant 0 : i32
    %c0_i32_0 = arith.constant 0 : i32
    %c0_i32_1 = arith.constant 0 : i32
    return %c0_i32, %c0_i32_0 : i32, i32
  }
  func.func @transform_4(%arg0: i32) -> (i32, i32) {
    %c0_i32 = arith.constant 0 : i32
    %c0_i32_0 = arith.constant 0 : i32
    %c0_i32_1 = arith.constant 0 : i32
    return %c0_i32, %c0_i32_0 : i32, i32
  }
  func.func @transform_5(%arg0: i32) -> (i32, i32) {
    %c0_i32 = arith.constant 0 : i32
    %c0_i32_0 = arith.constant 0 : i32
    %c0_i32_1 = arith.constant 0 : i32
    return %c0_i32, %c0_i32_0 : i32, i32
  }
  func.func @transform_6(%arg0: i32) -> (i32, i32) {
    %c0_i32 = arith.constant 0 : i32
    %c0_i32_0 = arith.constant 0 : i32
    %c0_i32_1 = arith.constant 0 : i32
    return %c0_i32, %c0_i32_0 : i32, i32
  }
  func.func @transform_7(%arg0: i32) -> (i32, i32) {
    %c0_i32 = arith.constant 0 : i32
    %c0_i32_0 = arith.constant 0 : i32
    %c0_i32_1 = arith.constant 0 : i32
    return %c0_i32, %c0_i32_0 : i32, i32
  }
  func.func @transform_8(%arg0: i32) -> (i32, i32) {
    %c0_i32 = arith.constant 0 : i32
    %c0_i32_0 = arith.constant 0 : i32
    %c0_i32_1 = arith.constant 0 : i32
    return %c0_i32, %c0_i32_0 : i32, i32
  }
  func.func @transform_9(%arg0: i32) -> (i32, i32) {
    %c0_i32 = arith.constant 0 : i32
    %c0_i32_0 = arith.constant 0 : i32
    %c0_i32_1 = arith.constant 0 : i32
    return %c0_i32, %c0_i32_0 : i32, i32
  }
  func.func @transform_10(%arg0: i32) -> (i32, i32) {
    %c0_i32 = arith.constant 0 : i32
    %c0_i32_0 = arith.constant 0 : i32
    %c0_i32_1 = arith.constant 0 : i32
    return %c0_i32, %c0_i32_0 : i32, i32
  }
  func.func @transform_11(%arg0: i32) -> (i32, i32) {
    %c0_i32 = arith.constant 0 : i32
    %c0_i32_0 = arith.constant 0 : i32
    %c0_i32_1 = arith.constant 0 : i32
    return %c0_i32, %c0_i32_0 : i32, i32
  }
  func.func @transform_12(%arg0: i32) -> (i32, i32) {
    %c0_i32 = arith.constant 0 : i32
    %c0_i32_0 = arith.constant 0 : i32
    %c0_i32_1 = arith.constant 0 : i32
    return %c0_i32, %c0_i32_0 : i32, i32
  }
  func.func @transform_13(%arg0: i32) -> (i32, i32) {
    %c0_i32 = arith.constant 0 : i32
    %c0_i32_0 = arith.constant 0 : i32
    %c0_i32_1 = arith.constant 0 : i32
    return %c0_i32, %c0_i32_0 : i32, i32
  }
  func.func @transform_14(%arg0: i32) -> (i32, i32) {
    %c0_i32 = arith.constant 0 : i32
    %c0_i32_0 = arith.constant 0 : i32
    %c0_i32_1 = arith.constant 0 : i32
    return %c0_i32, %c0_i32_0 : i32, i32
  }
  func.func @transform_15(%arg0: i32) -> (i32, i32) {
    %c0_i32 = arith.constant 0 : i32
    %c0_i32_0 = arith.constant 0 : i32
    %c0_i32_1 = arith.constant 0 : i32
    return %c0_i32, %c0_i32_0 : i32, i32
  }
  func.func @transform_16(%arg0: i32) -> (i32, i32) {
    %c0_i32 = arith.constant 0 : i32
    %c0_i32_0 = arith.constant 0 : i32
    %c0_i32_1 = arith.constant 0 : i32
    return %c0_i32, %c0_i32_0 : i32, i32
  }
  func.func @transform_17(%arg0: i32) -> (i32, i32) {
    %c0_i32 = arith.constant 0 : i32
    %c0_i32_0 = arith.constant 0 : i32
    %c0_i32_1 = arith.constant 0 : i32
    return %c0_i32, %c0_i32_0 : i32, i32
  }
  func.func @transform_18(%arg0: i32) -> (i32, i32) {
    %c0_i32 = arith.constant 0 : i32
    %c0_i32_0 = arith.constant 0 : i32
    %c0_i32_1 = arith.constant 0 : i32
    return %c0_i32, %c0_i32_0 : i32, i32
  }
  func.func @transform_19(%arg0: i32) -> (i32, i32) {
    %c0_i32 = arith.constant 0 : i32
    %c0_i32_0 = arith.constant 0 : i32
    %c0_i32_1 = arith.constant 0 : i32
    return %c0_i32, %c0_i32_0 : i32, i32
  }
  func.func @transform_20(%arg0: i32) -> (i32, i32) {
    %c0_i32 = arith.constant 0 : i32
    %c0_i32_0 = arith.constant 0 : i32
    %c0_i32_1 = arith.constant 0 : i32
    return %c0_i32, %c0_i32_0 : i32, i32
  }
  func.func @transform_21(%arg0: i32) -> (i32, i32) {
    %c0_i32 = arith.constant 0 : i32
    %c0_i32_0 = arith.constant 0 : i32
    %c0_i32_1 = arith.constant 0 : i32
    return %c0_i32, %c0_i32_0 : i32, i32
  }
  func.func @transform_22(%arg0: i32) -> (i32, i32) {
    %c0_i32 = arith.constant 0 : i32
    %c0_i32_0 = arith.constant 0 : i32
    %c0_i32_1 = arith.constant 0 : i32
    return %c0_i32, %c0_i32_0 : i32, i32
  }
  func.func @transform_23(%arg0: i32) -> (i32, i32) {
    %c0_i32 = arith.constant 0 : i32
    %c0_i32_0 = arith.constant 0 : i32
    %c0_i32_1 = arith.constant 0 : i32
    return %c0_i32, %c0_i32_0 : i32, i32
  }
  func.func @transform_24(%arg0: i32) -> (i32, i32) {
    %c0_i32 = arith.constant 0 : i32
    %c0_i32_0 = arith.constant 0 : i32
    %c0_i32_1 = arith.constant 0 : i32
    return %c0_i32, %c0_i32_0 : i32, i32
  }
  func.func @transform_25(%arg0: i32) -> (i32, i32) {
    %c0_i32 = arith.constant 0 : i32
    %c0_i32_0 = arith.constant 0 : i32
    %c0_i32_1 = arith.constant 0 : i32
    return %c0_i32, %c0_i32_0 : i32, i32
  }
  func.func @transform_26(%arg0: i32) -> (i32, i32) {
    %c0_i32 = arith.constant 0 : i32
    %c0_i32_0 = arith.constant 0 : i32
    %c0_i32_1 = arith.constant 0 : i32
    return %c0_i32, %c0_i32_0 : i32, i32
  }
  func.func @transform_27(%arg0: i32) -> (i32, i32, i32) {
    %c0_i32 = arith.constant 0 : i32
    %c0_i32_0 = arith.constant 0 : i32
    %c0_i32_1 = arith.constant 0 : i32
    return %arg0, %c0_i32, %c0_i32_0 : i32, i32, i32
  }
}

</mosaic_0001>

<llo_original>
// kernel: tpu_custom_call.1
$region0: #{tpu_custom_call.1}
  #allocation0 [shape = 'u32[]', space=smem, size = 0x4, offset = 0x4, fixed_abs, tag = 'smem constant byte address 0x4 - core index']
  #allocation1 [shape = 'u32[144,128]{1,0:T(1,128)}', space=vmem, size = 0x12000, scoped, tag = 'internal scratch']
  %s0 = inlined_call_operand.vmem [shape: f32[2,64,32], index: 0, kind: input, shape index: {}]
  %s1 = inlined_call_operand.vmem [shape: f32[1,32], index: 1, kind: input, shape index: {}]
  %s2 = inlined_call_operand.vmem [shape: f32[1,32], index: 2, kind: input, shape index: {}]
  %s3 = inlined_call_operand.vmem [shape: bf16[32,96], index: 3, kind: input, shape index: {}]
  %s4 = inlined_call_operand.vmem [shape: f32[1,96], index: 4, kind: input, shape index: {}]
  %s5 = inlined_call_operand.vmem [shape: f32[1,32], index: 5, kind: input, shape index: {}]
  %s6 = inlined_call_operand.vmem [shape: f32[32,32], index: 6, kind: input, shape index: {}]
  %s7 = inlined_call_operand.vmem [shape: bf16[32,32], index: 7, kind: input, shape index: {}]
  %s8 = inlined_call_operand.vmem [shape: f32[1,32], index: 8, kind: input, shape index: {}]
  %s9 = inlined_call_operand.vmem [shape: f32[1,32], index: 9, kind: input, shape index: {}]
  %s10 = inlined_call_operand.vmem [shape: f32[1,32], index: 10, kind: input, shape index: {}]
  %s11 = inlined_call_operand.vmem [shape: f32[1,32], index: 11, kind: input, shape index: {}]
  %s12 = inlined_call_operand.vmem [shape: f32[9,32], index: 12, kind: input, shape index: {}]
  %s13 = inlined_call_operand.vmem [shape: f32[1,32], index: 13, kind: input, shape index: {}]
  %s14 = inlined_call_operand.vmem [shape: f32[1,32], index: 14, kind: input, shape index: {}]
  %s15 = inlined_call_operand.vmem [shape: f32[9,32], index: 15, kind: input, shape index: {}]
  %s16 = inlined_call_operand.vmem [shape: f32[1,32], index: 16, kind: input, shape index: {}]
  %s17 = inlined_call_operand.vmem [shape: f32[1,32], index: 17, kind: input, shape index: {}]
  %s18 = inlined_call_operand.vmem [shape: f32[1,32], index: 18, kind: input, shape index: {}]
  %s19 = inlined_call_operand.vmem [shape: f32[1,32], index: 19, kind: input, shape index: {}]
  %s20 = inlined_call_operand.vmem [shape: bf16[32,128], index: 20, kind: input, shape index: {}]
  %s21 = inlined_call_operand.vmem [shape: f32[1,128], index: 21, kind: input, shape index: {}]
  %s22 = inlined_call_operand.vmem [shape: bf16[128,32], index: 22, kind: input, shape index: {}]
  %s23 = inlined_call_operand.vmem [shape: f32[1,32], index: 23, kind: input, shape index: {}]
  %s24 = inlined_call_operand.vmem [shape: f32[1,32], index: 24, kind: input, shape index: {}]
  %s25 = inlined_call_operand.vmem [shape: f32[64,1], index: 25, kind: input, shape index: {}]
  %s26 = inlined_call_operand.vmem [shape: f32[64,1], index: 26, kind: input, shape index: {}]
  %s27 = inlined_call_operand.vmem [shape: f32[2,64,32], index: 27, kind: output, shape index: {}]
  %s28 = sld [smem:[#allocation0]]
  $region141: #{tpu_custom_call.1} parent=0
    _
  %s30 = ssub.s32 1, %s28
  %s31 = scalar_select 0, %s30, %s28
  loop: start=0, step=1, limit=4
  $region2: #{tpu_custom_call.1} parent=0 // loop_pre_header
    _
  $region3: #{tpu_custom_call.1} parent=0 // loop_header
    %s33 = sphi 0, %s37
    %p34 = scmp.ge.s32.totalorder %s33, 4
    %s43 = sphi 0, %s45
    %s46 = sphi 0, %s43
    %s47 = sphi 0, %s46
    %s63 = sphi 0, %s47
    %s67 = sphi 0, %s67
    %s69 = sphi 0, %s67
    %s70 = sphi 0, %s69
    %s84 = sphi 0, %s70
    %s88 = sphi 0, %s88
    %s90 = sphi 0, %s88
    %s91 = sphi 0, %s90
    %s105 = sphi 0, %s91
    %s109 = sphi 0, %s109
    %s111 = sphi 0, %s109
    %s112 = sphi 0, %s111
    %s126 = sphi 0, %s112
    %s130 = sphi 0, %s130
    %s132 = sphi 0, %s130
    %s133 = sphi 0, %s132
    %s147 = sphi 0, %s133
    %s151 = sphi 0, %s151
    %s153 = sphi 0, %s151
    %s154 = sphi 0, %s153
    %s168 = sphi 0, %s154
    %s172 = sphi 0, %s172
    %s174 = sphi 0, %s172
    %s175 = sphi 0, %s174
    %s189 = sphi 0, %s175
    %s193 = sphi 0, %s193
    %s195 = sphi 0, %s193
    %s196 = sphi 0, %s195
    %s210 = sphi 0, %s196
    %s214 = sphi 0, %s214
    %s216 = sphi 0, %s214
    %s217 = sphi 0, %s216
    %s231 = sphi 0, %s217
    %s235 = sphi 0, %s235
    %s237 = sphi 0, %s235
    %s238 = sphi 0, %s237
    %s252 = sphi 0, %s238
    %s256 = sphi 0, %s256
    %s258 = sphi 0, %s256
    %s259 = sphi 0, %s258
    %s273 = sphi 0, %s259
    %s277 = sphi 0, %s277
    %s279 = sphi 0, %s277
    %s280 = sphi 0, %s279
    %s294 = sphi 0, %s280
    %s298 = sphi 0, %s298
    %s300 = sphi 0, %s298
    %s301 = sphi 0, %s300
    %s315 = sphi 0, %s301
    %s319 = sphi 0, %s319
    %s321 = sphi 0, %s319
    %s322 = sphi 0, %s321
    %s336 = sphi 0, %s322
    %s340 = sphi 0, %s340
    %s342 = sphi 0, %s340
    %s343 = sphi 0, %s342
    %s357 = sphi 0, %s343
    %s361 = sphi 0, %s361
    %s363 = sphi 0, %s361
    %s364 = sphi 0, %s363
    %s378 = sphi 0, %s364
    %s382 = sphi 0, %s382
    %s384 = sphi 0, %s382
    %s385 = sphi 0, %s384
    %s399 = sphi 0, %s385
    %s403 = sphi 0, %s403
    %s405 = sphi 0, %s403
    %s406 = sphi 0, %s405
    %s420 = sphi 0, %s406
    %s424 = sphi 0, %s424
    %s426 = sphi 0, %s424
    %s427 = sphi 0, %s426
    %s441 = sphi 0, %s427
    %s445 = sphi 0, %s445
    %s447 = sphi 0, %s445
    %s448 = sphi 0, %s447
    %s462 = sphi 0, %s448
    %s466 = sphi 0, %s466
    %s468 = sphi 0, %s466
    %s469 = sphi 0, %s468
    %s483 = sphi 0, %s469
    %s487 = sphi 0, %s487
    %s489 = sphi 0, %s487
    %s490 = sphi 0, %s489
    %s504 = sphi 0, %s490
    %s508 = sphi 0, %s508
    %s510 = sphi 0, %s508
    %s511 = sphi 0, %s510
    %s525 = sphi 0, %s511
    %s529 = sphi 0, %s529
    %s531 = sphi 0, %s529
    %s532 = sphi 0, %s531
    %s546 = sphi 0, %s532
    %s550 = sphi 0, %s550
    %s552 = sphi 0, %s550
    %s553 = sphi 0, %s552
    %s567 = sphi 0, %s553
    %s571 = sphi 0, %s571
    %s573 = sphi 0, %s571
    %s574 = sphi 0, %s573
    %s588 = sphi 0, %s574
    %s592 = sphi 0, %s592
    %s594 = sphi 0, %s592
    %s595 = sphi 0, %s594
    %s609 = sphi 0, %s595
    %s615 = sphi 0, %s617
    %s618 = sphi 0, %s615
    %s619 = sphi 0, %s618
    %s635 = sphi 0, %s619
  $region4: #{tpu_custom_call.1} parent=0 // loop_header_branch
    %36 = sbr.rel (%p34) target = $region8
  $region5: #{tpu_custom_call.1} parent=0 // loop_body
    %s38 = ssub.s32 %s33, 1
    %s39 = ssub.s32 %s33, 2
    %s40 = sadd.s32 %s33, 1
    %s41 = ssub.s32 %s33, %s40
    %p42 = scmp.eq.s32.totalorder %s41, 0
    %s44 = sadd.s32 %s43, 1
    %s45 = scalar_select %p42, %s43, %s44
    %p48 = pneg %p42
    %p49 = scmp.eq.s32.totalorder %s33, 1
    %p50 = por %p48, %p49
    %p51 = scmp.ne.s32.totalorder %s43, %s46
    %p52 = scmp.eq.s32.totalorder %s33, 0
    %p53 = por %p51, %p52
    %p54 = scmp.ne.s32.totalorder %s43, %s46
    %p55 = scmp.eq.s32.totalorder %s38, 1
    %p56 = por %p54, %p55
    %p57 = scmp.ne.s32.totalorder %s46, %s47
    %p58 = scmp.eq.s32.totalorder %s38, 0
    %p59 = por %p57, %p58
    %p60 = scmp.ne.s32.totalorder %s46, %s47
    %p61 = scmp.eq.s32.totalorder %s39, 1
    %p62 = por %p60, %p61
    %p64 = scmp.ne.s32.totalorder %s47, %s63
    %p65 = scmp.eq.s32.totalorder %s39, 0
    %p66 = por %p64, %p65
    %s68 = sadd.s32 %s67, 1
    %p71 = scmp.eq.s32.totalorder %s33, 1
    %p72 = scmp.ne.s32.totalorder %s67, %s69
    %p73 = scmp.eq.s32.totalorder %s33, 0
    %p74 = por %p72, %p73
    %p75 = scmp.ne.s32.totalorder %s67, %s69
    %p76 = scmp.eq.s32.totalorder %s38, 1
    %p77 = por %p75, %p76
    %p78 = scmp.ne.s32.totalorder %s69, %s70
    %p79 = scmp.eq.s32.totalorder %s38, 0
    %p80 = por %p78, %p79
    %p81 = scmp.ne.s32.totalorder %s69, %s70
    %p82 = scmp.eq.s32.totalorder %s39, 1
    %p83 = por %p81, %p82
    %p85 = scmp.ne.s32.totalorder %s70, %s84
    %p86 = scmp.eq.s32.totalorder %s39, 0
    %p87 = por %p85, %p86
    %s89 = sadd.s32 %s88, 1
    %p92 = scmp.eq.s32.totalorder %s33, 1
    %p93 = scmp.ne.s32.totalorder %s88, %s90
    %p94 = scmp.eq.s32.totalorder %s33, 0
    %p95 = por %p93, %p94
    %p96 = scmp.ne.s32.totalorder %s88, %s90
    %p97 = scmp.eq.s32.totalorder %s38, 1
    %p98 = por %p96, %p97
    %p99 = scmp.ne.s32.totalorder %s90, %s91
    %p100 = scmp.eq.s32.totalorder %s38, 0
    %p101 = por %p99, %p100
    %p102 = scmp.ne.s32.totalorder %s90, %s91
    %p103 = scmp.eq.s32.totalorder %s39, 1
    %p104 = por %p102, %p103
    %p106 = scmp.ne.s32.totalorder %s91, %s105
    %p107 = scmp.eq.s32.totalorder %s39, 0
    %p108 = por %p106, %p107
    %s110 = sadd.s32 %s109, 1
    %p113 = scmp.eq.s32.totalorder %s33, 1
    %p114 = scmp.ne.s32.totalorder %s109, %s111
    %p115 = scmp.eq.s32.totalorder %s33, 0
    %p116 = por %p114, %p115
    %p117 = scmp.ne.s32.totalorder %s109, %s111
    %p118 = scmp.eq.s32.totalorder %s38, 1
    %p119 = por %p117, %p118
    %p120 = scmp.ne.s32.totalorder %s111, %s112
    %p121 = scmp.eq.s32.totalorder %s38, 0
    %p122 = por %p120, %p121
    %p123 = scmp.ne.s32.totalorder %s111, %s112
    %p124 = scmp.eq.s32.totalorder %s39, 1
    %p125 = por %p123, %p124
    %p127 = scmp.ne.s32.totalorder %s112, %s126
    %p128 = scmp.eq.s32.totalorder %s39, 0
    %p129 = por %p127, %p128
    %s131 = sadd.s32 %s130, 1
    %p134 = scmp.eq.s32.totalorder %s33, 1
    %p135 = scmp.ne.s32.totalorder %s130, %s132
    %p136 = scmp.eq.s32.totalorder %s33, 0
    %p137 = por %p135, %p136
    %p138 = scmp.ne.s32.totalorder %s130, %s132
    %p139 = scmp.eq.s32.totalorder %s38, 1
    %p140 = por %p138, %p139
    %p141 = scmp.ne.s32.totalorder %s132, %s133
    %p142 = scmp.eq.s32.totalorder %s38, 0
    %p143 = por %p141, %p142
    %p144 = scmp.ne.s32.totalorder %s132, %s133
    %p145 = scmp.eq.s32.totalorder %s39, 1
    %p146 = por %p144, %p145
    %p148 = scmp.ne.s32.totalorder %s133, %s147
    %p149 = scmp.eq.s32.totalorder %s39, 0
    %p150 = por %p148, %p149
    %s152 = sadd.s32 %s151, 1
    %p155 = scmp.eq.s32.totalorder %s33, 1
    %p156 = scmp.ne.s32.totalorder %s151, %s153
    %p157 = scmp.eq.s32.totalorder %s33, 0
    %p158 = por %p156, %p157
    %p159 = scmp.ne.s32.totalorder %s151, %s153
    %p160 = scmp.eq.s32.totalorder %s38, 1
    %p161 = por %p159, %p160
    %p162 = scmp.ne.s32.totalorder %s153, %s154
    %p163 = scmp.eq.s32.totalorder %s38, 0
    %p164 = por %p162, %p163
    %p165 = scmp.ne.s32.totalorder %s153, %s154
    %p166 = scmp.eq.s32.totalorder %s39, 1
    %p167 = por %p165, %p166
    %p169 = scmp.ne.s32.totalorder %s154, %s168
    %p170 = scmp.eq.s32.totalorder %s39, 0
    %p171 = por %p169, %p170
    %s173 = sadd.s32 %s172, 1
    %p176 = scmp.eq.s32.totalorder %s33, 1
    %p177 = scmp.ne.s32.totalorder %s172, %s174
    %p178 = scmp.eq.s32.totalorder %s33, 0
    %p179 = por %p177, %p178
    %p180 = scmp.ne.s32.totalorder %s172, %s174
    %p181 = scmp.eq.s32.totalorder %s38, 1
    %p182 = por %p180, %p181
    %p183 = scmp.ne.s32.totalorder %s174, %s175
    %p184 = scmp.eq.s32.totalorder %s38, 0
    %p185 = por %p183, %p184
    %p186 = scmp.ne.s32.totalorder %s174, %s175
    %p187 = scmp.eq.s32.totalorder %s39, 1
    %p188 = por %p186, %p187
    %p190 = scmp.ne.s32.totalorder %s175, %s189
    %p191 = scmp.eq.s32.totalorder %s39, 0
    %p192 = por %p190, %p191
    %s194 = sadd.s32 %s193, 1
    %p197 = scmp.eq.s32.totalorder %s33, 1
    %p198 = scmp.ne.s32.totalorder %s193, %s195
    %p199 = scmp.eq.s32.totalorder %s33, 0
    %p200 = por %p198, %p199
    %p201 = scmp.ne.s32.totalorder %s193, %s195
    %p202 = scmp.eq.s32.totalorder %s38, 1
    %p203 = por %p201, %p202
    %p204 = scmp.ne.s32.totalorder %s195, %s196
    %p205 = scmp.eq.s32.totalorder %s38, 0
    %p206 = por %p204, %p205
    %p207 = scmp.ne.s32.totalorder %s195, %s196
    %p208 = scmp.eq.s32.totalorder %s39, 1
    %p209 = por %p207, %p208
    %p211 = scmp.ne.s32.totalorder %s196, %s210
    %p212 = scmp.eq.s32.totalorder %s39, 0
    %p213 = por %p211, %p212
    %s215 = sadd.s32 %s214, 1
    %p218 = scmp.eq.s32.totalorder %s33, 1
    %p219 = scmp.ne.s32.totalorder %s214, %s216
    %p220 = scmp.eq.s32.totalorder %s33, 0
    %p221 = por %p219, %p220
    %p222 = scmp.ne.s32.totalorder %s214, %s216
    %p223 = scmp.eq.s32.totalorder %s38, 1
    %p224 = por %p222, %p223
    %p225 = scmp.ne.s32.totalorder %s216, %s217
    %p226 = scmp.eq.s32.totalorder %s38, 0
    %p227 = por %p225, %p226
    %p228 = scmp.ne.s32.totalorder %s216, %s217
    %p229 = scmp.eq.s32.totalorder %s39, 1
    %p230 = por %p228, %p229
    %p232 = scmp.ne.s32.totalorder %s217, %s231
    %p233 = scmp.eq.s32.totalorder %s39, 0
    %p234 = por %p232, %p233
    %s236 = sadd.s32 %s235, 1
    %p239 = scmp.eq.s32.totalorder %s33, 1
    %p240 = scmp.ne.s32.totalorder %s235, %s237
    %p241 = scmp.eq.s32.totalorder %s33, 0
    %p242 = por %p240, %p241
    %p243 = scmp.ne.s32.totalorder %s235, %s237
    %p244 = scmp.eq.s32.totalorder %s38, 1
    %p245 = por %p243, %p244
    %p246 = scmp.ne.s32.totalorder %s237, %s238
    %p247 = scmp.eq.s32.totalorder %s38, 0
    %p248 = por %p246, %p247
    %p249 = scmp.ne.s32.totalorder %s237, %s238
    %p250 = scmp.eq.s32.totalorder %s39, 1
    %p251 = por %p249, %p250
    %p253 = scmp.ne.s32.totalorder %s238, %s252
    %p254 = scmp.eq.s32.totalorder %s39, 0
    %p255 = por %p253, %p254
    %s257 = sadd.s32 %s256, 1
    %p260 = scmp.eq.s32.totalorder %s33, 1
    %p261 = scmp.ne.s32.totalorder %s256, %s258
    %p262 = scmp.eq.s32.totalorder %s33, 0
    %p263 = por %p261, %p262
    %p264 = scmp.ne.s32.totalorder %s256, %s258
    %p265 = scmp.eq.s32.totalorder %s38, 1
    %p266 = por %p264, %p265
    %p267 = scmp.ne.s32.totalorder %s258, %s259
    %p268 = scmp.eq.s32.totalorder %s38, 0
    %p269 = por %p267, %p268
    %p270 = scmp.ne.s32.totalorder %s258, %s259
    %p271 = scmp.eq.s32.totalorder %s39, 1
    %p272 = por %p270, %p271
    %p274 = scmp.ne.s32.totalorder %s259, %s273
    %p275 = scmp.eq.s32.totalorder %s39, 0
    %p276 = por %p274, %p275
    %s278 = sadd.s32 %s277, 1
    %p281 = scmp.eq.s32.totalorder %s33, 1
    %p282 = scmp.ne.s32.totalorder %s277, %s279
    %p283 = scmp.eq.s32.totalorder %s33, 0
    %p284 = por %p282, %p283
    %p285 = scmp.ne.s32.totalorder %s277, %s279
    %p286 = scmp.eq.s32.totalorder %s38, 1
    %p287 = por %p285, %p286
    %p288 = scmp.ne.s32.totalorder %s279, %s280
    %p289 = scmp.eq.s32.totalorder %s38, 0
    %p290 = por %p288, %p289
    %p291 = scmp.ne.s32.totalorder %s279, %s280
    %p292 = scmp.eq.s32.totalorder %s39, 1
    %p293 = por %p291, %p292
    %p295 = scmp.ne.s32.totalorder %s280, %s294
    %p296 = scmp.eq.s32.totalorder %s39, 0
    %p297 = por %p295, %p296
    %s299 = sadd.s32 %s298, 1
    %p302 = scmp.eq.s32.totalorder %s33, 1
    %p303 = scmp.ne.s32.totalorder %s298, %s300
    %p304 = scmp.eq.s32.totalorder %s33, 0
    %p305 = por %p303, %p304
    %p306 = scmp.ne.s32.totalorder %s298, %s300
    %p307 = scmp.eq.s32.totalorder %s38, 1
    %p308 = por %p306, %p307
    %p309 = scmp.ne.s32.totalorder %s300, %s301
    %p310 = scmp.eq.s32.totalorder %s38, 0
    %p311 = por %p309, %p310
    %p312 = scmp.ne.s32.totalorder %s300, %s301
    %p313 = scmp.eq.s32.totalorder %s39, 1
    %p314 = por %p312, %p313
    %p316 = scmp.ne.s32.totalorder %s301, %s315
    %p317 = scmp.eq.s32.totalorder %s39, 0
    %p318 = por %p316, %p317
    %s320 = sadd.s32 %s319, 1
    %p323 = scmp.eq.s32.totalorder %s33, 1
    %p324 = scmp.ne.s32.totalorder %s319, %s321
    %p325 = scmp.eq.s32.totalorder %s33, 0
    %p326 = por %p324, %p325
    %p327 = scmp.ne.s32.totalorder %s319, %s321
    %p328 = scmp.eq.s32.totalorder %s38, 1
    %p329 = por %p327, %p328
    %p330 = scmp.ne.s32.totalorder %s321, %s322
    %p331 = scmp.eq.s32.totalorder %s38, 0
    %p332 = por %p330, %p331
    %p333 = scmp.ne.s32.totalorder %s321, %s322
    %p334 = scmp.eq.s32.totalorder %s39, 1
    %p335 = por %p333, %p334
    %p337 = scmp.ne.s32.totalorder %s322, %s336
    %p338 = scmp.eq.s32.totalorder %s39, 0
    %p339 = por %p337, %p338
    %s341 = sadd.s32 %s340, 1
    %p344 = scmp.eq.s32.totalorder %s33, 1
    %p345 = scmp.ne.s32.totalorder %s340, %s342
    %p346 = scmp.eq.s32.totalorder %s33, 0
    %p347 = por %p345, %p346
    %p348 = scmp.ne.s32.totalorder %s340, %s342
    %p349 = scmp.eq.s32.totalorder %s38, 1
    %p350 = por %p348, %p349
    %p351 = scmp.ne.s32.totalorder %s342, %s343
    %p352 = scmp.eq.s32.totalorder %s38, 0
    %p353 = por %p351, %p352
    %p354 = scmp.ne.s32.totalorder %s342, %s343
    %p355 = scmp.eq.s32.totalorder %s39, 1
    %p356 = por %p354, %p355
    %p358 = scmp.ne.s32.totalorder %s343, %s357
    %p359 = scmp.eq.s32.totalorder %s39, 0
    %p360 = por %p358, %p359
    %s362 = sadd.s32 %s361, 1
    %p365 = scmp.eq.s32.totalorder %s33, 1
    %p366 = scmp.ne.s32.totalorder %s361, %s363
    %p367 = scmp.eq.s32.totalorder %s33, 0
    %p368 = por %p366, %p367
    %p369 = scmp.ne.s32.totalorder %s361, %s363
    %p370 = scmp.eq.s32.totalorder %s38, 1
    %p371 = por %p369, %p370
    %p372 = scmp.ne.s32.totalorder %s363, %s364
    %p373 = scmp.eq.s32.totalorder %s38, 0
    %p374 = por %p372, %p373
    %p375 = scmp.ne.s32.totalorder %s363, %s364
    %p376 = scmp.eq.s32.totalorder %s39, 1
    %p377 = por %p375, %p376
    %p379 = scmp.ne.s32.totalorder %s364, %s378
    %p380 = scmp.eq.s32.totalorder %s39, 0
    %p381 = por %p379, %p380
    %s383 = sadd.s32 %s382, 1
    %p386 = scmp.eq.s32.totalorder %s33, 1
    %p387 = scmp.ne.s32.totalorder %s382, %s384
    %p388 = scmp.eq.s32.totalorder %s33, 0
    %p389 = por %p387, %p388
    %p390 = scmp.ne.s32.totalorder %s382, %s384
    %p391 = scmp.eq.s32.totalorder %s38, 1
    %p392 = por %p390, %p391
    %p393 = scmp.ne.s32.totalorder %s384, %s385
    %p394 = scmp.eq.s32.totalorder %s38, 0
    %p395 = por %p393, %p394
    %p396 = scmp.ne.s32.totalorder %s384, %s385
    %p397 = scmp.eq.s32.totalorder %s39, 1
    %p398 = por %p396, %p397
    %p400 = scmp.ne.s32.totalorder %s385, %s399
    %p401 = scmp.eq.s32.totalorder %s39, 0
    %p402 = por %p400, %p401
    %s404 = sadd.s32 %s403, 1
    %p407 = scmp.eq.s32.totalorder %s33, 1
    %p408 = scmp.ne.s32.totalorder %s403, %s405
    %p409 = scmp.eq.s32.totalorder %s33, 0
    %p410 = por %p408, %p409
    %p411 = scmp.ne.s32.totalorder %s403, %s405
    %p412 = scmp.eq.s32.totalorder %s38, 1
    %p413 = por %p411, %p412
    %p414 = scmp.ne.s32.totalorder %s405, %s406
    %p415 = scmp.eq.s32.totalorder %s38, 0
    %p416 = por %p414, %p415
    %p417 = scmp.ne.s32.totalorder %s405, %s406
    %p418 = scmp.eq.s32.totalorder %s39, 1
    %p419 = por %p417, %p418
    %p421 = scmp.ne.s32.totalorder %s406, %s420
    %p422 = scmp.eq.s32.totalorder %s39, 0
    %p423 = por %p421, %p422
    %s425 = sadd.s32 %s424, 1
    %p428 = scmp.eq.s32.totalorder %s33, 1
    %p429 = scmp.ne.s32.totalorder %s424, %s426
    %p430 = scmp.eq.s32.totalorder %s33, 0
    %p431 = por %p429, %p430
    %p432 = scmp.ne.s32.totalorder %s424, %s426
    %p433 = scmp.eq.s32.totalorder %s38, 1
    %p434 = por %p432, %p433
    %p435 = scmp.ne.s32.totalorder %s426, %s427
    %p436 = scmp.eq.s32.totalorder %s38, 0
    %p437 = por %p435, %p436
    %p438 = scmp.ne.s32.totalorder %s426, %s427
    %p439 = scmp.eq.s32.totalorder %s39, 1
    %p440 = por %p438, %p439
    %p442 = scmp.ne.s32.totalorder %s427, %s441
    %p443 = scmp.eq.s32.totalorder %s39, 0
    %p444 = por %p442, %p443
    %s446 = sadd.s32 %s445, 1
    %p449 = scmp.eq.s32.totalorder %s33, 1
    %p450 = scmp.ne.s32.totalorder %s445, %s447
    %p451 = scmp.eq.s32.totalorder %s33, 0
    %p452 = por %p450, %p451
    %p453 = scmp.ne.s32.totalorder %s445, %s447
    %p454 = scmp.eq.s32.totalorder %s38, 1
    %p455 = por %p453, %p454
    %p456 = scmp.ne.s32.totalorder %s447, %s448
    %p457 = scmp.eq.s32.totalorder %s38, 0
    %p458 = por %p456, %p457
    %p459 = scmp.ne.s32.totalorder %s447, %s448
    %p460 = scmp.eq.s32.totalorder %s39, 1
    %p461 = por %p459, %p460
    %p463 = scmp.ne.s32.totalorder %s448, %s462
    %p464 = scmp.eq.s32.totalorder %s39, 0
    %p465 = por %p463, %p464
    %s467 = sadd.s32 %s466, 1
    %p470 = scmp.eq.s32.totalorder %s33, 1
    %p471 = scmp.ne.s32.totalorder %s466, %s468
    %p472 = scmp.eq.s32.totalorder %s33, 0
    %p473 = por %p471, %p472
    %p474 = scmp.ne.s32.totalorder %s466, %s468
    %p475 = scmp.eq.s32.totalorder %s38, 1
    %p476 = por %p474, %p475
    %p477 = scmp.ne.s32.totalorder %s468, %s469
    %p478 = scmp.eq.s32.totalorder %s38, 0
    %p479 = por %p477, %p478
    %p480 = scmp.ne.s32.totalorder %s468, %s469
    %p481 = scmp.eq.s32.totalorder %s39, 1
    %p482 = por %p480, %p481
    %p484 = scmp.ne.s32.totalorder %s469, %s483
    %p485 = scmp.eq.s32.totalorder %s39, 0
    %p486 = por %p484, %p485
    %s488 = sadd.s32 %s487, 1
    %p491 = scmp.eq.s32.totalorder %s33, 1
    %p492 = scmp.ne.s32.totalorder %s487, %s489
    %p493 = scmp.eq.s32.totalorder %s33, 0
    %p494 = por %p492, %p493
    %p495 = scmp.ne.s32.totalorder %s487, %s489
    %p496 = scmp.eq.s32.totalorder %s38, 1
    %p497 = por %p495, %p496
    %p498 = scmp.ne.s32.totalorder %s489, %s490
    %p499 = scmp.eq.s32.totalorder %s38, 0
    %p500 = por %p498, %p499
    %p501 = scmp.ne.s32.totalorder %s489, %s490
    %p502 = scmp.eq.s32.totalorder %s39, 1
    %p503 = por %p501, %p502
    %p505 = scmp.ne.s32.totalorder %s490, %s504
    %p506 = scmp.eq.s32.totalorder %s39, 0
    %p507 = por %p505, %p506
    %s509 = sadd.s32 %s508, 1
    %p512 = scmp.eq.s32.totalorder %s33, 1
    %p513 = scmp.ne.s32.totalorder %s508, %s510
    %p514 = scmp.eq.s32.totalorder %s33, 0
    %p515 = por %p513, %p514
    %p516 = scmp.ne.s32.totalorder %s508, %s510
    %p517 = scmp.eq.s32.totalorder %s38, 1
    %p518 = por %p516, %p517
    %p519 = scmp.ne.s32.totalorder %s510, %s511
    %p520 = scmp.eq.s32.totalorder %s38, 0
    %p521 = por %p519, %p520
    %p522 = scmp.ne.s32.totalorder %s510, %s511
    %p523 = scmp.eq.s32.totalorder %s39, 1
    %p524 = por %p522, %p523
    %p526 = scmp.ne.s32.totalorder %s511, %s525
    %p527 = scmp.eq.s32.totalorder %s39, 0
    %p528 = por %p526, %p527
    %s530 = sadd.s32 %s529, 1
    %p533 = scmp.eq.s32.totalorder %s33, 1
    %p534 = scmp.ne.s32.totalorder %s529, %s531
    %p535 = scmp.eq.s32.totalorder %s33, 0
    %p536 = por %p534, %p535
    %p537 = scmp.ne.s32.totalorder %s529, %s531
    %p538 = scmp.eq.s32.totalorder %s38, 1
    %p539 = por %p537, %p538
    %p540 = scmp.ne.s32.totalorder %s531, %s532
    %p541 = scmp.eq.s32.totalorder %s38, 0
    %p542 = por %p540, %p541
    %p543 = scmp.ne.s32.totalorder %s531, %s532
    %p544 = scmp.eq.s32.totalorder %s39, 1
    %p545 = por %p543, %p544
    %p547 = scmp.ne.s32.totalorder %s532, %s546
    %p548 = scmp.eq.s32.totalorder %s39, 0
    %p549 = por %p547, %p548
    %s551 = sadd.s32 %s550, 1
    %p554 = scmp.eq.s32.totalorder %s33, 1
    %p555 = scmp.ne.s32.totalorder %s550, %s552
    %p556 = scmp.eq.s32.totalorder %s33, 0
    %p557 = por %p555, %p556
    %p558 = scmp.ne.s32.totalorder %s550, %s552
    %p559 = scmp.eq.s32.totalorder %s38, 1
    %p560 = por %p558, %p559
    %p561 = scmp.ne.s32.totalorder %s552, %s553
    %p562 = scmp.eq.s32.totalorder %s38, 0
    %p563 = por %p561, %p562
    %p564 = scmp.ne.s32.totalorder %s552, %s553
    %p565 = scmp.eq.s32.totalorder %s39, 1
    %p566 = por %p564, %p565
    %p568 = scmp.ne.s32.totalorder %s553, %s567
    %p569 = scmp.eq.s32.totalorder %s39, 0
    %p570 = por %p568, %p569
    %s572 = sadd.s32 %s571, 1
    %p575 = scmp.eq.s32.totalorder %s33, 1
    %p576 = scmp.ne.s32.totalorder %s571, %s573
    %p577 = scmp.eq.s32.totalorder %s33, 0
    %p578 = por %p576, %p577
    %p579 = scmp.ne.s32.totalorder %s571, %s573
    %p580 = scmp.eq.s32.totalorder %s38, 1
    %p581 = por %p579, %p580
    %p582 = scmp.ne.s32.totalorder %s573, %s574
    %p583 = scmp.eq.s32.totalorder %s38, 0
    %p584 = por %p582, %p583
    %p585 = scmp.ne.s32.totalorder %s573, %s574
    %p586 = scmp.eq.s32.totalorder %s39, 1
    %p587 = por %p585, %p586
    %p589 = scmp.ne.s32.totalorder %s574, %s588
    %p590 = scmp.eq.s32.totalorder %s39, 0
    %p591 = por %p589, %p590
    %s593 = sadd.s32 %s592, 1
    %p596 = scmp.eq.s32.totalorder %s33, 1
    %p597 = scmp.ne.s32.totalorder %s592, %s594
    %p598 = scmp.eq.s32.totalorder %s33, 0
    %p599 = por %p597, %p598
    %p600 = scmp.ne.s32.totalorder %s592, %s594
    %p601 = scmp.eq.s32.totalorder %s38, 1
    %p602 = por %p600, %p601
    %p603 = scmp.ne.s32.totalorder %s594, %s595
    %p604 = scmp.eq.s32.totalorder %s38, 0
    %p605 = por %p603, %p604
    %p606 = scmp.ne.s32.totalorder %s594, %s595
    %p607 = scmp.eq.s32.totalorder %s39, 1
    %p608 = por %p606, %p607
    %p610 = scmp.ne.s32.totalorder %s595, %s609
    %p611 = scmp.eq.s32.totalorder %s39, 0
    %p612 = por %p610, %p611
    %s613 = ssub.s32 %s33, %s40
    %p614 = scmp.eq.s32.totalorder %s613, 0
    %s616 = sadd.s32 %s615, 1
    %s617 = scalar_select %p614, %s615, %s616
    %p620 = pneg %p614
    %p621 = scmp.eq.s32.totalorder %s33, 1
    %p622 = por %p620, %p621
    %p623 = scmp.ne.s32.totalorder %s615, %s618
    %p624 = scmp.eq.s32.totalorder %s33, 0
    %p625 = por %p623, %p624
    %p626 = scmp.ne.s32.totalorder %s615, %s618
    %p627 = scmp.eq.s32.totalorder %s38, 1
    %p628 = por %p626, %p627
    %p629 = scmp.ne.s32.totalorder %s618, %s619
    %p630 = scmp.eq.s32.totalorder %s38, 0
    %p631 = por %p629, %p630
    %p632 = scmp.ne.s32.totalorder %s618, %s619
    %p633 = scmp.eq.s32.totalorder %s39, 1
    %p634 = por %p632, %p633
    %p636 = scmp.ne.s32.totalorder %s619, %s635
    %p637 = scmp.eq.s32.totalorder %s39, 0
    %p638 = por %p636, %p637
    %p639 = scmp.le.s32.totalorder 1, %s33
    %p640 = scmp.lt.s32.totalorder %s33, 3
    %p641 = pnand %p639, %p640
    %p642 = pneg %p641
    // Predicated region
    $region9: #{tpu_custom_call.1} parent=5 // pred_check
      _
    $region10: #{tpu_custom_call.1} parent=5 // pred_check_branch
      %644 = sbr.rel (%p641) target = $region12
    $region11: #{tpu_custom_call.1} parent=5 // pred_region
      %s645 = ssub.s32 %s33, 1
      // Predicated region
      $region13: #{tpu_custom_call.1} parent=11 // pred_check
        %p646 = pneg %p80
      $region14: #{tpu_custom_call.1} parent=11 // pred_check_branch
        %648 = sbr.rel (%p646) target = $region16
      $region15: #{tpu_custom_call.1} parent=11 // pred_region
        _
      $region16: #{tpu_custom_call.1} parent=11 // pred_fallthru
        _
      // Predicated region
      $region17: #{tpu_custom_call.1} parent=11 // pred_check
        %p649 = pneg %p101
      $region18: #{tpu_custom_call.1} parent=11 // pred_check_branch
        %651 = sbr.rel (%p649) target = $region20
      $region19: #{tpu_custom_call.1} parent=11 // pred_region
        _
      $region20: #{tpu_custom_call.1} parent=11 // pred_fallthru
        _
      // Predicated region
      $region21: #{tpu_custom_call.1} parent=11 // pred_check
        %p652 = pneg %p122
      $region22: #{tpu_custom_call.1} parent=11 // pred_check_branch
        %654 = sbr.rel (%p652) target = $region24
      $region23: #{tpu_custom_call.1} parent=11 // pred_region
        _
      $region24: #{tpu_custom_call.1} parent=11 // pred_fallthru
        _
      // Predicated region
      $region25: #{tpu_custom_call.1} parent=11 // pred_check
        %p655 = pneg %p143
      $region26: #{tpu_custom_call.1} parent=11 // pred_check_branch
        %657 = sbr.rel (%p655) target = $region28
      $region27: #{tpu_custom_call.1} parent=11 // pred_region
        _
      $region28: #{tpu_custom_call.1} parent=11 // pred_fallthru
        _
      // Predicated region
      $region29: #{tpu_custom_call.1} parent=11 // pred_check
        %p658 = pneg %p164
      $region30: #{tpu_custom_call.1} parent=11 // pred_check_branch
        %660 = sbr.rel (%p658) target = $region32
      $region31: #{tpu_custom_call.1} parent=11 // pred_region
        _
      $region32: #{tpu_custom_call.1} parent=11 // pred_fallthru
        _
      // Predicated region
      $region33: #{tpu_custom_call.1} parent=11 // pred_check
        %p661 = pneg %p185
      $region34: #{tpu_custom_call.1} parent=11 // pred_check_branch
        %663 = sbr.rel (%p661) target = $region36
      $region35: #{tpu_custom_call.1} parent=11 // pred_region
        _
      $region36: #{tpu_custom_call.1} parent=11 // pred_fallthru
        _
      // Predicated region
      $region37: #{tpu_custom_call.1} parent=11 // pred_check
        %p664 = pneg %p206
      $region38: #{tpu_custom_call.1} parent=11 // pred_check_branch
        %666 = sbr.rel (%p664) target = $region40
      $region39: #{tpu_custom_call.1} parent=11 // pred_region
        _
      $region40: #{tpu_custom_call.1} parent=11 // pred_fallthru
        _
      // Predicated region
      $region41: #{tpu_custom_call.1} parent=11 // pred_check
        %p667 = pneg %p227
      $region42: #{tpu_custom_call.1} parent=11 // pred_check_branch
        %669 = sbr.rel (%p667) target = $region44
      $region43: #{tpu_custom_call.1} parent=11 // pred_region
        _
      $region44: #{tpu_custom_call.1} parent=11 // pred_fallthru
        _
      // Predicated region
      $region45: #{tpu_custom_call.1} parent=11 // pred_check
        %p670 = pneg %p248
      $region46: #{tpu_custom_call.1} parent=11 // pred_check_branch
        %672 = sbr.rel (%p670) target = $region48
      $region47: #{tpu_custom_call.1} parent=11 // pred_region
        _
      $region48: #{tpu_custom_call.1} parent=11 // pred_fallthru
        _
      // Predicated region
      $region49: #{tpu_custom_call.1} parent=11 // pred_check
        %p673 = pneg %p269
      $region50: #{tpu_custom_call.1} parent=11 // pred_check_branch
        %675 = sbr.rel (%p673) target = $region52
      $region51: #{tpu_custom_call.1} parent=11 // pred_region
        _
      $region52: #{tpu_custom_call.1} parent=11 // pred_fallthru
        _
      // Predicated region
      $region53: #{tpu_custom_call.1} parent=11 // pred_check
        %p676 = pneg %p290
      $region54: #{tpu_custom_call.1} parent=11 // pred_check_branch
        %678 = sbr.rel (%p676) target = $region56
      $region55: #{tpu_custom_call.1} parent=11 // pred_region
        _
      $region56: #{tpu_custom_call.1} parent=11 // pred_fallthru
        _
      // Predicated region
      $region57: #{tpu_custom_call.1} parent=11 // pred_check
        %p679 = pneg %p311
      $region58: #{tpu_custom_call.1} parent=11 // pred_check_branch
        %681 = sbr.rel (%p679) target = $region60
      $region59: #{tpu_custom_call.1} parent=11 // pred_region
        _
      $region60: #{tpu_custom_call.1} parent=11 // pred_fallthru
        _
      // Predicated region
      $region61: #{tpu_custom_call.1} parent=11 // pred_check
        %p682 = pneg %p332
      $region62: #{tpu_custom_call.1} parent=11 // pred_check_branch
        %684 = sbr.rel (%p682) target = $region64
      $region63: #{tpu_custom_call.1} parent=11 // pred_region
        _
      $region64: #{tpu_custom_call.1} parent=11 // pred_fallthru
        _
      // Predicated region
      $region65: #{tpu_custom_call.1} parent=11 // pred_check
        %p685 = pneg %p353
      $region66: #{tpu_custom_call.1} parent=11 // pred_check_branch
        %687 = sbr.rel (%p685) target = $region68
      $region67: #{tpu_custom_call.1} parent=11 // pred_region
        _
      $region68: #{tpu_custom_call.1} parent=11 // pred_fallthru
        _
      // Predicated region
      $region69: #{tpu_custom_call.1} parent=11 // pred_check
        %p688 = pneg %p374
      $region70: #{tpu_custom_call.1} parent=11 // pred_check_branch
        %690 = sbr.rel (%p688) target = $region72
      $region71: #{tpu_custom_call.1} parent=11 // pred_region
        _
      $region72: #{tpu_custom_call.1} parent=11 // pred_fallthru
        _
      // Predicated region
      $region73: #{tpu_custom_call.1} parent=11 // pred_check
        %p691 = pneg %p395
      $region74: #{tpu_custom_call.1} parent=11 // pred_check_branch
        %693 = sbr.rel (%p691) target = $region76
      $region75: #{tpu_custom_call.1} parent=11 // pred_region
        _
      $region76: #{tpu_custom_call.1} parent=11 // pred_fallthru
        _
      // Predicated region
      $region77: #{tpu_custom_call.1} parent=11 // pred_check
        %p694 = pneg %p416
      $region78: #{tpu_custom_call.1} parent=11 // pred_check_branch
        %696 = sbr.rel (%p694) target = $region80
      $region79: #{tpu_custom_call.1} parent=11 // pred_region
        _
      $region80: #{tpu_custom_call.1} parent=11 // pred_fallthru
        _
      // Predicated region
      $region81: #{tpu_custom_call.1} parent=11 // pred_check
        %p697 = pneg %p437
      $region82: #{tpu_custom_call.1} parent=11 // pred_check_branch
        %699 = sbr.rel (%p697) target = $region84
      $region83: #{tpu_custom_call.1} parent=11 // pred_region
        _
      $region84: #{tpu_custom_call.1} parent=11 // pred_fallthru
        _
      // Predicated region
      $region85: #{tpu_custom_call.1} parent=11 // pred_check
        %p700 = pneg %p458
      $region86: #{tpu_custom_call.1} parent=11 // pred_check_branch
        %702 = sbr.rel (%p700) target = $region88
      $region87: #{tpu_custom_call.1} parent=11 // pred_region
        _
      $region88: #{tpu_custom_call.1} parent=11 // pred_fallthru
        _
      // Predicated region
      $region89: #{tpu_custom_call.1} parent=11 // pred_check
        %p703 = pneg %p479
      $region90: #{tpu_custom_call.1} parent=11 // pred_check_branch
        %705 = sbr.rel (%p703) target = $region92
      $region91: #{tpu_custom_call.1} parent=11 // pred_region
        _
      $region92: #{tpu_custom_call.1} parent=11 // pred_fallthru
        _
      // Predicated region
      $region93: #{tpu_custom_call.1} parent=11 // pred_check
        %p706 = pneg %p500
      $region94: #{tpu_custom_call.1} parent=11 // pred_check_branch
        %708 = sbr.rel (%p706) target = $region96
      $region95: #{tpu_custom_call.1} parent=11 // pred_region
        _
      $region96: #{tpu_custom_call.1} parent=11 // pred_fallthru
        _
      // Predicated region
      $region97: #{tpu_custom_call.1} parent=11 // pred_check
        %p709 = pneg %p521
      $region98: #{tpu_custom_call.1} parent=11 // pred_check_branch
        %711 = sbr.rel (%p709) target = $region100
      $region99: #{tpu_custom_call.1} parent=11 // pred_region
        _
      $region100: #{tpu_custom_call.1} parent=11 // pred_fallthru
        _
      // Predicated region
      $region101: #{tpu_custom_call.1} parent=11 // pred_check
        %p712 = pneg %p542
      $region102: #{tpu_custom_call.1} parent=11 // pred_check_branch
        %714 = sbr.rel (%p712) target = $region104
      $region103: #{tpu_custom_call.1} parent=11 // pred_region
        _
      $region104: #{tpu_custom_call.1} parent=11 // pred_fallthru
        _
      // Predicated region
      $region105: #{tpu_custom_call.1} parent=11 // pred_check
        %p715 = pneg %p563
      $region106: #{tpu_custom_call.1} parent=11 // pred_check_branch
        %717 = sbr.rel (%p715) target = $region108
      $region107: #{tpu_custom_call.1} parent=11 // pred_region
        _
      $region108: #{tpu_custom_call.1} parent=11 // pred_fallthru
        _
      // Predicated region
      $region109: #{tpu_custom_call.1} parent=11 // pred_check
        %p718 = pneg %p584
      $region110: #{tpu_custom_call.1} parent=11 // pred_check_branch
        %720 = sbr.rel (%p718) target = $region112
      $region111: #{tpu_custom_call.1} parent=11 // pred_region
        _
      $region112: #{tpu_custom_call.1} parent=11 // pred_fallthru
        _
      // Predicated region
      $region113: #{tpu_custom_call.1} parent=11 // pred_check
        %p721 = pneg %p605
      $region114: #{tpu_custom_call.1} parent=11 // pred_check_branch
        %723 = sbr.rel (%p721) target = $region116
      $region115: #{tpu_custom_call.1} parent=11 // pred_region
        _
      $region116: #{tpu_custom_call.1} parent=11 // pred_fallthru
        _
    $region12: #{tpu_custom_call.1} parent=5 // pred_fallthru
      _
    %p724 = scmp.lt.s32.totalorder %s33, 2
    // Predicated region
    $region117: #{tpu_custom_call.1} parent=5 // pred_check
      %p725 = pneg %p724
    $region118: #{tpu_custom_call.1} parent=5 // pred_check_branch
      %727 = sbr.rel (%p725) target = $region120
    $region119: #{tpu_custom_call.1} parent=5 // pred_region
      // Predicated region
      $region121: #{tpu_custom_call.1} parent=119 // pred_check
        %p728 = pneg %p53
      $region122: #{tpu_custom_call.1} parent=119 // pred_check_branch
        %730 = sbr.rel (%p728) target = $region124
      $region123: #{tpu_custom_call.1} parent=119 // pred_region
        %p731 = scmp.lt.s32.totalorder %s33, 1
        %s732 = scalar_select %p731, %s33, 1
        %s733 = smul.addr %s732, 8
        %s734 = smul.addr %s733, 8
        %s735 = scalar_lea.vmem %s0, %s734
      $region124: #{tpu_custom_call.1} parent=119 // pred_fallthru
        _
    $region120: #{tpu_custom_call.1} parent=5 // pred_fallthru
      _
    %p736 = scmp.le.s32.totalorder 1, %s33
    %p737 = scmp.lt.s32.totalorder %s33, 3
    %p738 = pnand %p736, %p737
    %p739 = pneg %p738
    // Predicated region
    $region125: #{tpu_custom_call.1} parent=5 // pred_check
      _
    $region126: #{tpu_custom_call.1} parent=5 // pred_check_branch
      %741 = sbr.rel (%p738) target = $region128
    $region127: #{tpu_custom_call.1} parent=5 // pred_region
      %s742 = ssub.s32 %s33, 1
      %p743 = scmp.lt.s32.totalorder %s38, 1
      %s744 = scalar_select %p743, %s38, 1
      %s745 = smul.addr %s744, 8
      %s746 = smul.addr %s745, 8
      %s747 = scalar_lea.vmem %s0, %s746
      %p748 = pneg %p59
      %p749 = pneg %p56
      %p750 = pneg %p80
      %p751 = pneg %p77
      %p752 = pneg %p101
      %p753 = pneg %p98
      %p754 = pneg %p122
      %p755 = pneg %p119
      %p756 = pneg %p143
      %p757 = pneg %p140
      %p758 = pneg %p164
      %p759 = pneg %p161
      %p760 = pneg %p185
      %p761 = pneg %p182
      %p762 = pneg %p206
      %p763 = pneg %p203
      %p764 = pneg %p227
      %p765 = pneg %p224
      %p766 = pneg %p248
      %p767 = pneg %p245
      %p768 = pneg %p269
      %p769 = pneg %p266
      %p770 = pneg %p290
      %p771 = pneg %p287
      %p772 = pneg %p311
      %p773 = pneg %p308
      %p774 = pneg %p332
      %p775 = pneg %p329
      %p776 = pneg %p353
      %p777 = pneg %p350
      %p778 = pneg %p374
      %p779 = pneg %p371
      %p780 = pneg %p395
      %p781 = pneg %p392
      %p782 = pneg %p416
      %p783 = pneg %p413
      %p784 = pneg %p437
      %p785 = pneg %p434
      %p786 = pneg %p458
      %p787 = pneg %p455
      %p788 = pneg %p479
      %p789 = pneg %p476
      %p790 = pneg %p500
      %p791 = pneg %p497
      %p792 = pneg %p521
      %p793 = pneg %p518
      %p794 = pneg %p542
      %p795 = pneg %p539
      %p796 = pneg %p563
      %p797 = pneg %p560
      %p798 = pneg %p584
      %p799 = pneg %p581
      %p800 = pneg %p605
      %p801 = pneg %p602
      %p802 = pneg %p631
      %p803 = pneg %p628
      %p804 = scmp.lt.s32.totalorder %s38, 1
      %s805 = scalar_select %p804, %s38, 1
      %s806 = smul.addr %s805, 8
      %s807 = smul.addr %s806, 8
      %s808 = scalar_lea.vmem %s27, %s807
      %p809 = scmp.lt.s32.totalorder %s38, 1
      %s810 = scalar_select %p809, %s38, 1
      %s811 = smul.addr %s810, 8
      %s812 = smul.addr %s811, 8
      %s813 = scalar_lea.vmem %s0, %s812
      %p814 = scmp.lt.s32.totalorder %s38, 1
      %s815 = scalar_select %p814, %s38, 1
      %s816 = smul.addr %s815, 8
      %s817 = smul.addr %s816, 8
      %s818 = scalar_lea.vmem %s27, %s817
      %v820 = vld [vmem:[%s813] sm:$0xff]
      %v821 = vld [vmem:[%s813 + $0x8] sm:$0xff]
      %v822 = vld [vmem:[%s813 + $0x10] sm:$0xff]
      %v823 = vld [vmem:[%s813 + $0x18] sm:$0xff]
      %v824 = vld [vmem:[%s813 + $0x20] sm:$0xff]
      %v825 = vld [vmem:[%s813 + $0x28] sm:$0xff]
      %v826 = vld [vmem:[%s813 + $0x30] sm:$0xff]
      %v827 = vld [vmem:[%s813 + $0x38] sm:$0xff]
      %v828 = vld [vmem:[%s1] sm:$0x1]
      %v829 = vld [vmem:[%s2] sm:$0x1]
      %vm830 = vcmask 261120
      %v831 = vsel %vm830, %v820, 0.0
      %832 = vadd.xlane.f32.xlu0 %v831
      %v833 = vpop.xlane.xlu0 %832
      %v834 = vsel %vm830, %v821, 0.0
      %835 = vadd.xlane.f32.xlu0 %v834
      %v836 = vpop.xlane.xlu0 %835
      %v837 = vsel %vm830, %v822, 0.0
      %838 = vadd.xlane.f32.xlu0 %v837
      %v839 = vpop.xlane.xlu0 %838
      %v840 = vsel %vm830, %v823, 0.0
      %841 = vadd.xlane.f32.xlu0 %v840
      %v842 = vpop.xlane.xlu0 %841
      %v843 = vsel %vm830, %v824, 0.0
      %844 = vadd.xlane.f32.xlu0 %v843
      %v845 = vpop.xlane.xlu0 %844
      %v846 = vsel %vm830, %v825, 0.0
      %847 = vadd.xlane.f32.xlu0 %v846
      %v848 = vpop.xlane.xlu0 %847
      %v849 = vsel %vm830, %v826, 0.0
      %850 = vadd.xlane.f32.xlu0 %v849
      %v851 = vpop.xlane.xlu0 %850
      %v852 = vsel %vm830, %v827, 0.0
      %853 = vadd.xlane.f32.xlu0 %v852
      %v854 = vpop.xlane.xlu0 %853
      %v855 = vrcp.pop 32.0
      %v856 = vmul.f32 %v833, %v855
      %v857 = vmul.f32 %v836, %v855
      %v858 = vmul.f32 %v839, %v855
      %v859 = vmul.f32 %v842, %v855
      %v860 = vmul.f32 %v845, %v855
      %v861 = vmul.f32 %v848, %v855
      %v862 = vmul.f32 %v851, %v855
      %v863 = vmul.f32 %v854, %v855
      %v864 = vsub.f32 %v820, %v856
      %v865 = vsub.f32 %v821, %v857
      %v866 = vsub.f32 %v822, %v858
      %v867 = vsub.f32 %v823, %v859
      %v868 = vsub.f32 %v824, %v860
      %v869 = vsub.f32 %v825, %v861
      %v870 = vsub.f32 %v826, %v862
      %v871 = vsub.f32 %v827, %v863
      %v872 = vmul.f32 %v864, %v864
      %v873 = vmul.f32 %v865, %v865
      %v874 = vmul.f32 %v866, %v866
      %v875 = vmul.f32 %v867, %v867
      %v876 = vmul.f32 %v868, %v868
      %v877 = vmul.f32 %v869, %v869
      %v878 = vmul.f32 %v870, %v870
      %v879 = vmul.f32 %v871, %v871
      %v880 = vsel %vm830, %v872, 0.0
      %881 = vadd.xlane.f32.xlu0 %v880
      %v882 = vpop.xlane.xlu0 %881
      %v883 = vsel %vm830, %v873, 0.0
      %884 = vadd.xlane.f32.xlu0 %v883
      %v885 = vpop.xlane.xlu0 %884
      %v886 = vsel %vm830, %v874, 0.0
      %887 = vadd.xlane.f32.xlu0 %v886
      %v888 = vpop.xlane.xlu0 %887
      %v889 = vsel %vm830, %v875, 0.0
      %890 = vadd.xlane.f32.xlu0 %v889
      %v891 = vpop.xlane.xlu0 %890
      %v892 = vsel %vm830, %v876, 0.0
      %893 = vadd.xlane.f32.xlu0 %v892
      %v894 = vpop.xlane.xlu0 %893
      %v895 = vsel %vm830, %v877, 0.0
      %896 = vadd.xlane.f32.xlu0 %v895
      %v897 = vpop.xlane.xlu0 %896
      %v898 = vsel %vm830, %v878, 0.0
      %899 = vadd.xlane.f32.xlu0 %v898
      %v900 = vpop.xlane.xlu0 %899
      %v901 = vsel %vm830, %v879, 0.0
      %902 = vadd.xlane.f32.xlu0 %v901
      %v903 = vpop.xlane.xlu0 %902
      %v904 = vmul.f32 %v882, %v855
      %v905 = vmul.f32 %v885, %v855
      %v906 = vmul.f32 %v888, %v855
      %v907 = vmul.f32 %v891, %v855
      %v908 = vmul.f32 %v894, %v855
      %v909 = vmul.f32 %v897, %v855
      %v910 = vmul.f32 %v900, %v855
      %v911 = vmul.f32 %v903, %v855
      %v912 = vadd.f32 %v904, 1e-05
      %v913 = vadd.f32 %v905, 1e-05
      %v914 = vadd.f32 %v906, 1e-05
      %v915 = vadd.f32 %v907, 1e-05
      %v916 = vadd.f32 %v908, 1e-05
      %v917 = vadd.f32 %v909, 1e-05
      %v918 = vadd.f32 %v910, 1e-05
      %v919 = vadd.f32 %v911, 1e-05
      %v920 = vrsqrt.pop %v912
      %v921 = vrsqrt.pop %v913
      %v922 = vrsqrt.pop %v914
      %v923 = vrsqrt.pop %v915
      %v924 = vrsqrt.pop %v916
      %v925 = vrsqrt.pop %v917
      %v926 = vrsqrt.pop %v918
      %v927 = vrsqrt.pop %v919
      %v928 = vmul.f32 %v864, %v920
      %v929 = vmul.f32 %v865, %v921
      %v930 = vmul.f32 %v866, %v922
      %v931 = vmul.f32 %v867, %v923
      %v932 = vmul.f32 %v868, %v924
      %v933 = vmul.f32 %v869, %v925
      %v934 = vmul.f32 %v870, %v926
      %v935 = vmul.f32 %v871, %v927
      %v937 = vlaneseq
      %v938 = vshrl.u32 %v937, 7
      %v939 = vsub.s32 0, %v938
      %v940 = vrot.slane %v828, %v939
      %v942 = vmul.f32 %v928, %v940
      %v943 = vmul.f32 %v929, %v940
      %v944 = vmul.f32 %v930, %v940
      %v945 = vmul.f32 %v931, %v940
      %v946 = vmul.f32 %v932, %v940
      %v947 = vmul.f32 %v933, %v940
      %v948 = vmul.f32 %v934, %v940
      %v949 = vmul.f32 %v935, %v940
      %v951 = vlaneseq
      %v952 = vshrl.u32 %v951, 7
      %v953 = vsub.s32 0, %v952
      %v954 = vrot.slane %v829, %v953
      %v956 = vadd.f32 %v942, %v954
      %v957 = vadd.f32 %v943, %v954
      %v958 = vadd.f32 %v944, %v954
      %v959 = vadd.f32 %v945, %v954
      %v960 = vadd.f32 %v946, %v954
      %v961 = vadd.f32 %v947, %v954
      %v962 = vadd.f32 %v948, %v954
      %v963 = vadd.f32 %v949, %v954
      %v964 = vpack.c.bf16 %v957, %v956
      %v965 = vpack.c.bf16 %v959, %v958
      %v966 = vpack.c.bf16 %v961, %v960
      %v967 = vpack.c.bf16 %v963, %v962
      %v968 = vld [vmem:[%s3] sm:$0xf]
      %v969 = vld [vmem:[%s3 + $0x4] sm:$0xf]
      %v970 = vld [vmem:[%s3 + $0x8] sm:$0xf]
      %v971 = vld [vmem:[%s3 + $0xc] sm:$0xf]
      %v972 = vld [vmem:[%s4] sm:$0x1]
      %v974 = vlaneseq
      %v975 = vshrl.u32 %v974, 7
      %v976 = vsub.s32 0, %v975
      %v977 = vrot.slane %v972, %v976
      %v983 = vunpack.c.l.b16 %v968
      %v984 = vunpack.c.l.b16 %v969
      %v985 = vunpack.c.l.b16 %v970
      %v986 = vunpack.c.l.b16 %v971
      %v987 = vpack.c.b16 %v984, %v983
      %v988 = vpack.c.b16 %v986, %v985
      %v992 = vsel %vm830, %v964, 0
      %v995 = vsel %vm830, %v965, 0
      %v998 = vsel %vm830, %v966, 0
      %v1001 = vsel %vm830, %v967, 0
      %1003 = vmatprep.subr.bf16.mxu0 0
      %1004 = vmatpush1.bf16.msra.mxu0 0
      %1005 = vmatprep.subr.bf16.mxu0 0
      %1006 = vmatpush1.bf16.msra.mxu0 0
      %1007 = vmatprep.subr.bf16.mxu0 0
      %1008 = vmatpush1.bf16.msra.mxu0 0
      %1009 = vmatprep.subr.bf16.mxu0 0
      %1010 = vmatpush1.bf16.msra.mxu0 0
      %1011 = vmatprep.subr.bf16.mxu0 0
      %1012 = vmatpush1.bf16.msra.mxu0 0
      %1013 = vmatprep.subr.bf16.mxu0 0
      %1014 = vmatpush1.bf16.msra.mxu0 0
      %1015 = vmatprep.subr.bf16.mxu0 0
      %1016 = vmatpush1.bf16.msra.mxu0 %v988
      %1017 = vmatprep.subr.bf16.mxu0 0
      %1018 = vmatpush1.bf16.msra.mxu0 %v987
      %1019 = vmatprep.subr.bf16.mxu0 0
      %1020 = vmatpush2.bf16.msra.mxu0 0
      %1021 = vmatprep.subr.bf16.mxu0 0
      %1022 = vmatpush2.bf16.msra.mxu0 0
      %1023 = vmatprep.subr.bf16.mxu0 0
      %1024 = vmatpush2.bf16.msra.mxu0 0
      %1025 = vmatprep.subr.bf16.mxu0 0
      %1026 = vmatpush2.bf16.msra.mxu0 0
      %1027 = vmatprep.subr.bf16.mxu0 0
      %1028 = vmatpush2.bf16.msra.mxu0 0
      %1029 = vmatprep.subr.bf16.mxu0 0
      %1030 = vmatpush2.bf16.msra.mxu0 0
      %1031 = vmatprep.subr.bf16.mxu0 0
      %1032 = vmatpush2.bf16.msra.mxu0 0
      %1033 = vmatprep.subr.bf16.mxu0 0
      %1034 = vmatpush2.bf16.msra.mxu0 0
      %1035 = vmatprep.mubr.bf16.mxu0 0
      %1036 = vmatmul.mubr.bf16.gmra.mxu0 %v992
      %v1037 = vpop.f32.mrf.mxu0
      %v1038 = vadd.f32 %v977, %v1037
      %v1039 = vpop.f32.mrf.mxu0
      %v1040 = vpop.f32.mrf.mxu0
      %v1041 = vadd.f32 %v977, %v1040
      %v1042 = vpop.f32.mrf.mxu0
      %1043 = vmatprep.mubr.bf16.mxu0 0
      %1044 = vmatmul.mubr.bf16.gmra.mxu0 %v995
      %v1045 = vpop.f32.mrf.mxu0
      %v1046 = vadd.f32 %v977, %v1045
      %v1047 = vpop.f32.mrf.mxu0
      %v1048 = vpop.f32.mrf.mxu0
      %v1049 = vadd.f32 %v977, %v1048
      %v1050 = vpop.f32.mrf.mxu0
      %1051 = vmatprep.mubr.bf16.mxu0 0
      %1052 = vmatmul.mubr.bf16.gmra.mxu0 %v998
      %v1053 = vpop.f32.mrf.mxu0
      %v1054 = vadd.f32 %v977, %v1053
      %v1055 = vpop.f32.mrf.mxu0
      %v1056 = vpop.f32.mrf.mxu0
      %v1057 = vadd.f32 %v977, %v1056
      %v1058 = vpop.f32.mrf.mxu0
      %1059 = vmatprep.mubr.bf16.mxu0 0
      %1060 = vmatmul.mubr.bf16.gmra.mxu0 %v1001
      %v1061 = vpop.f32.mrf.mxu0
      %v1062 = vadd.f32 %v977, %v1061
      %v1063 = vpop.f32.mrf.mxu0
      %v1064 = vpop.f32.mrf.mxu0
      %v1065 = vadd.f32 %v977, %v1064
      %v1066 = vpop.f32.mrf.mxu0
      %1067 = vdwg.mxu0
      %v1068 = vmul.f32 %v1038, %v1038
      %v1069 = vmul.f32 %v1041, %v1041
      %v1070 = vmul.f32 %v1046, %v1046
      %v1071 = vmul.f32 %v1049, %v1049
      %v1072 = vmul.f32 %v1054, %v1054
      %v1073 = vmul.f32 %v1057, %v1057
      %v1074 = vmul.f32 %v1062, %v1062
      %v1075 = vmul.f32 %v1065, %v1065
      %v1076 = vsel %vm830, %v1068, 0.0
      %v1077 = vsel %vm830, %v1069, 0.0
      %v1078 = vadd.f32 %v1076, %v1077
      %v1079 = vsel %vm830, %v1070, 0.0
      %v1080 = vadd.f32 %v1078, %v1079
      %v1081 = vsel %vm830, %v1071, 0.0
      %v1082 = vadd.f32 %v1080, %v1081
      %v1083 = vsel %vm830, %v1072, 0.0
      %v1084 = vadd.f32 %v1082, %v1083
      %v1085 = vsel %vm830, %v1073, 0.0
      %v1086 = vadd.f32 %v1084, %v1085
      %v1087 = vsel %vm830, %v1074, 0.0
      %v1088 = vadd.f32 %v1086, %v1087
      %v1089 = vsel %vm830, %v1075, 0.0
      %v1090 = vadd.f32 %v1088, %v1089
      %v1091 = vrot.slane %v1090, 4
      %v1092 = vadd.f32 %v1090, %v1091
      %v1093 = vrot.slane %v1092, 2
      %v1094 = vadd.f32 %v1092, %v1093
      %v1095 = vrot.slane %v1094, 1
      %v1096 = vadd.f32 %v1094, %v1095
      %v1097 = vrsqrt.pop %v1096
      %v1098 = vmul.f32 %v1096, %v1097
      %vm1099 = vcmp.eq.f32.partialorder %v1096, inf
      %v1100 = vsel %vm1099, %v1096, %v1098
      %vm1101 = vcmp.eq.f32.partialorder %v1096, 0.0
      %v1102 = vand.u32 %v1096, 2147483648
      %v1103 = vsel %vm1101, %v1102, %v1100
      %v1104 = vmax.f32 %v1103, 1e-12
      %v1105 = vrcp.pop %v1104
      %vm1106 = vcmask 523520
      %v1107 = vsel %vm1106, %v1068, 0.0
      %v1108 = vsel %vm1106, %v1069, 0.0
      %v1109 = vadd.f32 %v1107, %v1108
      %v1110 = vsel %vm1106, %v1070, 0.0
      %v1111 = vadd.f32 %v1109, %v1110
      %v1112 = vsel %vm1106, %v1071, 0.0
      %v1113 = vadd.f32 %v1111, %v1112
      %v1114 = vsel %vm1106, %v1072, 0.0
      %v1115 = vadd.f32 %v1113, %v1114
      %v1116 = vsel %vm1106, %v1073, 0.0
      %v1117 = vadd.f32 %v1115, %v1116
      %v1118 = vsel %vm1106, %v1074, 0.0
      %v1119 = vadd.f32 %v1117, %v1118
      %v1120 = vsel %vm1106, %v1075, 0.0
      %v1121 = vadd.f32 %v1119, %v1120
      %v1122 = vrot.slane %v1121, 4
      %v1123 = vadd.f32 %v1121, %v1122
      %v1124 = vrot.slane %v1123, 2
      %v1125 = vadd.f32 %v1123, %v1124
      %v1126 = vrot.slane %v1125, 1
      %v1127 = vadd.f32 %v1125, %v1126
      %v1128 = vrsqrt.pop %v1127
      %v1129 = vmul.f32 %v1127, %v1128
      %vm1130 = vcmp.eq.f32.partialorder %v1127, inf
      %v1131 = vsel %vm1130, %v1127, %v1129
      %vm1132 = vcmp.eq.f32.partialorder %v1127, 0.0
      %v1133 = vand.u32 %v1127, 2147483648
      %v1134 = vsel %vm1132, %v1133, %v1131
      %v1135 = vmax.f32 %v1134, 1e-12
      %v1136 = vrcp.pop %v1135
      %v1137 = vld [vmem:[%s5] sm:$0x1]
      %v1138 = vmul.f32 %v1105, %v1137
      %v1139 = vlaneseq
      %v1140 = vshrl.u32 %v1139, 7
      %v1141 = vsub.s32 0, %v1140
      %v1142 = vrot.slane %v1138, %v1141
      %v1143 = vmul.f32 %v1038, %v1142
      %v1144 = vmul.f32 %v1041, %v1142
      %v1145 = vmul.f32 %v1046, %v1142
      %v1146 = vmul.f32 %v1049, %v1142
      %v1147 = vmul.f32 %v1054, %v1142
      %v1148 = vmul.f32 %v1057, %v1142
      %v1149 = vmul.f32 %v1062, %v1142
      %v1150 = vmul.f32 %v1065, %v1142
      %v1151 = vmul.f32 %v1038, %v1136
      %v1152 = vmul.f32 %v1041, %v1136
      %v1153 = vmul.f32 %v1046, %v1136
      %v1154 = vmul.f32 %v1049, %v1136
      %v1155 = vmul.f32 %v1054, %v1136
      %v1156 = vmul.f32 %v1057, %v1136
      %v1157 = vmul.f32 %v1062, %v1136
      %v1158 = vmul.f32 %v1065, %v1136
      %v1159 = vpack.c.bf16 %v1144, %v1143
      %v1160 = vpack.c.bf16 %v1146, %v1145
      %v1161 = vpack.c.bf16 %v1148, %v1147
      %v1162 = vpack.c.bf16 %v1150, %v1149
      %v1163 = vpack.c.bf16 %v1152, %v1151
      %v1164 = vpack.c.bf16 %v1154, %v1153
      %v1165 = vpack.c.bf16 %v1156, %v1155
      %v1166 = vpack.c.bf16 %v1158, %v1157
      %v1167 = vld [vmem:[%s6] sm:$0xff]
      %v1168 = vld [vmem:[%s6 + $0x8] sm:$0xff]
      %v1169 = vld [vmem:[%s6 + $0x10] sm:$0xff]
      %v1170 = vld [vmem:[%s6 + $0x18] sm:$0xff]
      %1171 = vxpose.xlu0.c.b16.start [1/8] %v1159, 128
      %1172 = vxpose.xlu0.c.b16.cont [2/8] %v1160, 128
      %1173 = vxpose.xlu0.c.b16.cont [3/8] %v1161, 128
      %1174 = vxpose.xlu0.c.b16.cont [4/8] %v1162, 128
      %1175 = vxpose.xlu0.c.b16.cont [5/8] 0, 128
      %1176 = vxpose.xlu0.c.b16.cont [6/8] 0, 128
      %1177 = vxpose.xlu0.c.b16.cont [7/8] 0, 128
      %1178 = vxpose.xlu0.c.b16.end [8/8] 0, 128
      %v1179 = vpop.trf.xlu0
      %v1180 = vpop.trf.xlu0
      %v1181 = vpop.trf.xlu0
      %v1182 = vpop.trf.xlu0
      %v1183 = vpop.trf.xlu0
      %v1184 = vpop.trf.xlu0
      %v1185 = vpop.trf.xlu0
      %v1186 = vpop.trf.xlu0
      %1191 = vrot.lane.b32.xlu0 %v1163, 96
      %v1192 = vpop.permute.xlu0 %1191
      %1193 = vrot.lane.b32.xlu0 %v1164, 96
      %v1194 = vpop.permute.xlu0 %1193
      %1195 = vrot.lane.b32.xlu0 %v1165, 96
      %v1196 = vpop.permute.xlu0 %1195
      %1197 = vrot.lane.b32.xlu0 %v1166, 96
      %v1198 = vpop.permute.xlu0 %1197
      %vm1203 = vcmask 523264
      %v1205 = vsel %vm1203, %v1179, 0
      %v1208 = vsel %vm1203, %v1180, 0
      %1210 = vmatprep.subr.bf16.mxu0 0
      %1211 = vmatpush1.bf16.msra.mxu0 0
      %1212 = vmatprep.subr.bf16.mxu0 0
      %1213 = vmatpush1.bf16.msra.mxu0 0
      %1214 = vmatprep.subr.bf16.mxu0 0
      %1215 = vmatpush1.bf16.msra.mxu0 0
      %1216 = vmatprep.subr.bf16.mxu0 0
      %1217 = vmatpush1.bf16.msra.mxu0 0
      %1218 = vmatprep.subr.bf16.mxu0 0
      %1219 = vmatpush1.bf16.msra.mxu0 %v1198
      %1220 = vmatprep.subr.bf16.mxu0 0
      %1221 = vmatpush1.bf16.msra.mxu0 %v1196
      %1222 = vmatprep.subr.bf16.mxu0 0
      %1223 = vmatpush1.bf16.msra.mxu0 %v1194
      %1224 = vmatprep.subr.bf16.mxu0 0
      %1225 = vmatpush1.bf16.msra.mxu0 %v1192
      %1226 = vmatprep.subr.bf16.mxu0 0
      %1227 = vmatpush2.bf16.msra.mxu0 0
      %1228 = vmatprep.subr.bf16.mxu0 0
      %1229 = vmatpush2.bf16.msra.mxu0 0
      %1230 = vmatprep.subr.bf16.mxu0 0
      %1231 = vmatpush2.bf16.msra.mxu0 0
      %1232 = vmatprep.subr.bf16.mxu0 0
      %1233 = vmatpush2.bf16.msra.mxu0 0
      %1234 = vmatprep.subr.bf16.mxu0 0
      %1235 = vmatpush2.bf16.msra.mxu0 0
      %1236 = vmatprep.subr.bf16.mxu0 0
      %1237 = vmatpush2.bf16.msra.mxu0 0
      %1238 = vmatprep.subr.bf16.mxu0 0
      %1239 = vmatpush2.bf16.msra.mxu0 0
      %1240 = vmatprep.subr.bf16.mxu0 0
      %1241 = vmatpush2.bf16.msra.mxu0 0
      %1242 = vmatprep.mubr.bf16.mxu0 0
      %1243 = vmatmul.mubr.bf16.gmra.mxu0 %v1205
      %v1244 = vpop.f32.mrf.mxu0
      %v1245 = vadd.f32 %v1167, %v1244
      %v1246 = vpop.f32.mrf.mxu0
      %v1247 = vpop.f32.mrf.mxu0
      %v1248 = vadd.f32 %v1168, %v1247
      %v1249 = vpop.f32.mrf.mxu0
      %1250 = vmatprep.mubr.bf16.mxu0 0
      %1251 = vmatmul.mubr.bf16.gmra.mxu0 %v1208
      %v1252 = vpop.f32.mrf.mxu0
      %v1253 = vadd.f32 %v1169, %v1252
      %v1254 = vpop.f32.mrf.mxu0
      %v1255 = vpop.f32.mrf.mxu0
      %v1256 = vadd.f32 %v1170, %v1255
      %v1257 = vpop.f32.mrf.mxu0
      %1258 = vdwg.mxu0
      %v1259 = vsel %vm830, %v1245, -inf
      %1260 = vmax.xlane.f32.xlu0 %v1259
      %v1261 = vpop.xlane.xlu0 %1260
      %v1262 = vsel %vm830, %v1248, -inf
      %1263 = vmax.xlane.f32.xlu0 %v1262
      %v1264 = vpop.xlane.xlu0 %1263
      %v1265 = vsel %vm830, %v1253, -inf
      %1266 = vmax.xlane.f32.xlu0 %v1265
      %v1267 = vpop.xlane.xlu0 %1266
      %v1268 = vsel %vm830, %v1256, -inf
      %1269 = vmax.xlane.f32.xlu0 %v1268
      %v1270 = vpop.xlane.xlu0 %1269
      %v1271 = vsub.f32 %v1245, %v1261
      %v1272 = vsub.f32 %v1248, %v1264
      %v1273 = vsub.f32 %v1253, %v1267
      %v1274 = vsub.f32 %v1256, %v1270
      %v1275 = vmul.f32 %v1271, 1.442695
      %v1276 = vpow.pop %v1275
      %v1277 = vmul.f32 %v1272, 1.442695
      %v1278 = vpow.pop %v1277
      %v1279 = vmul.f32 %v1273, 1.442695
      %v1280 = vpow.pop %v1279
      %v1281 = vmul.f32 %v1274, 1.442695
      %v1282 = vpow.pop %v1281
      %v1283 = vsel %vm830, %v1276, 0.0
      %1284 = vadd.xlane.f32.xlu0 %v1283
      %v1285 = vpop.xlane.xlu0 %1284
      %v1286 = vsel %vm830, %v1278, 0.0
      %1287 = vadd.xlane.f32.xlu0 %v1286
      %v1288 = vpop.xlane.xlu0 %1287
      %v1289 = vsel %vm830, %v1280, 0.0
      %1290 = vadd.xlane.f32.xlu0 %v1289
      %v1291 = vpop.xlane.xlu0 %1290
      %v1292 = vsel %vm830, %v1282, 0.0
      %1293 = vadd.xlane.f32.xlu0 %v1292
      %v1294 = vpop.xlane.xlu0 %1293
      %v1295 = vrcp.pop %v1285
      %v1296 = vrcp.pop %v1288
      %v1297 = vrcp.pop %v1291
      %v1298 = vrcp.pop %v1294
      %v1299 = vmul.f32 %v1276, %v1295
      %v1300 = vmul.f32 %v1278, %v1296
      %v1301 = vmul.f32 %v1280, %v1297
      %v1302 = vmul.f32 %v1282, %v1298
      %v1303 = vpack.c.bf16 %v1041, %v1038
      %v1304 = vpack.c.bf16 %v1049, %v1046
      %v1305 = vpack.c.bf16 %v1057, %v1054
      %v1306 = vpack.c.bf16 %v1065, %v1062
      %v1307 = vpack.c.bf16 %v1300, %v1299
      %v1308 = vpack.c.bf16 %v1302, %v1301
      %1313 = vrot.lane.b32.xlu0 %v1303, 64
      %v1314 = vpop.permute.xlu0 %1313
      %1315 = vrot.lane.b32.xlu0 %v1304, 64
      %v1316 = vpop.permute.xlu0 %1315
      %1317 = vrot.lane.b32.xlu0 %v1305, 64
      %v1318 = vpop.permute.xlu0 %1317
      %1319 = vrot.lane.b32.xlu0 %v1306, 64
      %v1320 = vpop.permute.xlu0 %1319
      %v1322 = vsel %vm830, %v1314, 0
      %v1325 = vsel %vm830, %v1316, 0
      %v1328 = vsel %vm830, %v1318, 0
      %v1331 = vsel %vm830, %v1320, 0
      %v1334 = vsel %vm830, %v1307, 0
      %v1337 = vsel %vm830, %v1308, 0
      %1339 = vmatprep.subr.bf16.mxu0 0
      %1340 = vmatpush1.bf16.xpose.msra.mxu0 0
      %1341 = vmatprep.subr.bf16.mxu0 0
      %1342 = vmatpush1.bf16.xpose.msra.mxu0 0
      %1343 = vmatprep.subr.bf16.mxu0 0
      %1344 = vmatpush1.bf16.xpose.msra.mxu0 0
      %1345 = vmatprep.subr.bf16.mxu0 0
      %1346 = vmatpush1.bf16.xpose.msra.mxu0 0
      %1347 = vmatprep.subr.bf16.mxu0 0
      %1348 = vmatpush1.bf16.xpose.msra.mxu0 0
      %1349 = vmatprep.subr.bf16.mxu0 0
      %1350 = vmatpush1.bf16.xpose.msra.mxu0 0
      %1351 = vmatprep.subr.bf16.mxu0 0
      %1352 = vmatpush1.bf16.xpose.msra.mxu0 %v1337
      %1353 = vmatprep.subr.bf16.mxu0 0
      %1354 = vmatpush1.bf16.xpose.msra.mxu0 %v1334
      %1355 = vmatprep.subr.bf16.mxu0 0
      %1356 = vmatpush2.bf16.xpose.msra.mxu0 0
      %1357 = vmatprep.subr.bf16.mxu0 0
      %1358 = vmatpush2.bf16.xpose.msra.mxu0 0
      %1359 = vmatprep.subr.bf16.mxu0 0
      %1360 = vmatpush2.bf16.xpose.msra.mxu0 0
      %1361 = vmatprep.subr.bf16.mxu0 0
      %1362 = vmatpush2.bf16.xpose.msra.mxu0 0
      %1363 = vmatprep.subr.bf16.mxu0 0
      %1364 = vmatpush2.bf16.xpose.msra.mxu0 0
      %1365 = vmatprep.subr.bf16.mxu0 0
      %1366 = vmatpush2.bf16.xpose.msra.mxu0 0
      %1367 = vmatprep.subr.bf16.mxu0 0
      %1368 = vmatpush2.bf16.xpose.msra.mxu0 0
      %1369 = vmatprep.subr.bf16.mxu0 0
      %1370 = vmatpush2.bf16.xpose.msra.mxu0 0
      %1371 = vmatprep.mubr.bf16.mxu0 0
      %1372 = vmatmul.mubr.bf16.gmra.mxu0 %v1322
      %v1373 = vpop.f32.mrf.mxu0
      %v1374 = vadd.f32 0.0, %v1373
      %v1375 = vpop.f32.mrf.mxu0
      %v1376 = vpop.f32.mrf.mxu0
      %v1377 = vadd.f32 0.0, %v1376
      %v1378 = vpop.f32.mrf.mxu0
      %1379 = vmatprep.mubr.bf16.mxu0 0
      %1380 = vmatmul.mubr.bf16.gmra.mxu0 %v1325
      %v1381 = vpop.f32.mrf.mxu0
      %v1382 = vadd.f32 0.0, %v1381
      %v1383 = vpop.f32.mrf.mxu0
      %v1384 = vpop.f32.mrf.mxu0
      %v1385 = vadd.f32 0.0, %v1384
      %v1386 = vpop.f32.mrf.mxu0
      %1387 = vmatprep.mubr.bf16.mxu0 0
      %1388 = vmatmul.mubr.bf16.gmra.mxu0 %v1328
      %v1389 = vpop.f32.mrf.mxu0
      %v1390 = vadd.f32 0.0, %v1389
      %v1391 = vpop.f32.mrf.mxu0
      %v1392 = vpop.f32.mrf.mxu0
      %v1393 = vadd.f32 0.0, %v1392
      %v1394 = vpop.f32.mrf.mxu0
      %1395 = vmatprep.mubr.bf16.mxu0 0
      %1396 = vmatmul.mubr.bf16.gmra.mxu0 %v1331
      %v1397 = vpop.f32.mrf.mxu0
      %v1398 = vadd.f32 0.0, %v1397
      %v1399 = vpop.f32.mrf.mxu0
      %v1400 = vpop.f32.mrf.mxu0
      %v1401 = vadd.f32 0.0, %v1400
      %v1402 = vpop.f32.mrf.mxu0
      %1403 = vdwg.mxu0
      %v1404 = vpack.c.bf16 %v1377, %v1374
      %v1405 = vpack.c.bf16 %v1385, %v1382
      %v1406 = vpack.c.bf16 %v1393, %v1390
      %v1407 = vpack.c.bf16 %v1401, %v1398
      %v1408 = vld [vmem:[%s7] sm:$0xf]
      %v1409 = vld [vmem:[%s7 + $0x4] sm:$0xf]
      %v1410 = vld [vmem:[%s7 + $0x8] sm:$0xf]
      %v1411 = vld [vmem:[%s7 + $0xc] sm:$0xf]
      %v1412 = vld [vmem:[%s8] sm:$0x1]
      %v1414 = vlaneseq
      %v1415 = vshrl.u32 %v1414, 7
      %v1416 = vsub.s32 0, %v1415
      %v1417 = vrot.slane %v1412, %v1416
      %v1423 = vunpack.c.l.b16 %v1408
      %v1424 = vunpack.c.l.b16 %v1409
      %v1425 = vunpack.c.l.b16 %v1410
      %v1426 = vunpack.c.l.b16 %v1411
      %v1427 = vpack.c.b16 %v1424, %v1423
      %v1428 = vpack.c.b16 %v1426, %v1425
      %v1432 = vsel %vm830, %v1404, 0
      %v1435 = vsel %vm830, %v1405, 0
      %v1438 = vsel %vm830, %v1406, 0
      %v1441 = vsel %vm830, %v1407, 0
      %1443 = vmatprep.subr.bf16.mxu0 0
      %1444 = vmatpush1.bf16.msra.mxu0 0
      %1445 = vmatprep.subr.bf16.mxu0 0
      %1446 = vmatpush1.bf16.msra.mxu0 0
      %1447 = vmatprep.subr.bf16.mxu0 0
      %1448 = vmatpush1.bf16.msra.mxu0 0
      %1449 = vmatprep.subr.bf16.mxu0 0
      %1450 = vmatpush1.bf16.msra.mxu0 0
      %1451 = vmatprep.subr.bf16.mxu0 0
      %1452 = vmatpush1.bf16.msra.mxu0 0
      %1453 = vmatprep.subr.bf16.mxu0 0
      %1454 = vmatpush1.bf16.msra.mxu0 0
      %1455 = vmatprep.subr.bf16.mxu0 0
      %1456 = vmatpush1.bf16.msra.mxu0 %v1428
      %1457 = vmatprep.subr.bf16.mxu0 0
      %1458 = vmatpush1.bf16.msra.mxu0 %v1427
      %1459 = vmatprep.subr.bf16.mxu0 0
      %1460 = vmatpush2.bf16.msra.mxu0 0
      %1461 = vmatprep.subr.bf16.mxu0 0
      %1462 = vmatpush2.bf16.msra.mxu0 0
      %1463 = vmatprep.subr.bf16.mxu0 0
      %1464 = vmatpush2.bf16.msra.mxu0 0
      %1465 = vmatprep.subr.bf16.mxu0 0
      %1466 = vmatpush2.bf16.msra.mxu0 0
      %1467 = vmatprep.subr.bf16.mxu0 0
      %1468 = vmatpush2.bf16.msra.mxu0 0
      %1469 = vmatprep.subr.bf16.mxu0 0
      %1470 = vmatpush2.bf16.msra.mxu0 0
      %1471 = vmatprep.subr.bf16.mxu0 0
      %1472 = vmatpush2.bf16.msra.mxu0 0
      %1473 = vmatprep.subr.bf16.mxu0 0
      %1474 = vmatpush2.bf16.msra.mxu0 0
      %1475 = vmatprep.mubr.bf16.mxu0 0
      %1476 = vmatmul.mubr.bf16.gmra.mxu0 %v1432
      %v1477 = vpop.f32.mrf.mxu0
      %v1478 = vadd.f32 %v1417, %v1477
      %v1479 = vpop.f32.mrf.mxu0
      %v1480 = vpop.f32.mrf.mxu0
      %v1481 = vadd.f32 %v1417, %v1480
      %v1482 = vpop.f32.mrf.mxu0
      %1483 = vmatprep.mubr.bf16.mxu0 0
      %1484 = vmatmul.mubr.bf16.gmra.mxu0 %v1435
      %v1485 = vpop.f32.mrf.mxu0
      %v1486 = vadd.f32 %v1417, %v1485
      %v1487 = vpop.f32.mrf.mxu0
      %v1488 = vpop.f32.mrf.mxu0
      %v1489 = vadd.f32 %v1417, %v1488
      %v1490 = vpop.f32.mrf.mxu0
      %1491 = vmatprep.mubr.bf16.mxu0 0
      %1492 = vmatmul.mubr.bf16.gmra.mxu0 %v1438
      %v1493 = vpop.f32.mrf.mxu0
      %v1494 = vadd.f32 %v1417, %v1493
      %v1495 = vpop.f32.mrf.mxu0
      %v1496 = vpop.f32.mrf.mxu0
      %v1497 = vadd.f32 %v1417, %v1496
      %v1498 = vpop.f32.mrf.mxu0
      %1499 = vmatprep.mubr.bf16.mxu0 0
      %1500 = vmatmul.mubr.bf16.gmra.mxu0 %v1441
      %v1501 = vpop.f32.mrf.mxu0
      %v1502 = vadd.f32 %v1417, %v1501
      %v1503 = vpop.f32.mrf.mxu0
      %v1504 = vpop.f32.mrf.mxu0
      %v1505 = vadd.f32 %v1417, %v1504
      %v1506 = vpop.f32.mrf.mxu0
      %1507 = vdwg.mxu0
      %v1508 = vld [vmem:[%s9] sm:$0x1]
      %v1510 = vlaneseq
      %v1511 = vshrl.u32 %v1510, 7
      %v1512 = vsub.s32 0, %v1511
      %v1513 = vrot.slane %v1508, %v1512
      %v1515 = vmul.f32 %v1513, %v1478
      %v1516 = vmul.f32 %v1513, %v1481
      %v1517 = vmul.f32 %v1513, %v1486
      %v1518 = vmul.f32 %v1513, %v1489
      %v1519 = vmul.f32 %v1513, %v1494
      %v1520 = vmul.f32 %v1513, %v1497
      %v1521 = vmul.f32 %v1513, %v1502
      %v1522 = vmul.f32 %v1513, %v1505
      %v1523 = vadd.f32 %v820, %v1515
      %v1524 = vadd.f32 %v821, %v1516
      %v1525 = vadd.f32 %v822, %v1517
      %v1526 = vadd.f32 %v823, %v1518
      %v1527 = vadd.f32 %v824, %v1519
      %v1528 = vadd.f32 %v825, %v1520
      %v1529 = vadd.f32 %v826, %v1521
      %v1530 = vadd.f32 %v827, %v1522
      %v1531 = vld [vmem:[%s10] sm:$0x1]
      %v1532 = vld [vmem:[%s11] sm:$0x1]
      %v1533 = vsel %vm830, %v1523, 0.0
      %1534 = vadd.xlane.f32.xlu0 %v1533
      %v1535 = vpop.xlane.xlu0 %1534
      %v1536 = vsel %vm830, %v1524, 0.0
      %1537 = vadd.xlane.f32.xlu0 %v1536
      %v1538 = vpop.xlane.xlu0 %1537
      %v1539 = vsel %vm830, %v1525, 0.0
      %1540 = vadd.xlane.f32.xlu0 %v1539
      %v1541 = vpop.xlane.xlu0 %1540
      %v1542 = vsel %vm830, %v1526, 0.0
      %1543 = vadd.xlane.f32.xlu0 %v1542
      %v1544 = vpop.xlane.xlu0 %1543
      %v1545 = vsel %vm830, %v1527, 0.0
      %1546 = vadd.xlane.f32.xlu0 %v1545
      %v1547 = vpop.xlane.xlu0 %1546
      %v1548 = vsel %vm830, %v1528, 0.0
      %1549 = vadd.xlane.f32.xlu0 %v1548
      %v1550 = vpop.xlane.xlu0 %1549
      %v1551 = vsel %vm830, %v1529, 0.0
      %1552 = vadd.xlane.f32.xlu0 %v1551
      %v1553 = vpop.xlane.xlu0 %1552
      %v1554 = vsel %vm830, %v1530, 0.0
      %1555 = vadd.xlane.f32.xlu0 %v1554
      %v1556 = vpop.xlane.xlu0 %1555
      %v1557 = vmul.f32 %v1535, %v855
      %v1558 = vmul.f32 %v1538, %v855
      %v1559 = vmul.f32 %v1541, %v855
      %v1560 = vmul.f32 %v1544, %v855
      %v1561 = vmul.f32 %v1547, %v855
      %v1562 = vmul.f32 %v1550, %v855
      %v1563 = vmul.f32 %v1553, %v855
      %v1564 = vmul.f32 %v1556, %v855
      %v1565 = vsub.f32 %v1523, %v1557
      %v1566 = vsub.f32 %v1524, %v1558
      %v1567 = vsub.f32 %v1525, %v1559
      %v1568 = vsub.f32 %v1526, %v1560
      %v1569 = vsub.f32 %v1527, %v1561
      %v1570 = vsub.f32 %v1528, %v1562
      %v1571 = vsub.f32 %v1529, %v1563
      %v1572 = vsub.f32 %v1530, %v1564
      %v1573 = vmul.f32 %v1565, %v1565
      %v1574 = vmul.f32 %v1566, %v1566
      %v1575 = vmul.f32 %v1567, %v1567
      %v1576 = vmul.f32 %v1568, %v1568
      %v1577 = vmul.f32 %v1569, %v1569
      %v1578 = vmul.f32 %v1570, %v1570
      %v1579 = vmul.f32 %v1571, %v1571
      %v1580 = vmul.f32 %v1572, %v1572
      %v1581 = vsel %vm830, %v1573, 0.0
      %1582 = vadd.xlane.f32.xlu0 %v1581
      %v1583 = vpop.xlane.xlu0 %1582
      %v1584 = vsel %vm830, %v1574, 0.0
      %1585 = vadd.xlane.f32.xlu0 %v1584
      %v1586 = vpop.xlane.xlu0 %1585
      %v1587 = vsel %vm830, %v1575, 0.0
      %1588 = vadd.xlane.f32.xlu0 %v1587
      %v1589 = vpop.xlane.xlu0 %1588
      %v1590 = vsel %vm830, %v1576, 0.0
      %1591 = vadd.xlane.f32.xlu0 %v1590
      %v1592 = vpop.xlane.xlu0 %1591
      %v1593 = vsel %vm830, %v1577, 0.0
      %1594 = vadd.xlane.f32.xlu0 %v1593
      %v1595 = vpop.xlane.xlu0 %1594
      %v1596 = vsel %vm830, %v1578, 0.0
      %1597 = vadd.xlane.f32.xlu0 %v1596
      %v1598 = vpop.xlane.xlu0 %1597
      %v1599 = vsel %vm830, %v1579, 0.0
      %1600 = vadd.xlane.f32.xlu0 %v1599
      %v1601 = vpop.xlane.xlu0 %1600
      %v1602 = vsel %vm830, %v1580, 0.0
      %1603 = vadd.xlane.f32.xlu0 %v1602
      %v1604 = vpop.xlane.xlu0 %1603
      %v1605 = vmul.f32 %v1583, %v855
      %v1606 = vmul.f32 %v1586, %v855
      %v1607 = vmul.f32 %v1589, %v855
      %v1608 = vmul.f32 %v1592, %v855
      %v1609 = vmul.f32 %v1595, %v855
      %v1610 = vmul.f32 %v1598, %v855
      %v1611 = vmul.f32 %v1601, %v855
      %v1612 = vmul.f32 %v1604, %v855
      %v1613 = vadd.f32 %v1605, 1e-05
      %v1614 = vadd.f32 %v1606, 1e-05
      %v1615 = vadd.f32 %v1607, 1e-05
      %v1616 = vadd.f32 %v1608, 1e-05
      %v1617 = vadd.f32 %v1609, 1e-05
      %v1618 = vadd.f32 %v1610, 1e-05
      %v1619 = vadd.f32 %v1611, 1e-05
      %v1620 = vadd.f32 %v1612, 1e-05
      %v1621 = vrsqrt.pop %v1613
      %v1622 = vrsqrt.pop %v1614
      %v1623 = vrsqrt.pop %v1615
      %v1624 = vrsqrt.pop %v1616
      %v1625 = vrsqrt.pop %v1617
      %v1626 = vrsqrt.pop %v1618
      %v1627 = vrsqrt.pop %v1619
      %v1628 = vrsqrt.pop %v1620
      %v1629 = vmul.f32 %v1565, %v1621
      %v1630 = vmul.f32 %v1566, %v1622
      %v1631 = vmul.f32 %v1567, %v1623
      %v1632 = vmul.f32 %v1568, %v1624
      %v1633 = vmul.f32 %v1569, %v1625
      %v1634 = vmul.f32 %v1570, %v1626
      %v1635 = vmul.f32 %v1571, %v1627
      %v1636 = vmul.f32 %v1572, %v1628
      %v1638 = vlaneseq
      %v1639 = vshrl.u32 %v1638, 7
      %v1640 = vsub.s32 0, %v1639
      %v1641 = vrot.slane %v1531, %v1640
      %v1643 = vmul.f32 %v1629, %v1641
      %v1644 = vmul.f32 %v1630, %v1641
      %v1645 = vmul.f32 %v1631, %v1641
      %v1646 = vmul.f32 %v1632, %v1641
      %v1647 = vmul.f32 %v1633, %v1641
      %v1648 = vmul.f32 %v1634, %v1641
      %v1649 = vmul.f32 %v1635, %v1641
      %v1650 = vmul.f32 %v1636, %v1641
      %v1652 = vlaneseq
      %v1653 = vshrl.u32 %v1652, 7
      %v1654 = vsub.s32 0, %v1653
      %v1655 = vrot.slane %v1532, %v1654
      %v1657 = vadd.f32 %v1643, %v1655
      %v1658 = vadd.f32 %v1644, %v1655
      %v1659 = vadd.f32 %v1645, %v1655
      %v1660 = vadd.f32 %v1646, %v1655
      %v1661 = vadd.f32 %v1647, %v1655
      %v1662 = vadd.f32 %v1648, %v1655
      %v1663 = vadd.f32 %v1649, %v1655
      %v1664 = vadd.f32 %v1650, %v1655
      %v1665 = vld [vmem:[%s25] sm:$0xff]
      %v1666 = vld [vmem:[%s25 + $0x8] sm:$0xff]
      %v1667 = vld [vmem:[%s25 + $0x10] sm:$0xff]
      %v1668 = vld [vmem:[%s25 + $0x18] sm:$0xff]
      %v1669 = vld [vmem:[%s25 + $0x20] sm:$0xff]
      %v1670 = vld [vmem:[%s25 + $0x28] sm:$0xff]
      %v1671 = vld [vmem:[%s25 + $0x30] sm:$0xff]
      %v1672 = vld [vmem:[%s25 + $0x38] sm:$0xff]
      %v1673 = vld [vmem:[%s26] sm:$0xff]
      %v1674 = vld [vmem:[%s26 + $0x8] sm:$0xff]
      %v1675 = vld [vmem:[%s26 + $0x10] sm:$0xff]
      %v1676 = vld [vmem:[%s26 + $0x18] sm:$0xff]
      %v1677 = vld [vmem:[%s26 + $0x20] sm:$0xff]
      %v1678 = vld [vmem:[%s26 + $0x28] sm:$0xff]
      %v1679 = vld [vmem:[%s26 + $0x30] sm:$0xff]
      %v1680 = vld [vmem:[%s26 + $0x38] sm:$0xff]
      %v1681 = vld [vmem:[%s12] sm:$0xff]
      %v1682 = vld [vmem:[%s12 + $0x8] sm:$0x1]
      %vm1690 = vcmask 1040384
      %v1691 = vrot.slane %v1657, 7
      %v1692 = vrot.slane %v1658, 7
      %v1693 = vsel %vm1690, %v1691, %v1692
      %v1694 = vrot.slane %v1659, 7
      %v1695 = vsel %vm1690, %v1692, %v1694
      %v1696 = vrot.slane %v1660, 7
      %v1697 = vsel %vm1690, %v1694, %v1696
      %v1698 = vrot.slane %v1661, 7
      %v1699 = vsel %vm1690, %v1696, %v1698
      %v1700 = vrot.slane %v1662, 7
      %v1701 = vsel %vm1690, %v1698, %v1700
      %v1702 = vrot.slane %v1663, 7
      %v1703 = vsel %vm1690, %v1700, %v1702
      %v1711 = vsel %vm1690, 0.0, %v1691
      %1713 = vset.pattern.permute.xlu0 0
      %1714 = vperm.xlu0 %1713, %v1665
      %v1715 = vpop.permute.xlu0 %1714
      %1718 = vset.pattern.permute.xlu0 0
      %1719 = vperm.xlu0 %1718, %v1666
      %v1720 = vpop.permute.xlu0 %1719
      %1723 = vset.pattern.permute.xlu0 0
      %1724 = vperm.xlu0 %1723, %v1667
      %v1725 = vpop.permute.xlu0 %1724
      %1728 = vset.pattern.permute.xlu0 0
      %1729 = vperm.xlu0 %1728, %v1668
      %v1730 = vpop.permute.xlu0 %1729
      %1733 = vset.pattern.permute.xlu0 0
      %1734 = vperm.xlu0 %1733, %v1669
      %v1735 = vpop.permute.xlu0 %1734
      %1738 = vset.pattern.permute.xlu0 0
      %1739 = vperm.xlu0 %1738, %v1670
      %v1740 = vpop.permute.xlu0 %1739
      %1743 = vset.pattern.permute.xlu0 0
      %1744 = vperm.xlu0 %1743, %v1671
      %v1745 = vpop.permute.xlu0 %1744
      %1748 = vset.pattern.permute.xlu0 0
      %1749 = vperm.xlu0 %1748, %v1672
      %v1750 = vpop.permute.xlu0 %1749
      %v1752 = vmul.f32 %v1715, 0.0
      %v1753 = vmul.f32 %v1711, %v1720
      %v1754 = vmul.f32 %v1693, %v1725
      %v1755 = vmul.f32 %v1695, %v1730
      %v1756 = vmul.f32 %v1697, %v1735
      %v1757 = vmul.f32 %v1699, %v1740
      %v1758 = vmul.f32 %v1701, %v1745
      %v1759 = vmul.f32 %v1703, %v1750
      %v1760 = vlaneseq
      %v1761 = vshrl.u32 %v1760, 7
      %v1762 = vsub.s32 0, %v1761
      %v1763 = vrot.slane %v1681, %v1762
      %v1764 = vmul.f32 %v1752, %v1763
      %v1765 = vmul.f32 %v1753, %v1763
      %v1766 = vmul.f32 %v1754, %v1763
      %v1767 = vmul.f32 %v1755, %v1763
      %v1768 = vmul.f32 %v1756, %v1763
      %v1769 = vmul.f32 %v1757, %v1763
      %v1770 = vmul.f32 %v1758, %v1763
      %v1771 = vmul.f32 %v1759, %v1763
      %v1772 = vadd.f32 %v1764, 0.0
      %v1773 = vadd.f32 %v1765, 0.0
      %v1774 = vadd.f32 %v1766, 0.0
      %v1775 = vadd.f32 %v1767, 0.0
      %v1776 = vadd.f32 %v1768, 0.0
      %v1777 = vadd.f32 %v1769, 0.0
      %v1778 = vadd.f32 %v1770, 0.0
      %v1779 = vadd.f32 %v1771, 0.0
      %v1780 = vlaneseq
      %v1781 = vshrl.u32 %v1780, 7
      %v1782 = vsub.s32 1, %v1781
      %v1783 = vrot.slane %v1681, %v1782
      %v1784 = vmul.f32 %v1783, 0.0
      %v1785 = vmul.f32 %v1657, %v1783
      %v1786 = vmul.f32 %v1658, %v1783
      %v1787 = vmul.f32 %v1659, %v1783
      %v1788 = vmul.f32 %v1660, %v1783
      %v1789 = vmul.f32 %v1661, %v1783
      %v1790 = vmul.f32 %v1662, %v1783
      %v1791 = vmul.f32 %v1663, %v1783
      %v1792 = vadd.f32 %v1772, %v1784
      %v1793 = vadd.f32 %v1773, %v1785
      %v1794 = vadd.f32 %v1774, %v1786
      %v1795 = vadd.f32 %v1775, %v1787
      %v1796 = vadd.f32 %v1776, %v1788
      %v1797 = vadd.f32 %v1777, %v1789
      %v1798 = vadd.f32 %v1778, %v1790
      %v1799 = vadd.f32 %v1779, %v1791
      %vm1801 = vcmask 1046528
      %v1802 = vrot.slane %v1657, 1
      %v1803 = vrot.slane %v1658, 1
      %v1804 = vsel %vm1801, %v1802, %v1803
      %v1805 = vrot.slane %v1659, 1
      %v1806 = vsel %vm1801, %v1803, %v1805
      %v1807 = vrot.slane %v1660, 1
      %v1808 = vsel %vm1801, %v1805, %v1807
      %v1809 = vrot.slane %v1661, 1
      %v1810 = vsel %vm1801, %v1807, %v1809
      %v1811 = vrot.slane %v1662, 1
      %v1812 = vsel %vm1801, %v1809, %v1811
      %v1813 = vrot.slane %v1663, 1
      %v1814 = vsel %vm1801, %v1811, %v1813
      %v1815 = vrot.slane %v1664, 1
      %v1816 = vsel %vm1801, %v1813, %v1815
      %v1825 = vsel %vm1801, 0.0, %v1802
      %1827 = vset.pattern.permute.xlu0 0
      %1828 = vperm.xlu0 %1827, %v1673
      %v1829 = vpop.permute.xlu0 %1828
      %1832 = vset.pattern.permute.xlu0 0
      %1833 = vperm.xlu0 %1832, %v1674
      %v1834 = vpop.permute.xlu0 %1833
      %1837 = vset.pattern.permute.xlu0 0
      %1838 = vperm.xlu0 %1837, %v1675
      %v1839 = vpop.permute.xlu0 %1838
      %1842 = vset.pattern.permute.xlu0 0
      %1843 = vperm.xlu0 %1842, %v1676
      %v1844 = vpop.permute.xlu0 %1843
      %1847 = vset.pattern.permute.xlu0 0
      %1848 = vperm.xlu0 %1847, %v1677
      %v1849 = vpop.permute.xlu0 %1848
      %1852 = vset.pattern.permute.xlu0 0
      %1853 = vperm.xlu0 %1852, %v1678
      %v1854 = vpop.permute.xlu0 %1853
      %1857 = vset.pattern.permute.xlu0 0
      %1858 = vperm.xlu0 %1857, %v1679
      %v1859 = vpop.permute.xlu0 %1858
      %1862 = vset.pattern.permute.xlu0 0
      %1863 = vperm.xlu0 %1862, %v1680
      %v1864 = vpop.permute.xlu0 %1863
      %v1866 = vmul.f32 %v1825, %v1829
      %v1867 = vmul.f32 %v1804, %v1834
      %v1868 = vmul.f32 %v1806, %v1839
      %v1869 = vmul.f32 %v1808, %v1844
      %v1870 = vmul.f32 %v1810, %v1849
      %v1871 = vmul.f32 %v1812, %v1854
      %v1872 = vmul.f32 %v1814, %v1859
      %v1873 = vmul.f32 %v1816, %v1864
      %v1874 = vlaneseq
      %v1875 = vshrl.u32 %v1874, 7
      %v1876 = vsub.s32 2, %v1875
      %v1877 = vrot.slane %v1681, %v1876
      %v1878 = vmul.f32 %v1866, %v1877
      %v1879 = vmul.f32 %v1867, %v1877
      %v1880 = vmul.f32 %v1868, %v1877
      %v1881 = vmul.f32 %v1869, %v1877
      %v1882 = vmul.f32 %v1870, %v1877
      %v1883 = vmul.f32 %v1871, %v1877
      %v1884 = vmul.f32 %v1872, %v1877
      %v1885 = vmul.f32 %v1873, %v1877
      %v1886 = vadd.f32 %v1792, %v1878
      %v1887 = vadd.f32 %v1793, %v1879
      %v1888 = vadd.f32 %v1794, %v1880
      %v1889 = vadd.f32 %v1795, %v1881
      %v1890 = vadd.f32 %v1796, %v1882
      %v1891 = vadd.f32 %v1797, %v1883
      %v1892 = vadd.f32 %v1798, %v1884
      %v1893 = vadd.f32 %v1799, %v1885
      %v1894 = vrot.slane %v1664, 7
      %v1895 = vsel %vm1690, %v1702, %v1894
      %v1897 = vmul.f32 %v1711, %v1715
      %v1898 = vmul.f32 %v1693, %v1720
      %v1899 = vmul.f32 %v1695, %v1725
      %v1900 = vmul.f32 %v1697, %v1730
      %v1901 = vmul.f32 %v1699, %v1735
      %v1902 = vmul.f32 %v1701, %v1740
      %v1903 = vmul.f32 %v1703, %v1745
      %v1904 = vmul.f32 %v1895, %v1750
      %v1905 = vlaneseq
      %v1906 = vshrl.u32 %v1905, 7
      %v1907 = vsub.s32 3, %v1906
      %v1908 = vrot.slane %v1681, %v1907
      %v1909 = vmul.f32 %v1897, %v1908
      %v1910 = vmul.f32 %v1898, %v1908
      %v1911 = vmul.f32 %v1899, %v1908
      %v1912 = vmul.f32 %v1900, %v1908
      %v1913 = vmul.f32 %v1901, %v1908
      %v1914 = vmul.f32 %v1902, %v1908
      %v1915 = vmul.f32 %v1903, %v1908
      %v1916 = vmul.f32 %v1904, %v1908
      %v1917 = vadd.f32 %v1886, %v1909
      %v1918 = vadd.f32 %v1887, %v1910
      %v1919 = vadd.f32 %v1888, %v1911
      %v1920 = vadd.f32 %v1889, %v1912
      %v1921 = vadd.f32 %v1890, %v1913
      %v1922 = vadd.f32 %v1891, %v1914
      %v1923 = vadd.f32 %v1892, %v1915
      %v1924 = vadd.f32 %v1893, %v1916
      %v1925 = vlaneseq
      %v1926 = vshrl.u32 %v1925, 7
      %v1927 = vsub.s32 4, %v1926
      %v1928 = vrot.slane %v1681, %v1927
      %v1929 = vmul.f32 %v1657, %v1928
      %v1930 = vmul.f32 %v1658, %v1928
      %v1931 = vmul.f32 %v1659, %v1928
      %v1932 = vmul.f32 %v1660, %v1928
      %v1933 = vmul.f32 %v1661, %v1928
      %v1934 = vmul.f32 %v1662, %v1928
      %v1935 = vmul.f32 %v1663, %v1928
      %v1936 = vmul.f32 %v1664, %v1928
      %v1937 = vadd.f32 %v1917, %v1929
      %v1938 = vadd.f32 %v1918, %v1930
      %v1939 = vadd.f32 %v1919, %v1931
      %v1940 = vadd.f32 %v1920, %v1932
      %v1941 = vadd.f32 %v1921, %v1933
      %v1942 = vadd.f32 %v1922, %v1934
      %v1943 = vadd.f32 %v1923, %v1935
      %v1944 = vadd.f32 %v1924, %v1936
      %v1946 = vsel %vm1801, %v1815, 0.0
      %v1947 = vmul.f32 %v1804, %v1829
      %v1948 = vmul.f32 %v1806, %v1834
      %v1949 = vmul.f32 %v1808, %v1839
      %v1950 = vmul.f32 %v1810, %v1844
      %v1951 = vmul.f32 %v1812, %v1849
      %v1952 = vmul.f32 %v1814, %v1854
      %v1953 = vmul.f32 %v1816, %v1859
      %v1954 = vmul.f32 %v1946, %v1864
      %v1955 = vlaneseq
      %v1956 = vshrl.u32 %v1955, 7
      %v1957 = vsub.s32 5, %v1956
      %v1958 = vrot.slane %v1681, %v1957
      %v1959 = vmul.f32 %v1947, %v1958
      %v1960 = vmul.f32 %v1948, %v1958
      %v1961 = vmul.f32 %v1949, %v1958
      %v1962 = vmul.f32 %v1950, %v1958
      %v1963 = vmul.f32 %v1951, %v1958
      %v1964 = vmul.f32 %v1952, %v1958
      %v1965 = vmul.f32 %v1953, %v1958
      %v1966 = vmul.f32 %v1954, %v1958
      %v1967 = vadd.f32 %v1937, %v1959
      %v1968 = vadd.f32 %v1938, %v1960
      %v1969 = vadd.f32 %v1939, %v1961
      %v1970 = vadd.f32 %v1940, %v1962
      %v1971 = vadd.f32 %v1941, %v1963
      %v1972 = vadd.f32 %v1942, %v1964
      %v1973 = vadd.f32 %v1943, %v1965
      %v1974 = vadd.f32 %v1944, %v1966
      %v1976 = vsel %vm1690, %v1894, 0.0
      %v1977 = vmul.f32 %v1693, %v1715
      %v1978 = vmul.f32 %v1695, %v1720
      %v1979 = vmul.f32 %v1697, %v1725
      %v1980 = vmul.f32 %v1699, %v1730
      %v1981 = vmul.f32 %v1701, %v1735
      %v1982 = vmul.f32 %v1703, %v1740
      %v1983 = vmul.f32 %v1895, %v1745
      %v1984 = vmul.f32 %v1976, %v1750
      %v1985 = vlaneseq
      %v1986 = vshrl.u32 %v1985, 7
      %v1987 = vsub.s32 6, %v1986
      %v1988 = vrot.slane %v1681, %v1987
      %v1989 = vmul.f32 %v1977, %v1988
      %v1990 = vmul.f32 %v1978, %v1988
      %v1991 = vmul.f32 %v1979, %v1988
      %v1992 = vmul.f32 %v1980, %v1988
      %v1993 = vmul.f32 %v1981, %v1988
      %v1994 = vmul.f32 %v1982, %v1988
      %v1995 = vmul.f32 %v1983, %v1988
      %v1996 = vmul.f32 %v1984, %v1988
      %v1997 = vadd.f32 %v1967, %v1989
      %v1998 = vadd.f32 %v1968, %v1990
      %v1999 = vadd.f32 %v1969, %v1991
      %v2000 = vadd.f32 %v1970, %v1992
      %v2001 = vadd.f32 %v1971, %v1993
      %v2002 = vadd.f32 %v1972, %v1994
      %v2003 = vadd.f32 %v1973, %v1995
      %v2004 = vadd.f32 %v1974, %v1996
      %v2005 = vlaneseq
      %v2006 = vshrl.u32 %v2005, 7
      %v2007 = vsub.s32 7, %v2006
      %v2008 = vrot.slane %v1681, %v2007
      %v2009 = vmul.f32 %v1658, %v2008
      %v2010 = vmul.f32 %v1659, %v2008
      %v2011 = vmul.f32 %v1660, %v2008
      %v2012 = vmul.f32 %v1661, %v2008
      %v2013 = vmul.f32 %v1662, %v2008
      %v2014 = vmul.f32 %v1663, %v2008
      %v2015 = vmul.f32 %v1664, %v2008
      %v2016 = vmul.f32 %v2008, 0.0
      %v2017 = vadd.f32 %v1997, %v2009
      %v2018 = vadd.f32 %v1998, %v2010
      %v2019 = vadd.f32 %v1999, %v2011
      %v2020 = vadd.f32 %v2000, %v2012
      %v2021 = vadd.f32 %v2001, %v2013
      %v2022 = vadd.f32 %v2002, %v2014
      %v2023 = vadd.f32 %v2003, %v2015
      %v2024 = vadd.f32 %v2004, %v2016
      %v2025 = vmul.f32 %v1806, %v1829
      %v2026 = vmul.f32 %v1808, %v1834
      %v2027 = vmul.f32 %v1810, %v1839
      %v2028 = vmul.f32 %v1812, %v1844
      %v2029 = vmul.f32 %v1814, %v1849
      %v2030 = vmul.f32 %v1816, %v1854
      %v2031 = vmul.f32 %v1946, %v1859
      %v2032 = vmul.f32 %v1864, 0.0
      %v2033 = vlaneseq
      %v2034 = vshrl.u32 %v2033, 7
      %v2035 = vsub.s32 0, %v2034
      %v2036 = vrot.slane %v1682, %v2035
      %v2037 = vmul.f32 %v2025, %v2036
      %v2038 = vmul.f32 %v2026, %v2036
      %v2039 = vmul.f32 %v2027, %v2036
      %v2040 = vmul.f32 %v2028, %v2036
      %v2041 = vmul.f32 %v2029, %v2036
      %v2042 = vmul.f32 %v2030, %v2036
      %v2043 = vmul.f32 %v2031, %v2036
      %v2044 = vmul.f32 %v2032, %v2036
      %v2045 = vadd.f32 %v2017, %v2037
      %v2046 = vadd.f32 %v2018, %v2038
      %v2047 = vadd.f32 %v2019, %v2039
      %v2048 = vadd.f32 %v2020, %v2040
      %v2049 = vadd.f32 %v2021, %v2041
      %v2050 = vadd.f32 %v2022, %v2042
      %v2051 = vadd.f32 %v2023, %v2043
      %v2052 = vadd.f32 %v2024, %v2044
      %v2053 = vld [vmem:[%s13] sm:$0x1]
      %v2055 = vlaneseq
      %v2056 = vshrl.u32 %v2055, 7
      %v2057 = vsub.s32 0, %v2056
      %v2058 = vrot.slane %v2053, %v2057
      %v2060 = vmul.f32 %v2045, %v2058
      %v2061 = vmul.f32 %v2046, %v2058
      %v2062 = vmul.f32 %v2047, %v2058
      %v2063 = vmul.f32 %v2048, %v2058
      %v2064 = vmul.f32 %v2049, %v2058
      %v2065 = vmul.f32 %v2050, %v2058
      %v2066 = vmul.f32 %v2051, %v2058
      %v2067 = vmul.f32 %v2052, %v2058
      %v2068 = vld [vmem:[%s14] sm:$0x1]
      %v2070 = vlaneseq
      %v2071 = vshrl.u32 %v2070, 7
      %v2072 = vsub.s32 0, %v2071
      %v2073 = vrot.slane %v2068, %v2072
      %v2075 = vadd.f32 %v2060, %v2073
      %v2076 = vadd.f32 %v2061, %v2073
      %v2077 = vadd.f32 %v2062, %v2073
      %v2078 = vadd.f32 %v2063, %v2073
      %v2079 = vadd.f32 %v2064, %v2073
      %v2080 = vadd.f32 %v2065, %v2073
      %v2081 = vadd.f32 %v2066, %v2073
      %v2082 = vadd.f32 %v2067, %v2073
      %v2083 = vmul.f32 %v2075, 0.5
      %v2084 = vmul.f32 %v2076, 0.5
      %v2085 = vmul.f32 %v2077, 0.5
      %v2086 = vmul.f32 %v2078, 0.5
      %v2087 = vmul.f32 %v2079, 0.5
      %v2088 = vmul.f32 %v2080, 0.5
      %v2089 = vmul.f32 %v2081, 0.5
      %v2090 = vmul.f32 %v2082, 0.5
      %v2091 = vmul.f32 %v2075, 0.70710677
      %v2092 = vmul.f32 %v2076, 0.70710677
      %v2093 = vmul.f32 %v2077, 0.70710677
      %v2094 = vmul.f32 %v2078, 0.70710677
      %v2095 = vmul.f32 %v2079, 0.70710677
      %v2096 = vmul.f32 %v2080, 0.70710677
      %v2097 = vmul.f32 %v2081, 0.70710677
      %v2098 = vmul.f32 %v2082, 0.70710677
      %v2099 = vand.u32 2147483647, %v2091
      %v2100 = vand.u32 2147483647, %v2092
      %v2101 = vand.u32 2147483647, %v2093
      %v2102 = vand.u32 2147483647, %v2094
      %v2103 = vand.u32 2147483647, %v2095
      %v2104 = vand.u32 2147483647, %v2096
      %v2105 = vand.u32 2147483647, %v2097
      %v2106 = vand.u32 2147483647, %v2098
      %v2107 = vmul.f32 %v2099, 0.3275911
      %v2108 = vmul.f32 %v2100, 0.3275911
      %v2109 = vmul.f32 %v2101, 0.3275911
      %v2110 = vmul.f32 %v2102, 0.3275911
      %v2111 = vmul.f32 %v2103, 0.3275911
      %v2112 = vmul.f32 %v2104, 0.3275911
      %v2113 = vmul.f32 %v2105, 0.3275911
      %v2114 = vmul.f32 %v2106, 0.3275911
      %v2115 = vadd.f32 %v2107, 1.0
      %v2116 = vadd.f32 %v2108, 1.0
      %v2117 = vadd.f32 %v2109, 1.0
      %v2118 = vadd.f32 %v2110, 1.0
      %v2119 = vadd.f32 %v2111, 1.0
      %v2120 = vadd.f32 %v2112, 1.0
      %v2121 = vadd.f32 %v2113, 1.0
      %v2122 = vadd.f32 %v2114, 1.0
      %v2123 = vrcp.pop %v2115
      %v2124 = vrcp.pop %v2116
      %v2125 = vrcp.pop %v2117
      %v2126 = vrcp.pop %v2118
      %v2127 = vrcp.pop %v2119
      %v2128 = vrcp.pop %v2120
      %v2129 = vrcp.pop %v2121
      %v2130 = vrcp.pop %v2122
      %v2131 = vmul.f32 %v2123, 1.0614054
      %v2132 = vmul.f32 %v2124, 1.0614054
      %v2133 = vmul.f32 %v2125, 1.0614054
      %v2134 = vmul.f32 %v2126, 1.0614054
      %v2135 = vmul.f32 %v2127, 1.0614054
      %v2136 = vmul.f32 %v2128, 1.0614054
      %v2137 = vmul.f32 %v2129, 1.0614054
      %v2138 = vmul.f32 %v2130, 1.0614054
      %v2139 = vadd.f32 %v2131, -1.4531521
      %v2140 = vadd.f32 %v2132, -1.4531521
      %v2141 = vadd.f32 %v2133, -1.4531521
      %v2142 = vadd.f32 %v2134, -1.4531521
      %v2143 = vadd.f32 %v2135, -1.4531521
      %v2144 = vadd.f32 %v2136, -1.4531521
      %v2145 = vadd.f32 %v2137, -1.4531521
      %v2146 = vadd.f32 %v2138, -1.4531521
      %v2147 = vmul.f32 %v2123, %v2139
      %v2148 = vmul.f32 %v2124, %v2140
      %v2149 = vmul.f32 %v2125, %v2141
      %v2150 = vmul.f32 %v2126, %v2142
      %v2151 = vmul.f32 %v2127, %v2143
      %v2152 = vmul.f32 %v2128, %v2144
      %v2153 = vmul.f32 %v2129, %v2145
      %v2154 = vmul.f32 %v2130, %v2146
      %v2155 = vadd.f32 %v2147, 1.4214138
      %v2156 = vadd.f32 %v2148, 1.4214138
      %v2157 = vadd.f32 %v2149, 1.4214138
      %v2158 = vadd.f32 %v2150, 1.4214138
      %v2159 = vadd.f32 %v2151, 1.4214138
      %v2160 = vadd.f32 %v2152, 1.4214138
      %v2161 = vadd.f32 %v2153, 1.4214138
      %v2162 = vadd.f32 %v2154, 1.4214138
      %v2163 = vmul.f32 %v2123, %v2155
      %v2164 = vmul.f32 %v2124, %v2156
      %v2165 = vmul.f32 %v2125, %v2157
      %v2166 = vmul.f32 %v2126, %v2158
      %v2167 = vmul.f32 %v2127, %v2159
      %v2168 = vmul.f32 %v2128, %v2160
      %v2169 = vmul.f32 %v2129, %v2161
      %v2170 = vmul.f32 %v2130, %v2162
      %v2171 = vadd.f32 %v2163, -0.28449672
      %v2172 = vadd.f32 %v2164, -0.28449672
      %v2173 = vadd.f32 %v2165, -0.28449672
      %v2174 = vadd.f32 %v2166, -0.28449672
      %v2175 = vadd.f32 %v2167, -0.28449672
      %v2176 = vadd.f32 %v2168, -0.28449672
      %v2177 = vadd.f32 %v2169, -0.28449672
      %v2178 = vadd.f32 %v2170, -0.28449672
      %v2179 = vmul.f32 %v2123, %v2171
      %v2180 = vmul.f32 %v2124, %v2172
      %v2181 = vmul.f32 %v2125, %v2173
      %v2182 = vmul.f32 %v2126, %v2174
      %v2183 = vmul.f32 %v2127, %v2175
      %v2184 = vmul.f32 %v2128, %v2176
      %v2185 = vmul.f32 %v2129, %v2177
      %v2186 = vmul.f32 %v2130, %v2178
      %v2187 = vadd.f32 %v2179, 0.2548296
      %v2188 = vadd.f32 %v2180, 0.2548296
      %v2189 = vadd.f32 %v2181, 0.2548296
      %v2190 = vadd.f32 %v2182, 0.2548296
      %v2191 = vadd.f32 %v2183, 0.2548296
      %v2192 = vadd.f32 %v2184, 0.2548296
      %v2193 = vadd.f32 %v2185, 0.2548296
      %v2194 = vadd.f32 %v2186, 0.2548296
      %v2195 = vmul.f32 %v2123, %v2187
      %v2196 = vmul.f32 %v2124, %v2188
      %v2197 = vmul.f32 %v2125, %v2189
      %v2198 = vmul.f32 %v2126, %v2190
      %v2199 = vmul.f32 %v2127, %v2191
      %v2200 = vmul.f32 %v2128, %v2192
      %v2201 = vmul.f32 %v2129, %v2193
      %v2202 = vmul.f32 %v2130, %v2194
      %v2203 = vsub.f32 0.0, %v2099
      %v2204 = vsub.f32 0.0, %v2100
      %v2205 = vsub.f32 0.0, %v2101
      %v2206 = vsub.f32 0.0, %v2102
      %v2207 = vsub.f32 0.0, %v2103
      %v2208 = vsub.f32 0.0, %v2104
      %v2209 = vsub.f32 0.0, %v2105
      %v2210 = vsub.f32 0.0, %v2106
      %v2211 = vmul.f32 %v2203, %v2099
      %v2212 = vmul.f32 %v2204, %v2100
      %v2213 = vmul.f32 %v2205, %v2101
      %v2214 = vmul.f32 %v2206, %v2102
      %v2215 = vmul.f32 %v2207, %v2103
      %v2216 = vmul.f32 %v2208, %v2104
      %v2217 = vmul.f32 %v2209, %v2105
      %v2218 = vmul.f32 %v2210, %v2106
      %v2219 = vmul.f32 %v2211, 1.442695
      %v2220 = vpow.pop %v2219
      %v2221 = vmul.f32 %v2212, 1.442695
      %v2222 = vpow.pop %v2221
      %v2223 = vmul.f32 %v2213, 1.442695
      %v2224 = vpow.pop %v2223
      %v2225 = vmul.f32 %v2214, 1.442695
      %v2226 = vpow.pop %v2225
      %v2227 = vmul.f32 %v2215, 1.442695
      %v2228 = vpow.pop %v2227
      %v2229 = vmul.f32 %v2216, 1.442695
      %v2230 = vpow.pop %v2229
      %v2231 = vmul.f32 %v2217, 1.442695
      %v2232 = vpow.pop %v2231
      %v2233 = vmul.f32 %v2218, 1.442695
      %v2234 = vpow.pop %v2233
      %v2235 = vmul.f32 %v2195, %v2220
      %v2236 = vmul.f32 %v2196, %v2222
      %v2237 = vmul.f32 %v2197, %v2224
      %v2238 = vmul.f32 %v2198, %v2226
      %v2239 = vmul.f32 %v2199, %v2228
      %v2240 = vmul.f32 %v2200, %v2230
      %v2241 = vmul.f32 %v2201, %v2232
      %v2242 = vmul.f32 %v2202, %v2234
      %v2243 = vsub.f32 1.0, %v2235
      %v2244 = vsub.f32 1.0, %v2236
      %v2245 = vsub.f32 1.0, %v2237
      %v2246 = vsub.f32 1.0, %v2238
      %v2247 = vsub.f32 1.0, %v2239
      %v2248 = vsub.f32 1.0, %v2240
      %v2249 = vsub.f32 1.0, %v2241
      %v2250 = vsub.f32 1.0, %v2242
      %vm2251 = vcmp.ge.f32.partialorder %v2091, 0.0
      %vm2252 = vcmp.ge.f32.partialorder %v2092, 0.0
      %vm2253 = vcmp.ge.f32.partialorder %v2093, 0.0
      %vm2254 = vcmp.ge.f32.partialorder %v2094, 0.0
      %vm2255 = vcmp.ge.f32.partialorder %v2095, 0.0
      %vm2256 = vcmp.ge.f32.partialorder %v2096, 0.0
      %vm2257 = vcmp.ge.f32.partialorder %v2097, 0.0
      %vm2258 = vcmp.ge.f32.partialorder %v2098, 0.0
      %v2259 = vsub.f32 0.0, %v2243
      %v2260 = vsub.f32 0.0, %v2244
      %v2261 = vsub.f32 0.0, %v2245
      %v2262 = vsub.f32 0.0, %v2246
      %v2263 = vsub.f32 0.0, %v2247
      %v2264 = vsub.f32 0.0, %v2248
      %v2265 = vsub.f32 0.0, %v2249
      %v2266 = vsub.f32 0.0, %v2250
      %v2267 = vsel %vm2251, %v2243, %v2259
      %v2268 = vsel %vm2252, %v2244, %v2260
      %v2269 = vsel %vm2253, %v2245, %v2261
      %v2270 = vsel %vm2254, %v2246, %v2262
      %v2271 = vsel %vm2255, %v2247, %v2263
      %v2272 = vsel %vm2256, %v2248, %v2264
      %v2273 = vsel %vm2257, %v2249, %v2265
      %v2274 = vsel %vm2258, %v2250, %v2266
      %v2275 = vadd.f32 %v2267, 1.0
      %v2276 = vadd.f32 %v2268, 1.0
      %v2277 = vadd.f32 %v2269, 1.0
      %v2278 = vadd.f32 %v2270, 1.0
      %v2279 = vadd.f32 %v2271, 1.0
      %v2280 = vadd.f32 %v2272, 1.0
      %v2281 = vadd.f32 %v2273, 1.0
      %v2282 = vadd.f32 %v2274, 1.0
      %v2283 = vmul.f32 %v2083, %v2275
      %v2284 = vmul.f32 %v2084, %v2276
      %v2285 = vmul.f32 %v2085, %v2277
      %v2286 = vmul.f32 %v2086, %v2278
      %v2287 = vmul.f32 %v2087, %v2279
      %v2288 = vmul.f32 %v2088, %v2280
      %v2289 = vmul.f32 %v2089, %v2281
      %v2290 = vmul.f32 %v2090, %v2282
      %v2291 = vld [vmem:[%s15] sm:$0xff]
      %v2292 = vld [vmem:[%s15 + $0x8] sm:$0x1]
      %v2300 = vrot.slane %v2283, 7
      %v2301 = vrot.slane %v2284, 7
      %v2302 = vsel %vm1690, %v2300, %v2301
      %v2303 = vrot.slane %v2285, 7
      %v2304 = vsel %vm1690, %v2301, %v2303
      %v2305 = vrot.slane %v2286, 7
      %v2306 = vsel %vm1690, %v2303, %v2305
      %v2307 = vrot.slane %v2287, 7
      %v2308 = vsel %vm1690, %v2305, %v2307
      %v2309 = vrot.slane %v2288, 7
      %v2310 = vsel %vm1690, %v2307, %v2309
      %v2311 = vrot.slane %v2289, 7
      %v2312 = vsel %vm1690, %v2309, %v2311
      %v2320 = vsel %vm1690, 0.0, %v2300
      %v2321 = vmul.f32 %v2320, %v1720
      %v2322 = vmul.f32 %v2302, %v1725
      %v2323 = vmul.f32 %v2304, %v1730
      %v2324 = vmul.f32 %v2306, %v1735
      %v2325 = vmul.f32 %v2308, %v1740
      %v2326 = vmul.f32 %v2310, %v1745
      %v2327 = vmul.f32 %v2312, %v1750
      %v2328 = vlaneseq
      %v2329 = vshrl.u32 %v2328, 7
      %v2330 = vsub.s32 0, %v2329
      %v2331 = vrot.slane %v2291, %v2330
      %v2332 = vmul.f32 %v1752, %v2331
      %v2333 = vmul.f32 %v2321, %v2331
      %v2334 = vmul.f32 %v2322, %v2331
      %v2335 = vmul.f32 %v2323, %v2331
      %v2336 = vmul.f32 %v2324, %v2331
      %v2337 = vmul.f32 %v2325, %v2331
      %v2338 = vmul.f32 %v2326, %v2331
      %v2339 = vmul.f32 %v2327, %v2331
      %v2340 = vadd.f32 %v2332, 0.0
      %v2341 = vadd.f32 %v2333, 0.0
      %v2342 = vadd.f32 %v2334, 0.0
      %v2343 = vadd.f32 %v2335, 0.0
      %v2344 = vadd.f32 %v2336, 0.0
      %v2345 = vadd.f32 %v2337, 0.0
      %v2346 = vadd.f32 %v2338, 0.0
      %v2347 = vadd.f32 %v2339, 0.0
      %v2348 = vlaneseq
      %v2349 = vshrl.u32 %v2348, 7
      %v2350 = vsub.s32 1, %v2349
      %v2351 = vrot.slane %v2291, %v2350
      %v2352 = vmul.f32 %v2351, 0.0
      %v2353 = vmul.f32 %v2283, %v2351
      %v2354 = vmul.f32 %v2284, %v2351
      %v2355 = vmul.f32 %v2285, %v2351
      %v2356 = vmul.f32 %v2286, %v2351
      %v2357 = vmul.f32 %v2287, %v2351
      %v2358 = vmul.f32 %v2288, %v2351
      %v2359 = vmul.f32 %v2289, %v2351
      %v2360 = vadd.f32 %v2340, %v2352
      %v2361 = vadd.f32 %v2341, %v2353
      %v2362 = vadd.f32 %v2342, %v2354
      %v2363 = vadd.f32 %v2343, %v2355
      %v2364 = vadd.f32 %v2344, %v2356
      %v2365 = vadd.f32 %v2345, %v2357
      %v2366 = vadd.f32 %v2346, %v2358
      %v2367 = vadd.f32 %v2347, %v2359
      %v2369 = vrot.slane %v2283, 1
      %v2370 = vrot.slane %v2284, 1
      %v2371 = vsel %vm1801, %v2369, %v2370
      %v2372 = vrot.slane %v2285, 1
      %v2373 = vsel %vm1801, %v2370, %v2372
      %v2374 = vrot.slane %v2286, 1
      %v2375 = vsel %vm1801, %v2372, %v2374
      %v2376 = vrot.slane %v2287, 1
      %v2377 = vsel %vm1801, %v2374, %v2376
      %v2378 = vrot.slane %v2288, 1
      %v2379 = vsel %vm1801, %v2376, %v2378
      %v2380 = vrot.slane %v2289, 1
      %v2381 = vsel %vm1801, %v2378, %v2380
      %v2382 = vrot.slane %v2290, 1
      %v2383 = vsel %vm1801, %v2380, %v2382
      %v2392 = vsel %vm1801, 0.0, %v2369
      %v2393 = vmul.f32 %v2392, %v1829
      %v2394 = vmul.f32 %v2371, %v1834
      %v2395 = vmul.f32 %v2373, %v1839
      %v2396 = vmul.f32 %v2375, %v1844
      %v2397 = vmul.f32 %v2377, %v1849
      %v2398 = vmul.f32 %v2379, %v1854
      %v2399 = vmul.f32 %v2381, %v1859
      %v2400 = vmul.f32 %v2383, %v1864
      %v2401 = vlaneseq
      %v2402 = vshrl.u32 %v2401, 7
      %v2403 = vsub.s32 2, %v2402
      %v2404 = vrot.slane %v2291, %v2403
      %v2405 = vmul.f32 %v2393, %v2404
      %v2406 = vmul.f32 %v2394, %v2404
      %v2407 = vmul.f32 %v2395, %v2404
      %v2408 = vmul.f32 %v2396, %v2404
      %v2409 = vmul.f32 %v2397, %v2404
      %v2410 = vmul.f32 %v2398, %v2404
      %v2411 = vmul.f32 %v2399, %v2404
      %v2412 = vmul.f32 %v2400, %v2404
      %v2413 = vadd.f32 %v2360, %v2405
      %v2414 = vadd.f32 %v2361, %v2406
      %v2415 = vadd.f32 %v2362, %v2407
      %v2416 = vadd.f32 %v2363, %v2408
      %v2417 = vadd.f32 %v2364, %v2409
      %v2418 = vadd.f32 %v2365, %v2410
      %v2419 = vadd.f32 %v2366, %v2411
      %v2420 = vadd.f32 %v2367, %v2412
      %v2421 = vrot.slane %v2290, 7
      %v2422 = vsel %vm1690, %v2311, %v2421
      %v2424 = vmul.f32 %v2320, %v1715
      %v2425 = vmul.f32 %v2302, %v1720
      %v2426 = vmul.f32 %v2304, %v1725
      %v2427 = vmul.f32 %v2306, %v1730
      %v2428 = vmul.f32 %v2308, %v1735
      %v2429 = vmul.f32 %v2310, %v1740
      %v2430 = vmul.f32 %v2312, %v1745
      %v2431 = vmul.f32 %v2422, %v1750
      %v2432 = vlaneseq
      %v2433 = vshrl.u32 %v2432, 7
      %v2434 = vsub.s32 3, %v2433
      %v2435 = vrot.slane %v2291, %v2434
      %v2436 = vmul.f32 %v2424, %v2435
      %v2437 = vmul.f32 %v2425, %v2435
      %v2438 = vmul.f32 %v2426, %v2435
      %v2439 = vmul.f32 %v2427, %v2435
      %v2440 = vmul.f32 %v2428, %v2435
      %v2441 = vmul.f32 %v2429, %v2435
      %v2442 = vmul.f32 %v2430, %v2435
      %v2443 = vmul.f32 %v2431, %v2435
      %v2444 = vadd.f32 %v2413, %v2436
      %v2445 = vadd.f32 %v2414, %v2437
      %v2446 = vadd.f32 %v2415, %v2438
      %v2447 = vadd.f32 %v2416, %v2439
      %v2448 = vadd.f32 %v2417, %v2440
      %v2449 = vadd.f32 %v2418, %v2441
      %v2450 = vadd.f32 %v2419, %v2442
      %v2451 = vadd.f32 %v2420, %v2443
      %v2452 = vlaneseq
      %v2453 = vshrl.u32 %v2452, 7
      %v2454 = vsub.s32 4, %v2453
      %v2455 = vrot.slane %v2291, %v2454
      %v2456 = vmul.f32 %v2283, %v2455
      %v2457 = vmul.f32 %v2284, %v2455
      %v2458 = vmul.f32 %v2285, %v2455
      %v2459 = vmul.f32 %v2286, %v2455
      %v2460 = vmul.f32 %v2287, %v2455
      %v2461 = vmul.f32 %v2288, %v2455
      %v2462 = vmul.f32 %v2289, %v2455
      %v2463 = vmul.f32 %v2290, %v2455
      %v2464 = vadd.f32 %v2444, %v2456
      %v2465 = vadd.f32 %v2445, %v2457
      %v2466 = vadd.f32 %v2446, %v2458
      %v2467 = vadd.f32 %v2447, %v2459
      %v2468 = vadd.f32 %v2448, %v2460
      %v2469 = vadd.f32 %v2449, %v2461
      %v2470 = vadd.f32 %v2450, %v2462
      %v2471 = vadd.f32 %v2451, %v2463
      %v2473 = vsel %vm1801, %v2382, 0.0
      %v2474 = vmul.f32 %v2371, %v1829
      %v2475 = vmul.f32 %v2373, %v1834
      %v2476 = vmul.f32 %v2375, %v1839
      %v2477 = vmul.f32 %v2377, %v1844
      %v2478 = vmul.f32 %v2379, %v1849
      %v2479 = vmul.f32 %v2381, %v1854
      %v2480 = vmul.f32 %v2383, %v1859
      %v2481 = vmul.f32 %v2473, %v1864
      %v2482 = vlaneseq
      %v2483 = vshrl.u32 %v2482, 7
      %v2484 = vsub.s32 5, %v2483
      %v2485 = vrot.slane %v2291, %v2484
      %v2486 = vmul.f32 %v2474, %v2485
      %v2487 = vmul.f32 %v2475, %v2485
      %v2488 = vmul.f32 %v2476, %v2485
      %v2489 = vmul.f32 %v2477, %v2485
      %v2490 = vmul.f32 %v2478, %v2485
      %v2491 = vmul.f32 %v2479, %v2485
      %v2492 = vmul.f32 %v2480, %v2485
      %v2493 = vmul.f32 %v2481, %v2485
      %v2494 = vadd.f32 %v2464, %v2486
      %v2495 = vadd.f32 %v2465, %v2487
      %v2496 = vadd.f32 %v2466, %v2488
      %v2497 = vadd.f32 %v2467, %v2489
      %v2498 = vadd.f32 %v2468, %v2490
      %v2499 = vadd.f32 %v2469, %v2491
      %v2500 = vadd.f32 %v2470, %v2492
      %v2501 = vadd.f32 %v2471, %v2493
      %v2503 = vsel %vm1690, %v2421, 0.0
      %v2504 = vmul.f32 %v2302, %v1715
      %v2505 = vmul.f32 %v2304, %v1720
      %v2506 = vmul.f32 %v2306, %v1725
      %v2507 = vmul.f32 %v2308, %v1730
      %v2508 = vmul.f32 %v2310, %v1735
      %v2509 = vmul.f32 %v2312, %v1740
      %v2510 = vmul.f32 %v2422, %v1745
      %v2511 = vmul.f32 %v2503, %v1750
      %v2512 = vlaneseq
      %v2513 = vshrl.u32 %v2512, 7
      %v2514 = vsub.s32 6, %v2513
      %v2515 = vrot.slane %v2291, %v2514
      %v2516 = vmul.f32 %v2504, %v2515
      %v2517 = vmul.f32 %v2505, %v2515
      %v2518 = vmul.f32 %v2506, %v2515
      %v2519 = vmul.f32 %v2507, %v2515
      %v2520 = vmul.f32 %v2508, %v2515
      %v2521 = vmul.f32 %v2509, %v2515
      %v2522 = vmul.f32 %v2510, %v2515
      %v2523 = vmul.f32 %v2511, %v2515
      %v2524 = vadd.f32 %v2494, %v2516
      %v2525 = vadd.f32 %v2495, %v2517
      %v2526 = vadd.f32 %v2496, %v2518
      %v2527 = vadd.f32 %v2497, %v2519
      %v2528 = vadd.f32 %v2498, %v2520
      %v2529 = vadd.f32 %v2499, %v2521
      %v2530 = vadd.f32 %v2500, %v2522
      %v2531 = vadd.f32 %v2501, %v2523
      %v2532 = vlaneseq
      %v2533 = vshrl.u32 %v2532, 7
      %v2534 = vsub.s32 7, %v2533
      %v2535 = vrot.slane %v2291, %v2534
      %v2536 = vmul.f32 %v2284, %v2535
      %v2537 = vmul.f32 %v2285, %v2535
      %v2538 = vmul.f32 %v2286, %v2535
      %v2539 = vmul.f32 %v2287, %v2535
      %v2540 = vmul.f32 %v2288, %v2535
      %v2541 = vmul.f32 %v2289, %v2535
      %v2542 = vmul.f32 %v2290, %v2535
      %v2543 = vmul.f32 %v2535, 0.0
      %v2544 = vadd.f32 %v2524, %v2536
      %v2545 = vadd.f32 %v2525, %v2537
      %v2546 = vadd.f32 %v2526, %v2538
      %v2547 = vadd.f32 %v2527, %v2539
      %v2548 = vadd.f32 %v2528, %v2540
      %v2549 = vadd.f32 %v2529, %v2541
      %v2550 = vadd.f32 %v2530, %v2542
      %v2551 = vadd.f32 %v2531, %v2543
      %v2552 = vmul.f32 %v2373, %v1829
      %v2553 = vmul.f32 %v2375, %v1834
      %v2554 = vmul.f32 %v2377, %v1839
      %v2555 = vmul.f32 %v2379, %v1844
      %v2556 = vmul.f32 %v2381, %v1849
      %v2557 = vmul.f32 %v2383, %v1854
      %v2558 = vmul.f32 %v2473, %v1859
      %v2559 = vlaneseq
      %v2560 = vshrl.u32 %v2559, 7
      %v2561 = vsub.s32 0, %v2560
      %v2562 = vrot.slane %v2292, %v2561
      %v2563 = vmul.f32 %v2552, %v2562
      %v2564 = vmul.f32 %v2553, %v2562
      %v2565 = vmul.f32 %v2554, %v2562
      %v2566 = vmul.f32 %v2555, %v2562
      %v2567 = vmul.f32 %v2556, %v2562
      %v2568 = vmul.f32 %v2557, %v2562
      %v2569 = vmul.f32 %v2558, %v2562
      %v2570 = vmul.f32 %v2032, %v2562
      %v2571 = vadd.f32 %v2544, %v2563
      %v2572 = vadd.f32 %v2545, %v2564
      %v2573 = vadd.f32 %v2546, %v2565
      %v2574 = vadd.f32 %v2547, %v2566
      %v2575 = vadd.f32 %v2548, %v2567
      %v2576 = vadd.f32 %v2549, %v2568
      %v2577 = vadd.f32 %v2550, %v2569
      %v2578 = vadd.f32 %v2551, %v2570
      %v2579 = vld [vmem:[%s16] sm:$0x1]
      %v2581 = vlaneseq
      %v2582 = vshrl.u32 %v2581, 7
      %v2583 = vsub.s32 0, %v2582
      %v2584 = vrot.slane %v2579, %v2583
      %v2586 = vadd.f32 %v2571, %v2584
      %v2587 = vadd.f32 %v2572, %v2584
      %v2588 = vadd.f32 %v2573, %v2584
      %v2589 = vadd.f32 %v2574, %v2584
      %v2590 = vadd.f32 %v2575, %v2584
      %v2591 = vadd.f32 %v2576, %v2584
      %v2592 = vadd.f32 %v2577, %v2584
      %v2593 = vadd.f32 %v2578, %v2584
      %v2594 = vld [vmem:[%s17] sm:$0x1]
      %v2596 = vlaneseq
      %v2597 = vshrl.u32 %v2596, 7
      %v2598 = vsub.s32 0, %v2597
      %v2599 = vrot.slane %v2594, %v2598
      %v2601 = vmul.f32 %v2599, %v2586
      %v2602 = vmul.f32 %v2599, %v2587
      %v2603 = vmul.f32 %v2599, %v2588
      %v2604 = vmul.f32 %v2599, %v2589
      %v2605 = vmul.f32 %v2599, %v2590
      %v2606 = vmul.f32 %v2599, %v2591
      %v2607 = vmul.f32 %v2599, %v2592
      %v2608 = vmul.f32 %v2599, %v2593
      %v2609 = vadd.f32 %v1523, %v2601
      %v2610 = vadd.f32 %v1524, %v2602
      %v2611 = vadd.f32 %v1525, %v2603
      %v2612 = vadd.f32 %v1526, %v2604
      %v2613 = vadd.f32 %v1527, %v2605
      %v2614 = vadd.f32 %v1528, %v2606
      %v2615 = vadd.f32 %v1529, %v2607
      %v2616 = vadd.f32 %v1530, %v2608
      %v2617 = vld [vmem:[%s18] sm:$0x1]
      %v2618 = vld [vmem:[%s19] sm:$0x1]
      %v2619 = vsel %vm830, %v2609, 0.0
      %2620 = vadd.xlane.f32.xlu0 %v2619
      %v2621 = vpop.xlane.xlu0 %2620
      %v2622 = vsel %vm830, %v2610, 0.0
      %2623 = vadd.xlane.f32.xlu0 %v2622
      %v2624 = vpop.xlane.xlu0 %2623
      %v2625 = vsel %vm830, %v2611, 0.0
      %2626 = vadd.xlane.f32.xlu0 %v2625
      %v2627 = vpop.xlane.xlu0 %2626
      %v2628 = vsel %vm830, %v2612, 0.0
      %2629 = vadd.xlane.f32.xlu0 %v2628
      %v2630 = vpop.xlane.xlu0 %2629
      %v2631 = vsel %vm830, %v2613, 0.0
      %2632 = vadd.xlane.f32.xlu0 %v2631
      %v2633 = vpop.xlane.xlu0 %2632
      %v2634 = vsel %vm830, %v2614, 0.0
      %2635 = vadd.xlane.f32.xlu0 %v2634
      %v2636 = vpop.xlane.xlu0 %2635
      %v2637 = vsel %vm830, %v2615, 0.0
      %2638 = vadd.xlane.f32.xlu0 %v2637
      %v2639 = vpop.xlane.xlu0 %2638
      %v2640 = vsel %vm830, %v2616, 0.0
      %2641 = vadd.xlane.f32.xlu0 %v2640
      %v2642 = vpop.xlane.xlu0 %2641
      %v2643 = vmul.f32 %v2621, %v855
      %v2644 = vmul.f32 %v2624, %v855
      %v2645 = vmul.f32 %v2627, %v855
      %v2646 = vmul.f32 %v2630, %v855
      %v2647 = vmul.f32 %v2633, %v855
      %v2648 = vmul.f32 %v2636, %v855
      %v2649 = vmul.f32 %v2639, %v855
      %v2650 = vmul.f32 %v2642, %v855
      %v2651 = vsub.f32 %v2609, %v2643
      %v2652 = vsub.f32 %v2610, %v2644
      %v2653 = vsub.f32 %v2611, %v2645
      %v2654 = vsub.f32 %v2612, %v2646
      %v2655 = vsub.f32 %v2613, %v2647
      %v2656 = vsub.f32 %v2614, %v2648
      %v2657 = vsub.f32 %v2615, %v2649
      %v2658 = vsub.f32 %v2616, %v2650
      %v2659 = vmul.f32 %v2651, %v2651
      %v2660 = vmul.f32 %v2652, %v2652
      %v2661 = vmul.f32 %v2653, %v2653
      %v2662 = vmul.f32 %v2654, %v2654
      %v2663 = vmul.f32 %v2655, %v2655
      %v2664 = vmul.f32 %v2656, %v2656
      %v2665 = vmul.f32 %v2657, %v2657
      %v2666 = vmul.f32 %v2658, %v2658
      %v2667 = vsel %vm830, %v2659, 0.0
      %2668 = vadd.xlane.f32.xlu0 %v2667
      %v2669 = vpop.xlane.xlu0 %2668
      %v2670 = vsel %vm830, %v2660, 0.0
      %2671 = vadd.xlane.f32.xlu0 %v2670
      %v2672 = vpop.xlane.xlu0 %2671
      %v2673 = vsel %vm830, %v2661, 0.0
      %2674 = vadd.xlane.f32.xlu0 %v2673
      %v2675 = vpop.xlane.xlu0 %2674
      %v2676 = vsel %vm830, %v2662, 0.0
      %2677 = vadd.xlane.f32.xlu0 %v2676
      %v2678 = vpop.xlane.xlu0 %2677
      %v2679 = vsel %vm830, %v2663, 0.0
      %2680 = vadd.xlane.f32.xlu0 %v2679
      %v2681 = vpop.xlane.xlu0 %2680
      %v2682 = vsel %vm830, %v2664, 0.0
      %2683 = vadd.xlane.f32.xlu0 %v2682
      %v2684 = vpop.xlane.xlu0 %2683
      %v2685 = vsel %vm830, %v2665, 0.0
      %2686 = vadd.xlane.f32.xlu0 %v2685
      %v2687 = vpop.xlane.xlu0 %2686
      %v2688 = vsel %vm830, %v2666, 0.0
      %2689 = vadd.xlane.f32.xlu0 %v2688
      %v2690 = vpop.xlane.xlu0 %2689
      %v2691 = vmul.f32 %v2669, %v855
      %v2692 = vmul.f32 %v2672, %v855
      %v2693 = vmul.f32 %v2675, %v855
      %v2694 = vmul.f32 %v2678, %v855
      %v2695 = vmul.f32 %v2681, %v855
      %v2696 = vmul.f32 %v2684, %v855
      %v2697 = vmul.f32 %v2687, %v855
      %v2698 = vmul.f32 %v2690, %v855
      %v2699 = vadd.f32 %v2691, 1e-05
      %v2700 = vadd.f32 %v2692, 1e-05
      %v2701 = vadd.f32 %v2693, 1e-05
      %v2702 = vadd.f32 %v2694, 1e-05
      %v2703 = vadd.f32 %v2695, 1e-05
      %v2704 = vadd.f32 %v2696, 1e-05
      %v2705 = vadd.f32 %v2697, 1e-05
      %v2706 = vadd.f32 %v2698, 1e-05
      %v2707 = vrsqrt.pop %v2699
      %v2708 = vrsqrt.pop %v2700
      %v2709 = vrsqrt.pop %v2701
      %v2710 = vrsqrt.pop %v2702
      %v2711 = vrsqrt.pop %v2703
      %v2712 = vrsqrt.pop %v2704
      %v2713 = vrsqrt.pop %v2705
      %v2714 = vrsqrt.pop %v2706
      %v2715 = vmul.f32 %v2651, %v2707
      %v2716 = vmul.f32 %v2652, %v2708
      %v2717 = vmul.f32 %v2653, %v2709
      %v2718 = vmul.f32 %v2654, %v2710
      %v2719 = vmul.f32 %v2655, %v2711
      %v2720 = vmul.f32 %v2656, %v2712
      %v2721 = vmul.f32 %v2657, %v2713
      %v2722 = vmul.f32 %v2658, %v2714
      %v2724 = vlaneseq
      %v2725 = vshrl.u32 %v2724, 7
      %v2726 = vsub.s32 0, %v2725
      %v2727 = vrot.slane %v2617, %v2726
      %v2729 = vmul.f32 %v2715, %v2727
      %v2730 = vmul.f32 %v2716, %v2727
      %v2731 = vmul.f32 %v2717, %v2727
      %v2732 = vmul.f32 %v2718, %v2727
      %v2733 = vmul.f32 %v2719, %v2727
      %v2734 = vmul.f32 %v2720, %v2727
      %v2735 = vmul.f32 %v2721, %v2727
      %v2736 = vmul.f32 %v2722, %v2727
      %v2738 = vlaneseq
      %v2739 = vshrl.u32 %v2738, 7
      %v2740 = vsub.s32 0, %v2739
      %v2741 = vrot.slane %v2618, %v2740
      %v2743 = vadd.f32 %v2729, %v2741
      %v2744 = vadd.f32 %v2730, %v2741
      %v2745 = vadd.f32 %v2731, %v2741
      %v2746 = vadd.f32 %v2732, %v2741
      %v2747 = vadd.f32 %v2733, %v2741
      %v2748 = vadd.f32 %v2734, %v2741
      %v2749 = vadd.f32 %v2735, %v2741
      %v2750 = vadd.f32 %v2736, %v2741
      %v2751 = vpack.c.bf16 %v2744, %v2743
      %v2752 = vpack.c.bf16 %v2746, %v2745
      %v2753 = vpack.c.bf16 %v2748, %v2747
      %v2754 = vpack.c.bf16 %v2750, %v2749
      %v2755 = vld [vmem:[%s20] sm:$0xf]
      %v2756 = vld [vmem:[%s20 + $0x4] sm:$0xf]
      %v2757 = vld [vmem:[%s20 + $0x8] sm:$0xf]
      %v2758 = vld [vmem:[%s20 + $0xc] sm:$0xf]
      %v2759 = vld [vmem:[%s21] sm:$0x1]
      %v2761 = vlaneseq
      %v2762 = vshrl.u32 %v2761, 7
      %v2763 = vsub.s32 0, %v2762
      %v2764 = vrot.slane %v2759, %v2763
      %v2770 = vunpack.c.l.b16 %v2755
      %v2771 = vunpack.c.l.b16 %v2756
      %v2772 = vunpack.c.l.b16 %v2757
      %v2773 = vunpack.c.l.b16 %v2758
      %v2774 = vpack.c.b16 %v2771, %v2770
      %v2775 = vpack.c.b16 %v2773, %v2772
      %v2779 = vsel %vm830, %v2751, 0
      %v2782 = vsel %vm830, %v2752, 0
      %v2785 = vsel %vm830, %v2753, 0
      %v2788 = vsel %vm830, %v2754, 0
      %2790 = vmatprep.subr.bf16.mxu0 0
      %2791 = vmatpush1.bf16.msra.mxu0 0
      %2792 = vmatprep.subr.bf16.mxu0 0
      %2793 = vmatpush1.bf16.msra.mxu0 0
      %2794 = vmatprep.subr.bf16.mxu0 0
      %2795 = vmatpush1.bf16.msra.mxu0 0
      %2796 = vmatprep.subr.bf16.mxu0 0
      %2797 = vmatpush1.bf16.msra.mxu0 0
      %2798 = vmatprep.subr.bf16.mxu0 0
      %2799 = vmatpush1.bf16.msra.mxu0 0
      %2800 = vmatprep.subr.bf16.mxu0 0
      %2801 = vmatpush1.bf16.msra.mxu0 0
      %2802 = vmatprep.subr.bf16.mxu0 0
      %2803 = vmatpush1.bf16.msra.mxu0 %v2775
      %2804 = vmatprep.subr.bf16.mxu0 0
      %2805 = vmatpush1.bf16.msra.mxu0 %v2774
      %2806 = vmatprep.subr.bf16.mxu0 0
      %2807 = vmatpush2.bf16.msra.mxu0 0
      %2808 = vmatprep.subr.bf16.mxu0 0
      %2809 = vmatpush2.bf16.msra.mxu0 0
      %2810 = vmatprep.subr.bf16.mxu0 0
      %2811 = vmatpush2.bf16.msra.mxu0 0
      %2812 = vmatprep.subr.bf16.mxu0 0
      %2813 = vmatpush2.bf16.msra.mxu0 0
      %2814 = vmatprep.subr.bf16.mxu0 0
      %2815 = vmatpush2.bf16.msra.mxu0 0
      %2816 = vmatprep.subr.bf16.mxu0 0
      %2817 = vmatpush2.bf16.msra.mxu0 0
      %2818 = vmatprep.subr.bf16.mxu0 0
      %2819 = vmatpush2.bf16.msra.mxu0 0
      %2820 = vmatprep.subr.bf16.mxu0 0
      %2821 = vmatpush2.bf16.msra.mxu0 0
      %2822 = vmatprep.mubr.bf16.mxu0 0
      %2823 = vmatmul.mubr.bf16.gmra.mxu0 %v2779
      %v2824 = vpop.f32.mrf.mxu0
      %v2825 = vadd.f32 %v2764, %v2824
      %v2826 = vpop.f32.mrf.mxu0
      %v2827 = vpop.f32.mrf.mxu0
      %v2828 = vadd.f32 %v2764, %v2827
      %v2829 = vpop.f32.mrf.mxu0
      %2830 = vmatprep.mubr.bf16.mxu0 0
      %2831 = vmatmul.mubr.bf16.gmra.mxu0 %v2782
      %v2832 = vpop.f32.mrf.mxu0
      %v2833 = vadd.f32 %v2764, %v2832
      %v2834 = vpop.f32.mrf.mxu0
      %v2835 = vpop.f32.mrf.mxu0
      %v2836 = vadd.f32 %v2764, %v2835
      %v2837 = vpop.f32.mrf.mxu0
      %2838 = vmatprep.mubr.bf16.mxu0 0
      %2839 = vmatmul.mubr.bf16.gmra.mxu0 %v2785
      %v2840 = vpop.f32.mrf.mxu0
      %v2841 = vadd.f32 %v2764, %v2840
      %v2842 = vpop.f32.mrf.mxu0
      %v2843 = vpop.f32.mrf.mxu0
      %v2844 = vadd.f32 %v2764, %v2843
      %v2845 = vpop.f32.mrf.mxu0
      %2846 = vmatprep.mubr.bf16.mxu0 0
      %2847 = vmatmul.mubr.bf16.gmra.mxu0 %v2788
      %v2848 = vpop.f32.mrf.mxu0
      %v2849 = vadd.f32 %v2764, %v2848
      %v2850 = vpop.f32.mrf.mxu0
      %v2851 = vpop.f32.mrf.mxu0
      %v2852 = vadd.f32 %v2764, %v2851
      %v2853 = vpop.f32.mrf.mxu0
      %2854 = vdwg.mxu0
      %v2855 = vmul.f32 %v2825, 0.5
      %v2856 = vmul.f32 %v2828, 0.5
      %v2857 = vmul.f32 %v2833, 0.5
      %v2858 = vmul.f32 %v2836, 0.5
      %v2859 = vmul.f32 %v2841, 0.5
      %v2860 = vmul.f32 %v2844, 0.5
      %v2861 = vmul.f32 %v2849, 0.5
      %v2862 = vmul.f32 %v2852, 0.5
      %v2863 = vmul.f32 %v2825, 0.70710677
      %v2864 = vmul.f32 %v2828, 0.70710677
      %v2865 = vmul.f32 %v2833, 0.70710677
      %v2866 = vmul.f32 %v2836, 0.70710677
      %v2867 = vmul.f32 %v2841, 0.70710677
      %v2868 = vmul.f32 %v2844, 0.70710677
      %v2869 = vmul.f32 %v2849, 0.70710677
      %v2870 = vmul.f32 %v2852, 0.70710677
      %v2871 = vand.u32 2147483647, %v2863
      %v2872 = vand.u32 2147483647, %v2864
      %v2873 = vand.u32 2147483647, %v2865
      %v2874 = vand.u32 2147483647, %v2866
      %v2875 = vand.u32 2147483647, %v2867
      %v2876 = vand.u32 2147483647, %v2868
      %v2877 = vand.u32 2147483647, %v2869
      %v2878 = vand.u32 2147483647, %v2870
      %v2879 = vmul.f32 %v2871, 0.3275911
      %v2880 = vmul.f32 %v2872, 0.3275911
      %v2881 = vmul.f32 %v2873, 0.3275911
      %v2882 = vmul.f32 %v2874, 0.3275911
      %v2883 = vmul.f32 %v2875, 0.3275911
      %v2884 = vmul.f32 %v2876, 0.3275911
      %v2885 = vmul.f32 %v2877, 0.3275911
      %v2886 = vmul.f32 %v2878, 0.3275911
      %v2887 = vadd.f32 %v2879, 1.0
      %v2888 = vadd.f32 %v2880, 1.0
      %v2889 = vadd.f32 %v2881, 1.0
      %v2890 = vadd.f32 %v2882, 1.0
      %v2891 = vadd.f32 %v2883, 1.0
      %v2892 = vadd.f32 %v2884, 1.0
      %v2893 = vadd.f32 %v2885, 1.0
      %v2894 = vadd.f32 %v2886, 1.0
      %v2895 = vrcp.pop %v2887
      %v2896 = vrcp.pop %v2888
      %v2897 = vrcp.pop %v2889
      %v2898 = vrcp.pop %v2890
      %v2899 = vrcp.pop %v2891
      %v2900 = vrcp.pop %v2892
      %v2901 = vrcp.pop %v2893
      %v2902 = vrcp.pop %v2894
      %v2903 = vmul.f32 %v2895, 1.0614054
      %v2904 = vmul.f32 %v2896, 1.0614054
      %v2905 = vmul.f32 %v2897, 1.0614054
      %v2906 = vmul.f32 %v2898, 1.0614054
      %v2907 = vmul.f32 %v2899, 1.0614054
      %v2908 = vmul.f32 %v2900, 1.0614054
      %v2909 = vmul.f32 %v2901, 1.0614054
      %v2910 = vmul.f32 %v2902, 1.0614054
      %v2911 = vadd.f32 %v2903, -1.4531521
      %v2912 = vadd.f32 %v2904, -1.4531521
      %v2913 = vadd.f32 %v2905, -1.4531521
      %v2914 = vadd.f32 %v2906, -1.4531521
      %v2915 = vadd.f32 %v2907, -1.4531521
      %v2916 = vadd.f32 %v2908, -1.4531521
      %v2917 = vadd.f32 %v2909, -1.4531521
      %v2918 = vadd.f32 %v2910, -1.4531521
      %v2919 = vmul.f32 %v2895, %v2911
      %v2920 = vmul.f32 %v2896, %v2912
      %v2921 = vmul.f32 %v2897, %v2913
      %v2922 = vmul.f32 %v2898, %v2914
      %v2923 = vmul.f32 %v2899, %v2915
      %v2924 = vmul.f32 %v2900, %v2916
      %v2925 = vmul.f32 %v2901, %v2917
      %v2926 = vmul.f32 %v2902, %v2918
      %v2927 = vadd.f32 %v2919, 1.4214138
      %v2928 = vadd.f32 %v2920, 1.4214138
      %v2929 = vadd.f32 %v2921, 1.4214138
      %v2930 = vadd.f32 %v2922, 1.4214138
      %v2931 = vadd.f32 %v2923, 1.4214138
      %v2932 = vadd.f32 %v2924, 1.4214138
      %v2933 = vadd.f32 %v2925, 1.4214138
      %v2934 = vadd.f32 %v2926, 1.4214138
      %v2935 = vmul.f32 %v2895, %v2927
      %v2936 = vmul.f32 %v2896, %v2928
      %v2937 = vmul.f32 %v2897, %v2929
      %v2938 = vmul.f32 %v2898, %v2930
      %v2939 = vmul.f32 %v2899, %v2931
      %v2940 = vmul.f32 %v2900, %v2932
      %v2941 = vmul.f32 %v2901, %v2933
      %v2942 = vmul.f32 %v2902, %v2934
      %v2943 = vadd.f32 %v2935, -0.28449672
      %v2944 = vadd.f32 %v2936, -0.28449672
      %v2945 = vadd.f32 %v2937, -0.28449672
      %v2946 = vadd.f32 %v2938, -0.28449672
      %v2947 = vadd.f32 %v2939, -0.28449672
      %v2948 = vadd.f32 %v2940, -0.28449672
      %v2949 = vadd.f32 %v2941, -0.28449672
      %v2950 = vadd.f32 %v2942, -0.28449672
      %v2951 = vmul.f32 %v2895, %v2943
      %v2952 = vmul.f32 %v2896, %v2944
      %v2953 = vmul.f32 %v2897, %v2945
      %v2954 = vmul.f32 %v2898, %v2946
      %v2955 = vmul.f32 %v2899, %v2947
      %v2956 = vmul.f32 %v2900, %v2948
      %v2957 = vmul.f32 %v2901, %v2949
      %v2958 = vmul.f32 %v2902, %v2950
      %v2959 = vadd.f32 %v2951, 0.2548296
      %v2960 = vadd.f32 %v2952, 0.2548296
      %v2961 = vadd.f32 %v2953, 0.2548296
      %v2962 = vadd.f32 %v2954, 0.2548296
      %v2963 = vadd.f32 %v2955, 0.2548296
      %v2964 = vadd.f32 %v2956, 0.2548296
      %v2965 = vadd.f32 %v2957, 0.2548296
      %v2966 = vadd.f32 %v2958, 0.2548296
      %v2967 = vmul.f32 %v2895, %v2959
      %v2968 = vmul.f32 %v2896, %v2960
      %v2969 = vmul.f32 %v2897, %v2961
      %v2970 = vmul.f32 %v2898, %v2962
      %v2971 = vmul.f32 %v2899, %v2963
      %v2972 = vmul.f32 %v2900, %v2964
      %v2973 = vmul.f32 %v2901, %v2965
      %v2974 = vmul.f32 %v2902, %v2966
      %v2975 = vsub.f32 0.0, %v2871
      %v2976 = vsub.f32 0.0, %v2872
      %v2977 = vsub.f32 0.0, %v2873
      %v2978 = vsub.f32 0.0, %v2874
      %v2979 = vsub.f32 0.0, %v2875
      %v2980 = vsub.f32 0.0, %v2876
      %v2981 = vsub.f32 0.0, %v2877
      %v2982 = vsub.f32 0.0, %v2878
      %v2983 = vmul.f32 %v2975, %v2871
      %v2984 = vmul.f32 %v2976, %v2872
      %v2985 = vmul.f32 %v2977, %v2873
      %v2986 = vmul.f32 %v2978, %v2874
      %v2987 = vmul.f32 %v2979, %v2875
      %v2988 = vmul.f32 %v2980, %v2876
      %v2989 = vmul.f32 %v2981, %v2877
      %v2990 = vmul.f32 %v2982, %v2878
      %v2991 = vmul.f32 %v2983, 1.442695
      %v2992 = vpow.pop %v2991
      %v2993 = vmul.f32 %v2984, 1.442695
      %v2994 = vpow.pop %v2993
      %v2995 = vmul.f32 %v2985, 1.442695
      %v2996 = vpow.pop %v2995
      %v2997 = vmul.f32 %v2986, 1.442695
      %v2998 = vpow.pop %v2997
      %v2999 = vmul.f32 %v2987, 1.442695
      %v3000 = vpow.pop %v2999
      %v3001 = vmul.f32 %v2988, 1.442695
      %v3002 = vpow.pop %v3001
      %v3003 = vmul.f32 %v2989, 1.442695
      %v3004 = vpow.pop %v3003
      %v3005 = vmul.f32 %v2990, 1.442695
      %v3006 = vpow.pop %v3005
      %v3007 = vmul.f32 %v2967, %v2992
      %v3008 = vmul.f32 %v2968, %v2994
      %v3009 = vmul.f32 %v2969, %v2996
      %v3010 = vmul.f32 %v2970, %v2998
      %v3011 = vmul.f32 %v2971, %v3000
      %v3012 = vmul.f32 %v2972, %v3002
      %v3013 = vmul.f32 %v2973, %v3004
      %v3014 = vmul.f32 %v2974, %v3006
      %v3015 = vsub.f32 1.0, %v3007
      %v3016 = vsub.f32 1.0, %v3008
      %v3017 = vsub.f32 1.0, %v3009
      %v3018 = vsub.f32 1.0, %v3010
      %v3019 = vsub.f32 1.0, %v3011
      %v3020 = vsub.f32 1.0, %v3012
      %v3021 = vsub.f32 1.0, %v3013
      %v3022 = vsub.f32 1.0, %v3014
      %vm3023 = vcmp.ge.f32.partialorder %v2863, 0.0
      %vm3024 = vcmp.ge.f32.partialorder %v2864, 0.0
      %vm3025 = vcmp.ge.f32.partialorder %v2865, 0.0
      %vm3026 = vcmp.ge.f32.partialorder %v2866, 0.0
      %vm3027 = vcmp.ge.f32.partialorder %v2867, 0.0
      %vm3028 = vcmp.ge.f32.partialorder %v2868, 0.0
      %vm3029 = vcmp.ge.f32.partialorder %v2869, 0.0
      %vm3030 = vcmp.ge.f32.partialorder %v2870, 0.0
      %v3031 = vsub.f32 0.0, %v3015
      %v3032 = vsub.f32 0.0, %v3016
      %v3033 = vsub.f32 0.0, %v3017
      %v3034 = vsub.f32 0.0, %v3018
      %v3035 = vsub.f32 0.0, %v3019
      %v3036 = vsub.f32 0.0, %v3020
      %v3037 = vsub.f32 0.0, %v3021
      %v3038 = vsub.f32 0.0, %v3022
      %v3039 = vsel %vm3023, %v3015, %v3031
      %v3040 = vsel %vm3024, %v3016, %v3032
      %v3041 = vsel %vm3025, %v3017, %v3033
      %v3042 = vsel %vm3026, %v3018, %v3034
      %v3043 = vsel %vm3027, %v3019, %v3035
      %v3044 = vsel %vm3028, %v3020, %v3036
      %v3045 = vsel %vm3029, %v3021, %v3037
      %v3046 = vsel %vm3030, %v3022, %v3038
      %v3047 = vadd.f32 %v3039, 1.0
      %v3048 = vadd.f32 %v3040, 1.0
      %v3049 = vadd.f32 %v3041, 1.0
      %v3050 = vadd.f32 %v3042, 1.0
      %v3051 = vadd.f32 %v3043, 1.0
      %v3052 = vadd.f32 %v3044, 1.0
      %v3053 = vadd.f32 %v3045, 1.0
      %v3054 = vadd.f32 %v3046, 1.0
      %v3055 = vmul.f32 %v2855, %v3047
      %v3056 = vmul.f32 %v2856, %v3048
      %v3057 = vmul.f32 %v2857, %v3049
      %v3058 = vmul.f32 %v2858, %v3050
      %v3059 = vmul.f32 %v2859, %v3051
      %v3060 = vmul.f32 %v2860, %v3052
      %v3061 = vmul.f32 %v2861, %v3053
      %v3062 = vmul.f32 %v2862, %v3054
      %v3063 = vpack.c.bf16 %v3056, %v3055
      %v3064 = vpack.c.bf16 %v3058, %v3057
      %v3065 = vpack.c.bf16 %v3060, %v3059
      %v3066 = vpack.c.bf16 %v3062, %v3061
      %v3067 = vld [vmem:[%s22] sm:$0xf]
      %v3068 = vld [vmem:[%s22 + $0x4] sm:$0xf]
      %v3069 = vld [vmem:[%s22 + $0x8] sm:$0xf]
      %v3070 = vld [vmem:[%s22 + $0xc] sm:$0xf]
      %v3071 = vld [vmem:[%s22 + $0x10] sm:$0xf]
      %v3072 = vld [vmem:[%s22 + $0x14] sm:$0xf]
      %v3073 = vld [vmem:[%s22 + $0x18] sm:$0xf]
      %v3074 = vld [vmem:[%s22 + $0x1c] sm:$0xf]
      %v3075 = vld [vmem:[%s22 + $0x20] sm:$0xf]
      %v3076 = vld [vmem:[%s22 + $0x24] sm:$0xf]
      %v3077 = vld [vmem:[%s22 + $0x28] sm:$0xf]
      %v3078 = vld [vmem:[%s22 + $0x2c] sm:$0xf]
      %v3079 = vld [vmem:[%s22 + $0x30] sm:$0xf]
      %v3080 = vld [vmem:[%s22 + $0x34] sm:$0xf]
      %v3081 = vld [vmem:[%s22 + $0x38] sm:$0xf]
      %v3082 = vld [vmem:[%s22 + $0x3c] sm:$0xf]
      %v3083 = vld [vmem:[%s23] sm:$0x1]
      %v3085 = vlaneseq
      %v3086 = vshrl.u32 %v3085, 7
      %v3087 = vsub.s32 0, %v3086
      %v3088 = vrot.slane %v3083, %v3087
      %v3106 = vunpack.c.l.b16 %v3067
      %v3107 = vunpack.c.l.b16 %v3068
      %v3108 = vunpack.c.l.b16 %v3069
      %v3109 = vunpack.c.l.b16 %v3070
      %v3110 = vunpack.c.l.b16 %v3071
      %v3111 = vunpack.c.l.b16 %v3072
      %v3112 = vunpack.c.l.b16 %v3073
      %v3113 = vunpack.c.l.b16 %v3074
      %v3114 = vunpack.c.l.b16 %v3075
      %v3115 = vunpack.c.l.b16 %v3076
      %v3116 = vunpack.c.l.b16 %v3077
      %v3117 = vunpack.c.l.b16 %v3078
      %v3118 = vunpack.c.l.b16 %v3079
      %v3119 = vunpack.c.l.b16 %v3080
      %v3120 = vunpack.c.l.b16 %v3081
      %v3121 = vunpack.c.l.b16 %v3082
      %v3122 = vpack.c.b16 %v3107, %v3106
      %v3123 = vpack.c.b16 %v3109, %v3108
      %v3124 = vpack.c.b16 %v3111, %v3110
      %v3125 = vpack.c.b16 %v3113, %v3112
      %v3126 = vpack.c.b16 %v3115, %v3114
      %v3127 = vpack.c.b16 %v3117, %v3116
      %v3128 = vpack.c.b16 %v3119, %v3118
      %v3129 = vpack.c.b16 %v3121, %v3120
      %3138 = vmatprep.subr.bf16.mxu0 0
      %3139 = vmatpush1.bf16.msra.mxu0 %v3129
      %3140 = vmatprep.subr.bf16.mxu0 0
      %3141 = vmatpush1.bf16.msra.mxu0 %v3128
      %3142 = vmatprep.subr.bf16.mxu0 0
      %3143 = vmatpush1.bf16.msra.mxu0 %v3127
      %3144 = vmatprep.subr.bf16.mxu0 0
      %3145 = vmatpush1.bf16.msra.mxu0 %v3126
      %3146 = vmatprep.subr.bf16.mxu0 0
      %3147 = vmatpush1.bf16.msra.mxu0 %v3125
      %3148 = vmatprep.subr.bf16.mxu0 0
      %3149 = vmatpush1.bf16.msra.mxu0 %v3124
      %3150 = vmatprep.subr.bf16.mxu0 0
      %3151 = vmatpush1.bf16.msra.mxu0 %v3123
      %3152 = vmatprep.subr.bf16.mxu0 0
      %3153 = vmatpush1.bf16.msra.mxu0 %v3122
      %3154 = vmatprep.subr.bf16.mxu0 0
      %3155 = vmatpush2.bf16.msra.mxu0 0
      %3156 = vmatprep.subr.bf16.mxu0 0
      %3157 = vmatpush2.bf16.msra.mxu0 0
      %3158 = vmatprep.subr.bf16.mxu0 0
      %3159 = vmatpush2.bf16.msra.mxu0 0
      %3160 = vmatprep.subr.bf16.mxu0 0
      %3161 = vmatpush2.bf16.msra.mxu0 0
      %3162 = vmatprep.subr.bf16.mxu0 0
      %3163 = vmatpush2.bf16.msra.mxu0 0
      %3164 = vmatprep.subr.bf16.mxu0 0
      %3165 = vmatpush2.bf16.msra.mxu0 0
      %3166 = vmatprep.subr.bf16.mxu0 0
      %3167 = vmatpush2.bf16.msra.mxu0 0
      %3168 = vmatprep.subr.bf16.mxu0 0
      %3169 = vmatpush2.bf16.msra.mxu0 0
      %3170 = vmatprep.mubr.bf16.mxu0 0
      %3171 = vmatmul.mubr.bf16.gmra.mxu0 %v3063
      %v3172 = vpop.f32.mrf.mxu0
      %v3173 = vadd.f32 %v3088, %v3172
      %v3174 = vpop.f32.mrf.mxu0
      %v3175 = vpop.f32.mrf.mxu0
      %v3176 = vadd.f32 %v3088, %v3175
      %v3177 = vpop.f32.mrf.mxu0
      %3178 = vmatprep.mubr.bf16.mxu0 0
      %3179 = vmatmul.mubr.bf16.gmra.mxu0 %v3064
      %v3180 = vpop.f32.mrf.mxu0
      %v3181 = vadd.f32 %v3088, %v3180
      %v3182 = vpop.f32.mrf.mxu0
      %v3183 = vpop.f32.mrf.mxu0
      %v3184 = vadd.f32 %v3088, %v3183
      %v3185 = vpop.f32.mrf.mxu0
      %3186 = vmatprep.mubr.bf16.mxu0 0
      %3187 = vmatmul.mubr.bf16.gmra.mxu0 %v3065
      %v3188 = vpop.f32.mrf.mxu0
      %v3189 = vadd.f32 %v3088, %v3188
      %v3190 = vpop.f32.mrf.mxu0
      %v3191 = vpop.f32.mrf.mxu0
      %v3192 = vadd.f32 %v3088, %v3191
      %v3193 = vpop.f32.mrf.mxu0
      %3194 = vmatprep.mubr.bf16.mxu0 0
      %3195 = vmatmul.mubr.bf16.gmra.mxu0 %v3066
      %v3196 = vpop.f32.mrf.mxu0
      %v3197 = vadd.f32 %v3088, %v3196
      %v3198 = vpop.f32.mrf.mxu0
      %v3199 = vpop.f32.mrf.mxu0
      %v3200 = vadd.f32 %v3088, %v3199
      %v3201 = vpop.f32.mrf.mxu0
      %3202 = vdwg.mxu0
      %v3203 = vld [vmem:[%s24] sm:$0x1]
      %v3205 = vlaneseq
      %v3206 = vshrl.u32 %v3205, 7
      %v3207 = vsub.s32 0, %v3206
      %v3208 = vrot.slane %v3203, %v3207
      %v3210 = vmul.f32 %v3208, %v3173
      %v3211 = vmul.f32 %v3208, %v3176
      %v3212 = vmul.f32 %v3208, %v3181
      %v3213 = vmul.f32 %v3208, %v3184
      %v3214 = vmul.f32 %v3208, %v3189
      %v3215 = vmul.f32 %v3208, %v3192
      %v3216 = vmul.f32 %v3208, %v3197
      %v3217 = vmul.f32 %v3208, %v3200
      %v3218 = vadd.f32 %v2609, %v3210
      %v3219 = vadd.f32 %v2610, %v3211
      %v3220 = vadd.f32 %v2611, %v3212
      %v3221 = vadd.f32 %v2612, %v3213
      %v3222 = vadd.f32 %v2613, %v3214
      %v3223 = vadd.f32 %v2614, %v3215
      %v3224 = vadd.f32 %v2615, %v3216
      %v3225 = vadd.f32 %v2616, %v3217
      %3226 = vst.msk [vmem:[%s818] sm:$0xff] %vm830, %v3218
      %3227 = vst.msk [vmem:[%s818 + $0x8] sm:$0xff] %vm830, %v3219
      %3228 = vst.msk [vmem:[%s818 + $0x10] sm:$0xff] %vm830, %v3220
      %3229 = vst.msk [vmem:[%s818 + $0x18] sm:$0xff] %vm830, %v3221
      %3230 = vst.msk [vmem:[%s818 + $0x20] sm:$0xff] %vm830, %v3222
      %3231 = vst.msk [vmem:[%s818 + $0x28] sm:$0xff] %vm830, %v3223
      %3232 = vst.msk [vmem:[%s818 + $0x30] sm:$0xff] %vm830, %v3224
      %3233 = vst.msk [vmem:[%s818 + $0x38] sm:$0xff] %vm830, %v3225
      %p3234 = scmp.lt.s32.totalorder %s38, 1
      %s3235 = scalar_select %p3234, %s38, 1
      %s3236 = smul.addr %s3235, 8
      %s3237 = smul.addr %s3236, 8
      %s3238 = scalar_lea.vmem %s27, %s3237
      // Predicated region
      $region129: #{tpu_custom_call.1} parent=127 // pred_check
        %p3239 = pneg %p628
      $region130: #{tpu_custom_call.1} parent=127 // pred_check_branch
        %3241 = sbr.rel (%p3239) target = $region132
      $region131: #{tpu_custom_call.1} parent=127 // pred_region
        _
      $region132: #{tpu_custom_call.1} parent=127 // pred_fallthru
        _
    $region128: #{tpu_custom_call.1} parent=5 // pred_fallthru
      _
    %p3242 = scmp.le.s32.totalorder 2, %s33
    // Predicated region
    $region133: #{tpu_custom_call.1} parent=5 // pred_check
      %p3243 = pneg %p3242
    $region134: #{tpu_custom_call.1} parent=5 // pred_check_branch
      %3245 = sbr.rel (%p3243) target = $region136
    $region135: #{tpu_custom_call.1} parent=5 // pred_region
      %s3246 = ssub.s32 %s33, 2
      // Predicated region
      $region137: #{tpu_custom_call.1} parent=135 // pred_check
        %p3247 = pneg %p634
      $region138: #{tpu_custom_call.1} parent=135 // pred_check_branch
        %3249 = sbr.rel (%p3247) target = $region140
      $region139: #{tpu_custom_call.1} parent=135 // pred_region
        %p3250 = scmp.lt.s32.totalorder %s39, 1
        %s3251 = scalar_select %p3250, %s39, 1
        %s3252 = smul.addr %s3251, 8
        %s3253 = smul.addr %s3252, 8
        %s3254 = scalar_lea.vmem %s27, %s3253
      $region140: #{tpu_custom_call.1} parent=135 // pred_fallthru
        _
    $region136: #{tpu_custom_call.1} parent=5 // pred_fallthru
      _
  $region6: #{tpu_custom_call.1} parent=0 // loop_footer
    %s37 = sadd.s32 1, %s33
  $region7: #{tpu_custom_call.1} parent=0 // loop_footer_branch
    %32 = sbr.rel target = $region3
  $region8: #{tpu_custom_call.1} parent=0 // loop_exit
    _

</llo_original>
